<compile_context>
chip_gen: v6e
topology: v6e:2x2x1
jax: 0.10.0
libtpu: 0.0.40
codegen_flags: <defaults>
</compile_context>

<pallas_src>
import jax
import jax.numpy as jnp
from jax.experimental import pallas as pl
from jax.experimental.pallas import tpu as pltpu

PAD = 4  # max dilation used by HDRAB; shared 2-D zero border for every conv.
DILATIONS = (1, 2, 3, 4, 3, 2, 1, 1)
CONV_NAMES = ("conv1", "conv2", "conv3", "conv4",
              "conv3_1", "conv2_1", "conv1_1", "conv_tail")


# ---------------------------------------------------------------------------
# Fused kernel: 8 dilated convs + residual wiring + CAB + skip, one batch/step.
# ---------------------------------------------------------------------------
def _make_hdrab_kernel(C, L, L_ext, M, Wp, inv_hw, tile_l):
    def tap_offsets(d):
        # Flat lane offsets of the 9 taps relative to each output pixel.
        return tuple((ky - 1) * d * Wp + (kx - 1) * d
                     for ky in range(3) for kx in range(3))

    def kernel(x_ref, w_ref, b_ref, m_ref, cw1_ref, cb1_ref, cw2_ref, cb2_ref,
               o_ref, s_y1, s_y21, s_y3, s_y41, s_y61, s_a, s_b):
        # --- zero the margin strips of every scratch slab that feeds a conv ------
        # Done every grid step (cheap: thin strips only) so the kernel is correct
        # even when the batch axis is sharded across TensorCores ("parallel").
        zl = jnp.zeros((C, M), jnp.float32)
        zr = jnp.zeros((C, L_ext - M - L), jnp.float32)
        for s in (s_y1, s_y21, s_y3, s_y41, s_y61, s_a):
            s[:, :M] = zl
            s[:, M + L:] = zr

        mask = m_ref[...]                       # (1, L): 1 inside true HxW, 0 on ring

        def interior(ref):                      # (C, L) value of the data window
            return ref[:, M:M + L]

        def conv(src_ref, idx, relu=False):
            """Dilated 3x3 conv of the extended slab behind `src_ref`.

            im2col in VMEM: 9 shifted lane-windows concatenated along the
            contraction axis -> one (C, 9C) @ (9C, tile) bf16 MXU matmul per lane
            chunk with f32 accumulation, + bias, optional ReLU, ring mask.
            Returns the masked (C, L) f32 result.
            """
            d = DILATIONS[idx]
            offs = tap_offsets(d)
            xb = src_ref[...].astype(jnp.bfloat16)        # cast once per conv input
            w = w_ref[idx]                                # (C, 9C) bf16
            pieces = []
            for c0 in range(0, L, tile_l):                # static lane chunking
                tl = min(tile_l, L - c0)
                cols = [xb[:, M + off + c0:M + off + c0 + tl] for off in offs]
                xcat = jnp.concatenate(cols, axis=0)      # (9C, tl) bf16
                pieces.append(jnp.dot(w, xcat, preferred_element_type=jnp.float32))
            acc = pieces[0] if len(pieces) == 1 else jnp.concatenate(pieces, axis=1)
            acc = acc + b_ref[idx]                        # (C, 1) f32 bias
            if relu:
                acc = jnp.maximum(acc, 0.0)
            return acc * mask                             # keep the padded ring zero

        x_int = interior(x_ref)                           # block input (skip path)

        # y1 = relu(conv1(y))                     (relu1 is inplace in the module)
        s_y1[:, M:M + L] = conv(x_ref, 0, relu=True)
        # y2_1 = conv2(y1) + y
        s_y21[:, M:M + L] = conv(s_y1, 1) + x_int
        # y3 = relu(conv3(y2_1))                  (relu3 is inplace in the module)
        s_y3[:, M:M + L] = conv(s_y21, 2, relu=True)
        # y4_1 = conv4(y3) + y2_1
        s_y41[:, M:M + L] = conv(s_y3, 3) + interior(s_y21)
        # y5 + y3 = relu(conv3_1(y4_1)) + y3      (hoisted pre-add for conv2_1)
        s_a[:, M:M + L] = conv(s_y41, 4, relu=True) + interior(s_y3)
        # y6_1 = conv2_1(y5 + y3) + y4_1
        s_y61[:, M:M + L] = conv(s_a, 5) + interior(s_y41)
        # y6_1 + y2_1                             (hoisted pre-add; margins stay 0+0)
        s_b[...] = s_y61[...] + s_y21[...]
        # y7 + y1 = relu(conv1_1(y6_1 + y2_1)) + y1   (hoisted pre-add for conv_tail)
        s_a[:, M:M + L] = conv(s_b, 6, relu=True) + interior(s_y1)
        # y8_1 = conv_tail(y7 + y1) + y6_1        (kept as a value; only feeds CAB)
        y81 = conv(s_a, 7) + interior(s_y61)

        # --- CAB channel attention + final skip add ------------------------------
        # Ring positions of y81 are zero, so a full-width sum * 1/(H*W) == avg pool.
        pooled = jnp.sum(y81, axis=1, keepdims=True) * inv_hw           # (C, 1)
        h = jnp.dot(cw1_ref[...], pooled, preferred_element_type=jnp.float32)
        h = jnp.maximum(h + cb1_ref[...], 0.0)                          # (Cr, 1)
        g = jnp.dot(cw2_ref[...], h, preferred_element_type=jnp.float32)
        g = jax.nn.sigmoid(g + cb2_ref[...])                            # (C, 1)
        o_ref[...] = (x_int + y81 * g).astype(o_ref.dtype)

    return kernel


# ---------------------------------------------------------------------------
# Host wrapper: layout plumbing + single pallas_call.
# ---------------------------------------------------------------------------
def hdrab_forward(y, params):
    """y: (N, C, H, W) float32 -> (N, C, H, W); mirrors HDRAB.forward."""
    N, C, H, W = y.shape
    Hp, Wp = H + 2 * PAD, W + 2 * PAD
    L = Hp * Wp                                   # flattened padded image (lane axis)
    margin = PAD * Wp + PAD                       # farthest flat tap offset
    M = 128 * pl.cdiv(margin, 128)                # 128-aligned left margin >= margin
    L_ext = 128 * pl.cdiv(M + L + margin, 128)    # right margin >= margin, total 128-aligned
    inv_hw = 1.0 / float(H * W)

    # Extended input: zero-pad PAD in 2-D, flatten H*W onto lanes, add flat margins.
    y_ext = jnp.pad(
        jnp.pad(y, ((0, 0), (0, 0), (PAD, PAD), (PAD, PAD))).reshape(N, C, L),
        ((0, 0), (0, 0), (M, L_ext - M - L)))

    # 1 inside the true HxW image, 0 on the padded ring (flattened).
    mask = jnp.pad(jnp.ones((H, W), jnp.float32), PAD).reshape(1, L)

    # Host repack: im2col weights (C, 9*C) bf16, tap-major contraction; f32 biases.
    w_all = jnp.stack([jnp.transpose(params[n][0], (0, 2, 3, 1)).reshape(C, 9 * C)
                       for n in CONV_NAMES]).astype(jnp.bfloat16)        # (8, C, 9C)
    b_all = jnp.stack([params[n][1].reshape(C, 1) for n in CONV_NAMES]
                      ).astype(jnp.float32)                              # (8, C, 1)
    cw1, cb1, cw2, cb2 = params["cab"]
    Cr = cw1.shape[0]
    cw1 = cw1.astype(jnp.float32)
    cw2 = cw2.astype(jnp.float32)
    cb1 = cb1.reshape(Cr, 1).astype(jnp.float32)
    cb2 = cb2.reshape(C, 1).astype(jnp.float32)

    # Lane-chunk size for the in-kernel im2col tile: keep the (9C, tile) bf16 slab
    # around <=96 KiB so the matmul operands stay vreg-friendly at larger C / H*W.
    tile_l = max(128, ((96 * 1024) // (9 * C * 2) // 128) * 128)

    kernel = _make_hdrab_kernel(C, L, L_ext, M, Wp, inv_hw, tile_l)

    full3 = lambda n: (0, 0, 0)
    full2 = lambda n: (0, 0)
    cost = pl.CostEstimate(
        flops=int(2 * N * 8 * C * 9 * C * L + 14 * N * C * L),
        transcendentals=int(N * C),
        bytes_accessed=int(4 * (y_ext.size + N * C * L)
                           + 2 * w_all.size
                           + 4 * (b_all.size + cw1.size + cw2.size + Cr + C + L)),
    )

    out_flat = pl.pallas_call(
        kernel,
        out_shape=jax.ShapeDtypeStruct((N, C, L), y.dtype),
        grid_spec=pltpu.PrefetchScalarGridSpec(
            num_scalar_prefetch=0,
            grid=(N,),
            in_specs=[
                pl.BlockSpec((None, C, L_ext), lambda n: (n, 0, 0)),   # x (extended slab)
                pl.BlockSpec((8, C, 9 * C), full3),                    # packed conv weights
                pl.BlockSpec((8, C, 1), full3),                        # conv biases
                pl.BlockSpec((1, L), full2),                           # interior mask
                pl.BlockSpec((Cr, C), full2),                          # CAB squeeze weight
                pl.BlockSpec((Cr, 1), full2),                          # CAB squeeze bias
                pl.BlockSpec((C, Cr), full2),                          # CAB excite weight
                pl.BlockSpec((C, 1), full2),                           # CAB excite bias
            ],
            out_specs=pl.BlockSpec((None, C, L), lambda n: (n, 0, 0)),
            scratch_shapes=[pltpu.VMEM((C, L_ext), jnp.float32) for _ in range(7)],
        ),
        compiler_params=pltpu.CompilerParams(
            dimension_semantics=("parallel",),
            vmem_limit_bytes=48 * 1024 * 1024,
        ),
        cost_estimate=cost,
    )(y_ext, w_all, b_all, mask, cw1, cb1, cw2, cb2)

    # Un-pad: (N, C, Hp*Wp) -> (N, C, H, W)  (one-time layout plumbing by XLA).
    return out_flat.reshape(N, C, Hp, Wp)[:, :, PAD:PAD + H, PAD:PAD + W]


# ---------------------------------------------------------------------------
# Pure-JAX reference mirroring the PyTorch module exactly.
# ---------------------------------------------------------------------------
def hdrab_ref(y, params):
    def conv(x, p, d):
        w, b = p
        o = jax.lax.conv_general_dilated(
            x, w, window_strides=(1, 1), padding=((d, d), (d, d)),
            rhs_dilation=(d, d), dimension_numbers=("NCHW", "OIHW", "NCHW"),
            precision=jax.lax.Precision.HIGHEST)
        return o + b[None, :, None, None]

    relu = lambda t: jnp.maximum(t, 0.0)
    y1 = relu(conv(y, params["conv1"], 1))
    y2_1 = conv(y1, params["conv2"], 2) + y
    y3 = relu(conv(y2_1, params["conv3"], 3))
    y4_1 = conv(y3, params["conv4"], 4) + y2_1
    y5 = relu(conv(y4_1, params["conv3_1"], 3))
    y6_1 = conv(y5 + y3, params["conv2_1"], 2) + y4_1
    y7 = relu(conv(y6_1 + y2_1, params["conv1_1"], 1))
    y8_1 = conv(y7 + y1, params["conv_tail"], 1) + y6_1

    w1, b1, w2, b2 = params["cab"]
    pooled = jnp.mean(y8_1, axis=(2, 3))                  # (N, C)
    h = jnp.maximum(pooled @ w1.T + b1, 0.0)              # (N, Cr)
    g = jax.nn.sigmoid(h @ w2.T + b2)                     # (N, C)
    return y + y8_1 * g[:, :, None, None]


if __name__ == "__main__":
    # CAB needs C // reduction >= 1 (reduction = 8), so use C = 16 (small).
    N, C, H, W = 2, 16, 16, 16
    reduction = 8
    Cr = C // reduction

    def bf16_exact(a):
        # Round params/inputs to bf16-representable values so the in-kernel bf16
        # casts of x and the weights are exact; only intermediate activations round.
        return a.astype(jnp.bfloat16).astype(jnp.float32)

    keys = jax.random.split(jax.random.PRNGKey(0), 40)
    x = bf16_exact(jax.random.normal(keys[0], (N, C, H, W), jnp.float32))

    wscale = 0.5 / (3.0 * C ** 0.5)
    params = {}
    ki = 1
    for name in CONV_NAMES:
        w = bf16_exact(jax.random.normal(keys[ki], (C, C, 3, 3), jnp.float32) * wscale)
        b = bf16_exact(jax.random.normal(keys[ki + 1], (C,), jnp.float32) * 0.05)
        params[name] = (w, b)
        ki += 2
    w1 = bf16_exact(jax.random.normal(keys[ki], (Cr, C), jnp.float32) / C ** 0.5)
    b1 = bf16_exact(jax.random.normal(keys[ki + 1], (Cr,), jnp.float32) * 0.05)
    w2 = bf16_exact(jax.random.normal(keys[ki + 2], (C, Cr), jnp.float32) / Cr ** 0.5)
    b2 = bf16_exact(jax.random.normal(keys[ki + 3], (C,), jnp.float32) * 0.05)
    params["cab"] = (w1, b1, w2, b2)

    out = jax.block_until_ready(jax.jit(hdrab_forward)(x, params))
    assert out.shape == (N, C, H, W), out.shape

    ref = jax.block_until_ready(hdrab_ref(x, params))
    # bf16 MXU operands (with f32 accumulation) across 8 chained convs compound to
    # ~1e-2-level absolute error vs. the f32 HIGHEST-precision reference; structural
    # bugs would show errors orders of magnitude larger.
    max_err = float(jnp.max(jnp.abs(out - ref)))
    assert max_err < 5e-2, f"max abs err vs reference: {max_err}"

    print("KERNEL_OK")
</pallas_src>

<mosaic_0001>
module attributes {stable_mosaic.version = 11 : i64} {
  func.func @kernel(%arg0: i32, %arg1: memref<1x16x896xf32, #tpu.memory_space<vmem>>, %arg2: memref<8x16x144xbf16, #tpu.memory_space<vmem>>, %arg3: memref<8x16x1xf32, #tpu.memory_space<vmem>>, %arg4: memref<1x576xf32, #tpu.memory_space<vmem>>, %arg5: memref<2x16xf32, #tpu.memory_space<vmem>>, %arg6: memref<2x1xf32, #tpu.memory_space<vmem>>, %arg7: memref<16x2xf32, #tpu.memory_space<vmem>>, %arg8: memref<16x1xf32, #tpu.memory_space<vmem>>, %arg9: memref<1x16x576xf32, #tpu.memory_space<vmem>>, %arg10: memref<16x896xf32, #tpu.memory_space<vmem>>, %arg11: memref<16x896xf32, #tpu.memory_space<vmem>>, %arg12: memref<16x896xf32, #tpu.memory_space<vmem>>, %arg13: memref<16x896xf32, #tpu.memory_space<vmem>>, %arg14: memref<16x896xf32, #tpu.memory_space<vmem>>, %arg15: memref<16x896xf32, #tpu.memory_space<vmem>>, %arg16: memref<16x896xf32, #tpu.memory_space<vmem>>) attributes {dimension_semantics = [#tpu.dimension_semantics<parallel>], iteration_bounds = array<i64: 2>, scalar_prefetch = 0 : i64, scratch_operands = 7 : i64, tpu.core_type = #tpu.core_type<tc>, window_params = [{transform_indices = @transform_0, window_bounds = array<i64: 1, 16, 896>}, {pipeline_mode = #tpu.pipeline_mode<synchronous>, transform_indices = @transform_1, window_bounds = array<i64: 8, 16, 144>}, {pipeline_mode = #tpu.pipeline_mode<synchronous>, transform_indices = @transform_2, window_bounds = array<i64: 8, 16, 1>}, {pipeline_mode = #tpu.pipeline_mode<synchronous>, transform_indices = @transform_3, window_bounds = array<i64: 1, 576>}, {pipeline_mode = #tpu.pipeline_mode<synchronous>, transform_indices = @transform_4, window_bounds = array<i64: 2, 16>}, {pipeline_mode = #tpu.pipeline_mode<synchronous>, transform_indices = @transform_5, window_bounds = array<i64: 2, 1>}, {pipeline_mode = #tpu.pipeline_mode<synchronous>, transform_indices = @transform_6, window_bounds = array<i64: 16, 2>}, {pipeline_mode = #tpu.pipeline_mode<synchronous>, transform_indices = @transform_7, window_bounds = array<i64: 16, 1>}, {transform_indices = @transform_8, window_bounds = array<i64: 1, 16, 576>}]} {
    %cst = arith.constant 0.000000e+00 : f32
    %0 = vector.broadcast %cst : f32 to vector<16x128xf32>
    %cst_0 = arith.constant 0.000000e+00 : f32
    %1 = vector.broadcast %cst_0 : f32 to vector<16x192xf32>
    %c0 = arith.constant 0 : index
    %c0_1 = arith.constant 0 : index
    %2 = vector.load %arg10[%c0, %c0_1] : memref<16x896xf32, #tpu.memory_space<vmem>>, vector<16x128xf32>
    tpu.vector_store %arg10[%c0, %c0_1], %0 {strides = array<i32>} : memref<16x896xf32, #tpu.memory_space<vmem>>, vector<16x128xf32>,
    %c0_2 = arith.constant 0 : index
    %c704 = arith.constant 704 : index
    %3 = vector.load %arg10[%c0_2, %c704] : memref<16x896xf32, #tpu.memory_space<vmem>>, vector<16x192xf32>
    tpu.vector_store %arg10[%c0_2, %c704], %1 {strides = array<i32>} : memref<16x896xf32, #tpu.memory_space<vmem>>, vector<16x192xf32>,
    %c0_3 = arith.constant 0 : index
    %c0_4 = arith.constant 0 : index
    %4 = vector.load %arg11[%c0_3, %c0_4] : memref<16x896xf32, #tpu.memory_space<vmem>>, vector<16x128xf32>
    tpu.vector_store %arg11[%c0_3, %c0_4], %0 {strides = array<i32>} : memref<16x896xf32, #tpu.memory_space<vmem>>, vector<16x128xf32>,
    %c0_5 = arith.constant 0 : index
    %c704_6 = arith.constant 704 : index
    %5 = vector.load %arg11[%c0_5, %c704_6] : memref<16x896xf32, #tpu.memory_space<vmem>>, vector<16x192xf32>
    tpu.vector_store %arg11[%c0_5, %c704_6], %1 {strides = array<i32>} : memref<16x896xf32, #tpu.memory_space<vmem>>, vector<16x192xf32>,
    %c0_7 = arith.constant 0 : index
    %c0_8 = arith.constant 0 : index
    %6 = vector.load %arg12[%c0_7, %c0_8] : memref<16x896xf32, #tpu.memory_space<vmem>>, vector<16x128xf32>
    tpu.vector_store %arg12[%c0_7, %c0_8], %0 {strides = array<i32>} : memref<16x896xf32, #tpu.memory_space<vmem>>, vector<16x128xf32>,
    %c0_9 = arith.constant 0 : index
    %c704_10 = arith.constant 704 : index
    %7 = vector.load %arg12[%c0_9, %c704_10] : memref<16x896xf32, #tpu.memory_space<vmem>>, vector<16x192xf32>
    tpu.vector_store %arg12[%c0_9, %c704_10], %1 {strides = array<i32>} : memref<16x896xf32, #tpu.memory_space<vmem>>, vector<16x192xf32>,
    %c0_11 = arith.constant 0 : index
    %c0_12 = arith.constant 0 : index
    %8 = vector.load %arg13[%c0_11, %c0_12] : memref<16x896xf32, #tpu.memory_space<vmem>>, vector<16x128xf32>
    tpu.vector_store %arg13[%c0_11, %c0_12], %0 {strides = array<i32>} : memref<16x896xf32, #tpu.memory_space<vmem>>, vector<16x128xf32>,
    %c0_13 = arith.constant 0 : index
    %c704_14 = arith.constant 704 : index
    %9 = vector.load %arg13[%c0_13, %c704_14] : memref<16x896xf32, #tpu.memory_space<vmem>>, vector<16x192xf32>
    tpu.vector_store %arg13[%c0_13, %c704_14], %1 {strides = array<i32>} : memref<16x896xf32, #tpu.memory_space<vmem>>, vector<16x192xf32>,
    %c0_15 = arith.constant 0 : index
    %c0_16 = arith.constant 0 : index
    %10 = vector.load %arg14[%c0_15, %c0_16] : memref<16x896xf32, #tpu.memory_space<vmem>>, vector<16x128xf32>
    tpu.vector_store %arg14[%c0_15, %c0_16], %0 {strides = array<i32>} : memref<16x896xf32, #tpu.memory_space<vmem>>, vector<16x128xf32>,
    %c0_17 = arith.constant 0 : index
    %c704_18 = arith.constant 704 : index
    %11 = vector.load %arg14[%c0_17, %c704_18] : memref<16x896xf32, #tpu.memory_space<vmem>>, vector<16x192xf32>
    tpu.vector_store %arg14[%c0_17, %c704_18], %1 {strides = array<i32>} : memref<16x896xf32, #tpu.memory_space<vmem>>, vector<16x192xf32>,
    %c0_19 = arith.constant 0 : index
    %c0_20 = arith.constant 0 : index
    %12 = vector.load %arg15[%c0_19, %c0_20] : memref<16x896xf32, #tpu.memory_space<vmem>>, vector<16x128xf32>
    tpu.vector_store %arg15[%c0_19, %c0_20], %0 {strides = array<i32>} : memref<16x896xf32, #tpu.memory_space<vmem>>, vector<16x128xf32>,
    %c0_21 = arith.constant 0 : index
    %c704_22 = arith.constant 704 : index
    %13 = vector.load %arg15[%c0_21, %c704_22] : memref<16x896xf32, #tpu.memory_space<vmem>>, vector<16x192xf32>
    tpu.vector_store %arg15[%c0_21, %c704_22], %1 {strides = array<i32>} : memref<16x896xf32, #tpu.memory_space<vmem>>, vector<16x192xf32>,
    %c0_23 = arith.constant 0 : index
    %c0_24 = arith.constant 0 : index
    %14 = vector.load %arg4[%c0_23, %c0_24] : memref<1x576xf32, #tpu.memory_space<vmem>>, vector<1x576xf32>
    %c0_25 = arith.constant 0 : index
    %c0_26 = arith.constant 0 : index
    %c128 = arith.constant 128 : index
    %15 = vector.load %arg1[%c0_25, %c0_26, %c128] : memref<1x16x896xf32, #tpu.memory_space<vmem>>, vector<1x16x576xf32>
    %16 = vector.shape_cast %15 : vector<1x16x576xf32> to vector<16x576xf32>
    %c0_27 = arith.constant 0 : index
    %c0_28 = arith.constant 0 : index
    %c0_29 = arith.constant 0 : index
    %17 = vector.load %arg1[%c0_27, %c0_28, %c0_29] : memref<1x16x896xf32, #tpu.memory_space<vmem>>, vector<1x16x896xf32>
    %18 = vector.shape_cast %17 : vector<1x16x896xf32> to vector<16x896xf32>
    %19 = arith.truncf %18 : vector<16x896xf32> to vector<16x896xbf16>
    %c0_30 = arith.constant 0 : index
    %c0_31 = arith.constant 0 : index
    %c0_32 = arith.constant 0 : index
    %20 = vector.load %arg2[%c0_30, %c0_31, %c0_32] : memref<8x16x144xbf16, #tpu.memory_space<vmem>>, vector<1x16x144xbf16>
    %21 = vector.shape_cast %20 : vector<1x16x144xbf16> to vector<16x144xbf16>
    %22 = vector.extract_strided_slice %19 {offsets = [0, 103], sizes = [16, 256], strides = [1, 1]} : vector<16x896xbf16> to vector<16x256xbf16>
    %23 = vector.extract_strided_slice %19 {offsets = [0, 104], sizes = [16, 256], strides = [1, 1]} : vector<16x896xbf16> to vector<16x256xbf16>
    %24 = vector.extract_strided_slice %19 {offsets = [0, 105], sizes = [16, 256], strides = [1, 1]} : vector<16x896xbf16> to vector<16x256xbf16>
    %25 = vector.extract_strided_slice %19 {offsets = [0, 127], sizes = [16, 256], strides = [1, 1]} : vector<16x896xbf16> to vector<16x256xbf16>
    %26 = vector.extract_strided_slice %19 {offsets = [0, 128], sizes = [16, 256], strides = [1, 1]} : vector<16x896xbf16> to vector<16x256xbf16>
    %27 = vector.extract_strided_slice %19 {offsets = [0, 129], sizes = [16, 256], strides = [1, 1]} : vector<16x896xbf16> to vector<16x256xbf16>
    %28 = vector.extract_strided_slice %19 {offsets = [0, 151], sizes = [16, 256], strides = [1, 1]} : vector<16x896xbf16> to vector<16x256xbf16>
    %29 = vector.extract_strided_slice %19 {offsets = [0, 152], sizes = [16, 256], strides = [1, 1]} : vector<16x896xbf16> to vector<16x256xbf16>
    %30 = vector.extract_strided_slice %19 {offsets = [0, 153], sizes = [16, 256], strides = [1, 1]} : vector<16x896xbf16> to vector<16x256xbf16>
    %31 = tpu.concatenate %22, %23, %24, %25, %26, %27, %28, %29, %30 in 0 : vector<16x256xbf16>, vector<16x256xbf16>, vector<16x256xbf16>, vector<16x256xbf16>, vector<16x256xbf16>, vector<16x256xbf16>, vector<16x256xbf16>, vector<16x256xbf16>, vector<16x256xbf16> -> vector<144x256xbf16>
    %cst_33 = arith.constant dense<0.000000e+00> : vector<16x256xf32>
    %32 = tpu.matmul %21, %31, %cst_33 {dimension_numbers = #tpu.dot_dimension_numbers<[1], [0], [0], [1], [0, 0, 1, 1], [], []>} : vector<16x144xbf16>, vector<144x256xbf16>, vector<16x256xf32> -> vector<16x256xf32>
    %33 = vector.extract_strided_slice %19 {offsets = [0, 359], sizes = [16, 256], strides = [1, 1]} : vector<16x896xbf16> to vector<16x256xbf16>
    %34 = vector.extract_strided_slice %19 {offsets = [0, 360], sizes = [16, 256], strides = [1, 1]} : vector<16x896xbf16> to vector<16x256xbf16>
    %35 = vector.extract_strided_slice %19 {offsets = [0, 361], sizes = [16, 256], strides = [1, 1]} : vector<16x896xbf16> to vector<16x256xbf16>
    %36 = vector.extract_strided_slice %19 {offsets = [0, 383], sizes = [16, 256], strides = [1, 1]} : vector<16x896xbf16> to vector<16x256xbf16>
    %37 = vector.extract_strided_slice %19 {offsets = [0, 384], sizes = [16, 256], strides = [1, 1]} : vector<16x896xbf16> to vector<16x256xbf16>
    %38 = vector.extract_strided_slice %19 {offsets = [0, 385], sizes = [16, 256], strides = [1, 1]} : vector<16x896xbf16> to vector<16x256xbf16>
    %39 = vector.extract_strided_slice %19 {offsets = [0, 407], sizes = [16, 256], strides = [1, 1]} : vector<16x896xbf16> to vector<16x256xbf16>
    %40 = vector.extract_strided_slice %19 {offsets = [0, 408], sizes = [16, 256], strides = [1, 1]} : vector<16x896xbf16> to vector<16x256xbf16>
    %41 = vector.extract_strided_slice %19 {offsets = [0, 409], sizes = [16, 256], strides = [1, 1]} : vector<16x896xbf16> to vector<16x256xbf16>
    %42 = tpu.concatenate %33, %34, %35, %36, %37, %38, %39, %40, %41 in 0 : vector<16x256xbf16>, vector<16x256xbf16>, vector<16x256xbf16>, vector<16x256xbf16>, vector<16x256xbf16>, vector<16x256xbf16>, vector<16x256xbf16>, vector<16x256xbf16>, vector<16x256xbf16> -> vector<144x256xbf16>
    %cst_34 = arith.constant dense<0.000000e+00> : vector<16x256xf32>
    %43 = tpu.matmul %21, %42, %cst_34 {dimension_numbers = #tpu.dot_dimension_numbers<[1], [0], [0], [1], [0, 0, 1, 1], [], []>} : vector<16x144xbf16>, vector<144x256xbf16>, vector<16x256xf32> -> vector<16x256xf32>
    %44 = vector.extract_strided_slice %19 {offsets = [0, 615], sizes = [16, 64], strides = [1, 1]} : vector<16x896xbf16> to vector<16x64xbf16>
    %45 = vector.extract_strided_slice %19 {offsets = [0, 616], sizes = [16, 64], strides = [1, 1]} : vector<16x896xbf16> to vector<16x64xbf16>
    %46 = vector.extract_strided_slice %19 {offsets = [0, 617], sizes = [16, 64], strides = [1, 1]} : vector<16x896xbf16> to vector<16x64xbf16>
    %47 = vector.extract_strided_slice %19 {offsets = [0, 639], sizes = [16, 64], strides = [1, 1]} : vector<16x896xbf16> to vector<16x64xbf16>
    %48 = vector.extract_strided_slice %19 {offsets = [0, 640], sizes = [16, 64], strides = [1, 1]} : vector<16x896xbf16> to vector<16x64xbf16>
    %49 = vector.extract_strided_slice %19 {offsets = [0, 641], sizes = [16, 64], strides = [1, 1]} : vector<16x896xbf16> to vector<16x64xbf16>
    %50 = vector.extract_strided_slice %19 {offsets = [0, 663], sizes = [16, 64], strides = [1, 1]} : vector<16x896xbf16> to vector<16x64xbf16>
    %51 = vector.extract_strided_slice %19 {offsets = [0, 664], sizes = [16, 64], strides = [1, 1]} : vector<16x896xbf16> to vector<16x64xbf16>
    %52 = vector.extract_strided_slice %19 {offsets = [0, 665], sizes = [16, 64], strides = [1, 1]} : vector<16x896xbf16> to vector<16x64xbf16>
    %53 = tpu.concatenate %44, %45, %46, %47, %48, %49, %50, %51, %52 in 0 : vector<16x64xbf16>, vector<16x64xbf16>, vector<16x64xbf16>, vector<16x64xbf16>, vector<16x64xbf16>, vector<16x64xbf16>, vector<16x64xbf16>, vector<16x64xbf16>, vector<16x64xbf16> -> vector<144x64xbf16>
    %cst_35 = arith.constant dense<0.000000e+00> : vector<16x64xf32>
    %54 = tpu.matmul %21, %53, %cst_35 {dimension_numbers = #tpu.dot_dimension_numbers<[1], [0], [0], [1], [0, 0, 1, 1], [], []>} : vector<16x144xbf16>, vector<144x64xbf16>, vector<16x64xf32> -> vector<16x64xf32>
    %55 = tpu.concatenate %32, %43, %54 in 1 : vector<16x256xf32>, vector<16x256xf32>, vector<16x64xf32> -> vector<16x576xf32>
    %c0_36 = arith.constant 0 : index
    %c0_37 = arith.constant 0 : index
    %c0_38 = arith.constant 0 : index
    %56 = vector.load %arg3[%c0_36, %c0_37, %c0_38] : memref<8x16x1xf32, #tpu.memory_space<vmem>>, vector<1x16x1xf32>
    %57 = vector.shape_cast %56 : vector<1x16x1xf32> to vector<16x1xf32>
    %58 = vector.broadcast %57 : vector<16x1xf32> to vector<16x576xf32>
    %59 = arith.addf %55, %58 : vector<16x576xf32>
    %cst_39 = arith.constant 0.000000e+00 : f32
    %60 = vector.broadcast %cst_39 : f32 to vector<16x576xf32>
    %61 = arith.maximumf %59, %60 : vector<16x576xf32>
    %62 = vector.broadcast %14 : vector<1x576xf32> to vector<16x576xf32>
    %63 = arith.mulf %61, %62 : vector<16x576xf32>
    %c0_40 = arith.constant 0 : index
    %c128_41 = arith.constant 128 : index
    %64 = vector.load %arg10[%c0_40, %c128_41] : memref<16x896xf32, #tpu.memory_space<vmem>>, vector<16x576xf32>
    tpu.vector_store %arg10[%c0_40, %c128_41], %63 {strides = array<i32>} : memref<16x896xf32, #tpu.memory_space<vmem>>, vector<16x576xf32>,
    %c0_42 = arith.constant 0 : index
    %c0_43 = arith.constant 0 : index
    %65 = vector.load %arg10[%c0_42, %c0_43] : memref<16x896xf32, #tpu.memory_space<vmem>>, vector<16x896xf32>
    %66 = arith.truncf %65 : vector<16x896xf32> to vector<16x896xbf16>
    %c1 = arith.constant 1 : index
    %c0_44 = arith.constant 0 : index
    %c0_45 = arith.constant 0 : index
    %67 = vector.load %arg2[%c1, %c0_44, %c0_45] : memref<8x16x144xbf16, #tpu.memory_space<vmem>>, vector<1x16x144xbf16>
    %68 = vector.shape_cast %67 : vector<1x16x144xbf16> to vector<16x144xbf16>
    %69 = vector.extract_strided_slice %66 {offsets = [0, 78], sizes = [16, 256], strides = [1, 1]} : vector<16x896xbf16> to vector<16x256xbf16>
    %70 = vector.extract_strided_slice %66 {offsets = [0, 80], sizes = [16, 256], strides = [1, 1]} : vector<16x896xbf16> to vector<16x256xbf16>
    %71 = vector.extract_strided_slice %66 {offsets = [0, 82], sizes = [16, 256], strides = [1, 1]} : vector<16x896xbf16> to vector<16x256xbf16>
    %72 = vector.extract_strided_slice %66 {offsets = [0, 126], sizes = [16, 256], strides = [1, 1]} : vector<16x896xbf16> to vector<16x256xbf16>
    %73 = vector.extract_strided_slice %66 {offsets = [0, 128], sizes = [16, 256], strides = [1, 1]} : vector<16x896xbf16> to vector<16x256xbf16>
    %74 = vector.extract_strided_slice %66 {offsets = [0, 130], sizes = [16, 256], strides = [1, 1]} : vector<16x896xbf16> to vector<16x256xbf16>
    %75 = vector.extract_strided_slice %66 {offsets = [0, 174], sizes = [16, 256], strides = [1, 1]} : vector<16x896xbf16> to vector<16x256xbf16>
    %76 = vector.extract_strided_slice %66 {offsets = [0, 176], sizes = [16, 256], strides = [1, 1]} : vector<16x896xbf16> to vector<16x256xbf16>
    %77 = vector.extract_strided_slice %66 {offsets = [0, 178], sizes = [16, 256], strides = [1, 1]} : vector<16x896xbf16> to vector<16x256xbf16>
    %78 = tpu.concatenate %69, %70, %71, %72, %73, %74, %75, %76, %77 in 0 : vector<16x256xbf16>, vector<16x256xbf16>, vector<16x256xbf16>, vector<16x256xbf16>, vector<16x256xbf16>, vector<16x256xbf16>, vector<16x256xbf16>, vector<16x256xbf16>, vector<16x256xbf16> -> vector<144x256xbf16>
    %cst_46 = arith.constant dense<0.000000e+00> : vector<16x256xf32>
    %79 = tpu.matmul %68, %78, %cst_46 {dimension_numbers = #tpu.dot_dimension_numbers<[1], [0], [0], [1], [0, 0, 1, 1], [], []>} : vector<16x144xbf16>, vector<144x256xbf16>, vector<16x256xf32> -> vector<16x256xf32>
    %80 = vector.extract_strided_slice %66 {offsets = [0, 334], sizes = [16, 256], strides = [1, 1]} : vector<16x896xbf16> to vector<16x256xbf16>
    %81 = vector.extract_strided_slice %66 {offsets = [0, 336], sizes = [16, 256], strides = [1, 1]} : vector<16x896xbf16> to vector<16x256xbf16>
    %82 = vector.extract_strided_slice %66 {offsets = [0, 338], sizes = [16, 256], strides = [1, 1]} : vector<16x896xbf16> to vector<16x256xbf16>
    %83 = vector.extract_strided_slice %66 {offsets = [0, 382], sizes = [16, 256], strides = [1, 1]} : vector<16x896xbf16> to vector<16x256xbf16>
    %84 = vector.extract_strided_slice %66 {offsets = [0, 384], sizes = [16, 256], strides = [1, 1]} : vector<16x896xbf16> to vector<16x256xbf16>
    %85 = vector.extract_strided_slice %66 {offsets = [0, 386], sizes = [16, 256], strides = [1, 1]} : vector<16x896xbf16> to vector<16x256xbf16>
    %86 = vector.extract_strided_slice %66 {offsets = [0, 430], sizes = [16, 256], strides = [1, 1]} : vector<16x896xbf16> to vector<16x256xbf16>
    %87 = vector.extract_strided_slice %66 {offsets = [0, 432], sizes = [16, 256], strides = [1, 1]} : vector<16x896xbf16> to vector<16x256xbf16>
    %88 = vector.extract_strided_slice %66 {offsets = [0, 434], sizes = [16, 256], strides = [1, 1]} : vector<16x896xbf16> to vector<16x256xbf16>
    %89 = tpu.concatenate %80, %81, %82, %83, %84, %85, %86, %87, %88 in 0 : vector<16x256xbf16>, vector<16x256xbf16>, vector<16x256xbf16>, vector<16x256xbf16>, vector<16x256xbf16>, vector<16x256xbf16>, vector<16x256xbf16>, vector<16x256xbf16>, vector<16x256xbf16> -> vector<144x256xbf16>
    %cst_47 = arith.constant dense<0.000000e+00> : vector<16x256xf32>
    %90 = tpu.matmul %68, %89, %cst_47 {dimension_numbers = #tpu.dot_dimension_numbers<[1], [0], [0], [1], [0, 0, 1, 1], [], []>} : vector<16x144xbf16>, vector<144x256xbf16>, vector<16x256xf32> -> vector<16x256xf32>
    %91 = vector.extract_strided_slice %66 {offsets = [0, 590], sizes = [16, 64], strides = [1, 1]} : vector<16x896xbf16> to vector<16x64xbf16>
    %92 = vector.extract_strided_slice %66 {offsets = [0, 592], sizes = [16, 64], strides = [1, 1]} : vector<16x896xbf16> to vector<16x64xbf16>
    %93 = vector.extract_strided_slice %66 {offsets = [0, 594], sizes = [16, 64], strides = [1, 1]} : vector<16x896xbf16> to vector<16x64xbf16>
    %94 = vector.extract_strided_slice %66 {offsets = [0, 638], sizes = [16, 64], strides = [1, 1]} : vector<16x896xbf16> to vector<16x64xbf16>
    %95 = vector.extract_strided_slice %66 {offsets = [0, 640], sizes = [16, 64], strides = [1, 1]} : vector<16x896xbf16> to vector<16x64xbf16>
    %96 = vector.extract_strided_slice %66 {offsets = [0, 642], sizes = [16, 64], strides = [1, 1]} : vector<16x896xbf16> to vector<16x64xbf16>
    %97 = vector.extract_strided_slice %66 {offsets = [0, 686], sizes = [16, 64], strides = [1, 1]} : vector<16x896xbf16> to vector<16x64xbf16>
    %98 = vector.extract_strided_slice %66 {offsets = [0, 688], sizes = [16, 64], strides = [1, 1]} : vector<16x896xbf16> to vector<16x64xbf16>
    %99 = vector.extract_strided_slice %66 {offsets = [0, 690], sizes = [16, 64], strides = [1, 1]} : vector<16x896xbf16> to vector<16x64xbf16>
    %100 = tpu.concatenate %91, %92, %93, %94, %95, %96, %97, %98, %99 in 0 : vector<16x64xbf16>, vector<16x64xbf16>, vector<16x64xbf16>, vector<16x64xbf16>, vector<16x64xbf16>, vector<16x64xbf16>, vector<16x64xbf16>, vector<16x64xbf16>, vector<16x64xbf16> -> vector<144x64xbf16>
    %cst_48 = arith.constant dense<0.000000e+00> : vector<16x64xf32>
    %101 = tpu.matmul %68, %100, %cst_48 {dimension_numbers = #tpu.dot_dimension_numbers<[1], [0], [0], [1], [0, 0, 1, 1], [], []>} : vector<16x144xbf16>, vector<144x64xbf16>, vector<16x64xf32> -> vector<16x64xf32>
    %102 = tpu.concatenate %79, %90, %101 in 1 : vector<16x256xf32>, vector<16x256xf32>, vector<16x64xf32> -> vector<16x576xf32>
    %c1_49 = arith.constant 1 : index
    %c0_50 = arith.constant 0 : index
    %c0_51 = arith.constant 0 : index
    %103 = vector.load %arg3[%c1_49, %c0_50, %c0_51] : memref<8x16x1xf32, #tpu.memory_space<vmem>>, vector<1x16x1xf32>
    %104 = vector.shape_cast %103 : vector<1x16x1xf32> to vector<16x1xf32>
    %105 = vector.broadcast %104 : vector<16x1xf32> to vector<16x576xf32>
    %106 = arith.addf %102, %105 : vector<16x576xf32>
    %107 = vector.broadcast %14 : vector<1x576xf32> to vector<16x576xf32>
    %108 = arith.mulf %106, %107 : vector<16x576xf32>
    %109 = arith.addf %108, %16 : vector<16x576xf32>
    %c0_52 = arith.constant 0 : index
    %c128_53 = arith.constant 128 : index
    %110 = vector.load %arg11[%c0_52, %c128_53] : memref<16x896xf32, #tpu.memory_space<vmem>>, vector<16x576xf32>
    tpu.vector_store %arg11[%c0_52, %c128_53], %109 {strides = array<i32>} : memref<16x896xf32, #tpu.memory_space<vmem>>, vector<16x576xf32>,
    %c0_54 = arith.constant 0 : index
    %c0_55 = arith.constant 0 : index
    %111 = vector.load %arg11[%c0_54, %c0_55] : memref<16x896xf32, #tpu.memory_space<vmem>>, vector<16x896xf32>
    %112 = arith.truncf %111 : vector<16x896xf32> to vector<16x896xbf16>
    %c2 = arith.constant 2 : index
    %c0_56 = arith.constant 0 : index
    %c0_57 = arith.constant 0 : index
    %113 = vector.load %arg2[%c2, %c0_56, %c0_57] : memref<8x16x144xbf16, #tpu.memory_space<vmem>>, vector<1x16x144xbf16>
    %114 = vector.shape_cast %113 : vector<1x16x144xbf16> to vector<16x144xbf16>
    %115 = vector.extract_strided_slice %112 {offsets = [0, 53], sizes = [16, 256], strides = [1, 1]} : vector<16x896xbf16> to vector<16x256xbf16>
    %116 = vector.extract_strided_slice %112 {offsets = [0, 56], sizes = [16, 256], strides = [1, 1]} : vector<16x896xbf16> to vector<16x256xbf16>
    %117 = vector.extract_strided_slice %112 {offsets = [0, 59], sizes = [16, 256], strides = [1, 1]} : vector<16x896xbf16> to vector<16x256xbf16>
    %118 = vector.extract_strided_slice %112 {offsets = [0, 125], sizes = [16, 256], strides = [1, 1]} : vector<16x896xbf16> to vector<16x256xbf16>
    %119 = vector.extract_strided_slice %112 {offsets = [0, 128], sizes = [16, 256], strides = [1, 1]} : vector<16x896xbf16> to vector<16x256xbf16>
    %120 = vector.extract_strided_slice %112 {offsets = [0, 131], sizes = [16, 256], strides = [1, 1]} : vector<16x896xbf16> to vector<16x256xbf16>
    %121 = vector.extract_strided_slice %112 {offsets = [0, 197], sizes = [16, 256], strides = [1, 1]} : vector<16x896xbf16> to vector<16x256xbf16>
    %122 = vector.extract_strided_slice %112 {offsets = [0, 200], sizes = [16, 256], strides = [1, 1]} : vector<16x896xbf16> to vector<16x256xbf16>
    %123 = vector.extract_strided_slice %112 {offsets = [0, 203], sizes = [16, 256], strides = [1, 1]} : vector<16x896xbf16> to vector<16x256xbf16>
    %124 = tpu.concatenate %115, %116, %117, %118, %119, %120, %121, %122, %123 in 0 : vector<16x256xbf16>, vector<16x256xbf16>, vector<16x256xbf16>, vector<16x256xbf16>, vector<16x256xbf16>, vector<16x256xbf16>, vector<16x256xbf16>, vector<16x256xbf16>, vector<16x256xbf16> -> vector<144x256xbf16>
    %cst_58 = arith.constant dense<0.000000e+00> : vector<16x256xf32>
    %125 = tpu.matmul %114, %124, %cst_58 {dimension_numbers = #tpu.dot_dimension_numbers<[1], [0], [0], [1], [0, 0, 1, 1], [], []>} : vector<16x144xbf16>, vector<144x256xbf16>, vector<16x256xf32> -> vector<16x256xf32>
    %126 = vector.extract_strided_slice %112 {offsets = [0, 309], sizes = [16, 256], strides = [1, 1]} : vector<16x896xbf16> to vector<16x256xbf16>
    %127 = vector.extract_strided_slice %112 {offsets = [0, 312], sizes = [16, 256], strides = [1, 1]} : vector<16x896xbf16> to vector<16x256xbf16>
    %128 = vector.extract_strided_slice %112 {offsets = [0, 315], sizes = [16, 256], strides = [1, 1]} : vector<16x896xbf16> to vector<16x256xbf16>
    %129 = vector.extract_strided_slice %112 {offsets = [0, 381], sizes = [16, 256], strides = [1, 1]} : vector<16x896xbf16> to vector<16x256xbf16>
    %130 = vector.extract_strided_slice %112 {offsets = [0, 384], sizes = [16, 256], strides = [1, 1]} : vector<16x896xbf16> to vector<16x256xbf16>
    %131 = vector.extract_strided_slice %112 {offsets = [0, 387], sizes = [16, 256], strides = [1, 1]} : vector<16x896xbf16> to vector<16x256xbf16>
    %132 = vector.extract_strided_slice %112 {offsets = [0, 453], sizes = [16, 256], strides = [1, 1]} : vector<16x896xbf16> to vector<16x256xbf16>
    %133 = vector.extract_strided_slice %112 {offsets = [0, 456], sizes = [16, 256], strides = [1, 1]} : vector<16x896xbf16> to vector<16x256xbf16>
    %134 = vector.extract_strided_slice %112 {offsets = [0, 459], sizes = [16, 256], strides = [1, 1]} : vector<16x896xbf16> to vector<16x256xbf16>
    %135 = tpu.concatenate %126, %127, %128, %129, %130, %131, %132, %133, %134 in 0 : vector<16x256xbf16>, vector<16x256xbf16>, vector<16x256xbf16>, vector<16x256xbf16>, vector<16x256xbf16>, vector<16x256xbf16>, vector<16x256xbf16>, vector<16x256xbf16>, vector<16x256xbf16> -> vector<144x256xbf16>
    %cst_59 = arith.constant dense<0.000000e+00> : vector<16x256xf32>
    %136 = tpu.matmul %114, %135, %cst_59 {dimension_numbers = #tpu.dot_dimension_numbers<[1], [0], [0], [1], [0, 0, 1, 1], [], []>} : vector<16x144xbf16>, vector<144x256xbf16>, vector<16x256xf32> -> vector<16x256xf32>
    %137 = vector.extract_strided_slice %112 {offsets = [0, 565], sizes = [16, 64], strides = [1, 1]} : vector<16x896xbf16> to vector<16x64xbf16>
    %138 = vector.extract_strided_slice %112 {offsets = [0, 568], sizes = [16, 64], strides = [1, 1]} : vector<16x896xbf16> to vector<16x64xbf16>
    %139 = vector.extract_strided_slice %112 {offsets = [0, 571], sizes = [16, 64], strides = [1, 1]} : vector<16x896xbf16> to vector<16x64xbf16>
    %140 = vector.extract_strided_slice %112 {offsets = [0, 637], sizes = [16, 64], strides = [1, 1]} : vector<16x896xbf16> to vector<16x64xbf16>
    %141 = vector.extract_strided_slice %112 {offsets = [0, 640], sizes = [16, 64], strides = [1, 1]} : vector<16x896xbf16> to vector<16x64xbf16>
    %142 = vector.extract_strided_slice %112 {offsets = [0, 643], sizes = [16, 64], strides = [1, 1]} : vector<16x896xbf16> to vector<16x64xbf16>
    %143 = vector.extract_strided_slice %112 {offsets = [0, 709], sizes = [16, 64], strides = [1, 1]} : vector<16x896xbf16> to vector<16x64xbf16>
    %144 = vector.extract_strided_slice %112 {offsets = [0, 712], sizes = [16, 64], strides = [1, 1]} : vector<16x896xbf16> to vector<16x64xbf16>
    %145 = vector.extract_strided_slice %112 {offsets = [0, 715], sizes = [16, 64], strides = [1, 1]} : vector<16x896xbf16> to vector<16x64xbf16>
    %146 = tpu.concatenate %137, %138, %139, %140, %141, %142, %143, %144, %145 in 0 : vector<16x64xbf16>, vector<16x64xbf16>, vector<16x64xbf16>, vector<16x64xbf16>, vector<16x64xbf16>, vector<16x64xbf16>, vector<16x64xbf16>, vector<16x64xbf16>, vector<16x64xbf16> -> vector<144x64xbf16>
    %cst_60 = arith.constant dense<0.000000e+00> : vector<16x64xf32>
    %147 = tpu.matmul %114, %146, %cst_60 {dimension_numbers = #tpu.dot_dimension_numbers<[1], [0], [0], [1], [0, 0, 1, 1], [], []>} : vector<16x144xbf16>, vector<144x64xbf16>, vector<16x64xf32> -> vector<16x64xf32>
    %148 = tpu.concatenate %125, %136, %147 in 1 : vector<16x256xf32>, vector<16x256xf32>, vector<16x64xf32> -> vector<16x576xf32>
    %c2_61 = arith.constant 2 : index
    %c0_62 = arith.constant 0 : index
    %c0_63 = arith.constant 0 : index
    %149 = vector.load %arg3[%c2_61, %c0_62, %c0_63] : memref<8x16x1xf32, #tpu.memory_space<vmem>>, vector<1x16x1xf32>
    %150 = vector.shape_cast %149 : vector<1x16x1xf32> to vector<16x1xf32>
    %151 = vector.broadcast %150 : vector<16x1xf32> to vector<16x576xf32>
    %152 = arith.addf %148, %151 : vector<16x576xf32>
    %cst_64 = arith.constant 0.000000e+00 : f32
    %153 = vector.broadcast %cst_64 : f32 to vector<16x576xf32>
    %154 = arith.maximumf %152, %153 : vector<16x576xf32>
    %155 = vector.broadcast %14 : vector<1x576xf32> to vector<16x576xf32>
    %156 = arith.mulf %154, %155 : vector<16x576xf32>
    %c0_65 = arith.constant 0 : index
    %c128_66 = arith.constant 128 : index
    %157 = vector.load %arg12[%c0_65, %c128_66] : memref<16x896xf32, #tpu.memory_space<vmem>>, vector<16x576xf32>
    tpu.vector_store %arg12[%c0_65, %c128_66], %156 {strides = array<i32>} : memref<16x896xf32, #tpu.memory_space<vmem>>, vector<16x576xf32>,
    %c0_67 = arith.constant 0 : index
    %c0_68 = arith.constant 0 : index
    %158 = vector.load %arg12[%c0_67, %c0_68] : memref<16x896xf32, #tpu.memory_space<vmem>>, vector<16x896xf32>
    %159 = arith.truncf %158 : vector<16x896xf32> to vector<16x896xbf16>
    %c3 = arith.constant 3 : index
    %c0_69 = arith.constant 0 : index
    %c0_70 = arith.constant 0 : index
    %160 = vector.load %arg2[%c3, %c0_69, %c0_70] : memref<8x16x144xbf16, #tpu.memory_space<vmem>>, vector<1x16x144xbf16>
    %161 = vector.shape_cast %160 : vector<1x16x144xbf16> to vector<16x144xbf16>
    %162 = vector.extract_strided_slice %159 {offsets = [0, 28], sizes = [16, 256], strides = [1, 1]} : vector<16x896xbf16> to vector<16x256xbf16>
    %163 = vector.extract_strided_slice %159 {offsets = [0, 32], sizes = [16, 256], strides = [1, 1]} : vector<16x896xbf16> to vector<16x256xbf16>
    %164 = vector.extract_strided_slice %159 {offsets = [0, 36], sizes = [16, 256], strides = [1, 1]} : vector<16x896xbf16> to vector<16x256xbf16>
    %165 = vector.extract_strided_slice %159 {offsets = [0, 124], sizes = [16, 256], strides = [1, 1]} : vector<16x896xbf16> to vector<16x256xbf16>
    %166 = vector.extract_strided_slice %159 {offsets = [0, 128], sizes = [16, 256], strides = [1, 1]} : vector<16x896xbf16> to vector<16x256xbf16>
    %167 = vector.extract_strided_slice %159 {offsets = [0, 132], sizes = [16, 256], strides = [1, 1]} : vector<16x896xbf16> to vector<16x256xbf16>
    %168 = vector.extract_strided_slice %159 {offsets = [0, 220], sizes = [16, 256], strides = [1, 1]} : vector<16x896xbf16> to vector<16x256xbf16>
    %169 = vector.extract_strided_slice %159 {offsets = [0, 224], sizes = [16, 256], strides = [1, 1]} : vector<16x896xbf16> to vector<16x256xbf16>
    %170 = vector.extract_strided_slice %159 {offsets = [0, 228], sizes = [16, 256], strides = [1, 1]} : vector<16x896xbf16> to vector<16x256xbf16>
    %171 = tpu.concatenate %162, %163, %164, %165, %166, %167, %168, %169, %170 in 0 : vector<16x256xbf16>, vector<16x256xbf16>, vector<16x256xbf16>, vector<16x256xbf16>, vector<16x256xbf16>, vector<16x256xbf16>, vector<16x256xbf16>, vector<16x256xbf16>, vector<16x256xbf16> -> vector<144x256xbf16>
    %cst_71 = arith.constant dense<0.000000e+00> : vector<16x256xf32>
    %172 = tpu.matmul %161, %171, %cst_71 {dimension_numbers = #tpu.dot_dimension_numbers<[1], [0], [0], [1], [0, 0, 1, 1], [], []>} : vector<16x144xbf16>, vector<144x256xbf16>, vector<16x256xf32> -> vector<16x256xf32>
    %173 = vector.extract_strided_slice %159 {offsets = [0, 284], sizes = [16, 256], strides = [1, 1]} : vector<16x896xbf16> to vector<16x256xbf16>
    %174 = vector.extract_strided_slice %159 {offsets = [0, 288], sizes = [16, 256], strides = [1, 1]} : vector<16x896xbf16> to vector<16x256xbf16>
    %175 = vector.extract_strided_slice %159 {offsets = [0, 292], sizes = [16, 256], strides = [1, 1]} : vector<16x896xbf16> to vector<16x256xbf16>
    %176 = vector.extract_strided_slice %159 {offsets = [0, 380], sizes = [16, 256], strides = [1, 1]} : vector<16x896xbf16> to vector<16x256xbf16>
    %177 = vector.extract_strided_slice %159 {offsets = [0, 384], sizes = [16, 256], strides = [1, 1]} : vector<16x896xbf16> to vector<16x256xbf16>
    %178 = vector.extract_strided_slice %159 {offsets = [0, 388], sizes = [16, 256], strides = [1, 1]} : vector<16x896xbf16> to vector<16x256xbf16>
    %179 = vector.extract_strided_slice %159 {offsets = [0, 476], sizes = [16, 256], strides = [1, 1]} : vector<16x896xbf16> to vector<16x256xbf16>
    %180 = vector.extract_strided_slice %159 {offsets = [0, 480], sizes = [16, 256], strides = [1, 1]} : vector<16x896xbf16> to vector<16x256xbf16>
    %181 = vector.extract_strided_slice %159 {offsets = [0, 484], sizes = [16, 256], strides = [1, 1]} : vector<16x896xbf16> to vector<16x256xbf16>
    %182 = tpu.concatenate %173, %174, %175, %176, %177, %178, %179, %180, %181 in 0 : vector<16x256xbf16>, vector<16x256xbf16>, vector<16x256xbf16>, vector<16x256xbf16>, vector<16x256xbf16>, vector<16x256xbf16>, vector<16x256xbf16>, vector<16x256xbf16>, vector<16x256xbf16> -> vector<144x256xbf16>
    %cst_72 = arith.constant dense<0.000000e+00> : vector<16x256xf32>
    %183 = tpu.matmul %161, %182, %cst_72 {dimension_numbers = #tpu.dot_dimension_numbers<[1], [0], [0], [1], [0, 0, 1, 1], [], []>} : vector<16x144xbf16>, vector<144x256xbf16>, vector<16x256xf32> -> vector<16x256xf32>
    %184 = vector.extract_strided_slice %159 {offsets = [0, 540], sizes = [16, 64], strides = [1, 1]} : vector<16x896xbf16> to vector<16x64xbf16>
    %185 = vector.extract_strided_slice %159 {offsets = [0, 544], sizes = [16, 64], strides = [1, 1]} : vector<16x896xbf16> to vector<16x64xbf16>
    %186 = vector.extract_strided_slice %159 {offsets = [0, 548], sizes = [16, 64], strides = [1, 1]} : vector<16x896xbf16> to vector<16x64xbf16>
    %187 = vector.extract_strided_slice %159 {offsets = [0, 636], sizes = [16, 64], strides = [1, 1]} : vector<16x896xbf16> to vector<16x64xbf16>
    %188 = vector.extract_strided_slice %159 {offsets = [0, 640], sizes = [16, 64], strides = [1, 1]} : vector<16x896xbf16> to vector<16x64xbf16>
    %189 = vector.extract_strided_slice %159 {offsets = [0, 644], sizes = [16, 64], strides = [1, 1]} : vector<16x896xbf16> to vector<16x64xbf16>
    %190 = vector.extract_strided_slice %159 {offsets = [0, 732], sizes = [16, 64], strides = [1, 1]} : vector<16x896xbf16> to vector<16x64xbf16>
    %191 = vector.extract_strided_slice %159 {offsets = [0, 736], sizes = [16, 64], strides = [1, 1]} : vector<16x896xbf16> to vector<16x64xbf16>
    %192 = vector.extract_strided_slice %159 {offsets = [0, 740], sizes = [16, 64], strides = [1, 1]} : vector<16x896xbf16> to vector<16x64xbf16>
    %193 = tpu.concatenate %184, %185, %186, %187, %188, %189, %190, %191, %192 in 0 : vector<16x64xbf16>, vector<16x64xbf16>, vector<16x64xbf16>, vector<16x64xbf16>, vector<16x64xbf16>, vector<16x64xbf16>, vector<16x64xbf16>, vector<16x64xbf16>, vector<16x64xbf16> -> vector<144x64xbf16>
    %cst_73 = arith.constant dense<0.000000e+00> : vector<16x64xf32>
    %194 = tpu.matmul %161, %193, %cst_73 {dimension_numbers = #tpu.dot_dimension_numbers<[1], [0], [0], [1], [0, 0, 1, 1], [], []>} : vector<16x144xbf16>, vector<144x64xbf16>, vector<16x64xf32> -> vector<16x64xf32>
    %195 = tpu.concatenate %172, %183, %194 in 1 : vector<16x256xf32>, vector<16x256xf32>, vector<16x64xf32> -> vector<16x576xf32>
    %c3_74 = arith.constant 3 : index
    %c0_75 = arith.constant 0 : index
    %c0_76 = arith.constant 0 : index
    %196 = vector.load %arg3[%c3_74, %c0_75, %c0_76] : memref<8x16x1xf32, #tpu.memory_space<vmem>>, vector<1x16x1xf32>
    %197 = vector.shape_cast %196 : vector<1x16x1xf32> to vector<16x1xf32>
    %198 = vector.broadcast %197 : vector<16x1xf32> to vector<16x576xf32>
    %199 = arith.addf %195, %198 : vector<16x576xf32>
    %200 = vector.broadcast %14 : vector<1x576xf32> to vector<16x576xf32>
    %201 = arith.mulf %199, %200 : vector<16x576xf32>
    %c0_77 = arith.constant 0 : index
    %c128_78 = arith.constant 128 : index
    %202 = vector.load %arg11[%c0_77, %c128_78] : memref<16x896xf32, #tpu.memory_space<vmem>>, vector<16x576xf32>
    %203 = arith.addf %201, %202 : vector<16x576xf32>
    %c0_79 = arith.constant 0 : index
    %c128_80 = arith.constant 128 : index
    %204 = vector.load %arg13[%c0_79, %c128_80] : memref<16x896xf32, #tpu.memory_space<vmem>>, vector<16x576xf32>
    tpu.vector_store %arg13[%c0_79, %c128_80], %203 {strides = array<i32>} : memref<16x896xf32, #tpu.memory_space<vmem>>, vector<16x576xf32>,
    %c0_81 = arith.constant 0 : index
    %c0_82 = arith.constant 0 : index
    %205 = vector.load %arg13[%c0_81, %c0_82] : memref<16x896xf32, #tpu.memory_space<vmem>>, vector<16x896xf32>
    %206 = arith.truncf %205 : vector<16x896xf32> to vector<16x896xbf16>
    %c4 = arith.constant 4 : index
    %c0_83 = arith.constant 0 : index
    %c0_84 = arith.constant 0 : index
    %207 = vector.load %arg2[%c4, %c0_83, %c0_84] : memref<8x16x144xbf16, #tpu.memory_space<vmem>>, vector<1x16x144xbf16>
    %208 = vector.shape_cast %207 : vector<1x16x144xbf16> to vector<16x144xbf16>
    %209 = vector.extract_strided_slice %206 {offsets = [0, 53], sizes = [16, 256], strides = [1, 1]} : vector<16x896xbf16> to vector<16x256xbf16>
    %210 = vector.extract_strided_slice %206 {offsets = [0, 56], sizes = [16, 256], strides = [1, 1]} : vector<16x896xbf16> to vector<16x256xbf16>
    %211 = vector.extract_strided_slice %206 {offsets = [0, 59], sizes = [16, 256], strides = [1, 1]} : vector<16x896xbf16> to vector<16x256xbf16>
    %212 = vector.extract_strided_slice %206 {offsets = [0, 125], sizes = [16, 256], strides = [1, 1]} : vector<16x896xbf16> to vector<16x256xbf16>
    %213 = vector.extract_strided_slice %206 {offsets = [0, 128], sizes = [16, 256], strides = [1, 1]} : vector<16x896xbf16> to vector<16x256xbf16>
    %214 = vector.extract_strided_slice %206 {offsets = [0, 131], sizes = [16, 256], strides = [1, 1]} : vector<16x896xbf16> to vector<16x256xbf16>
    %215 = vector.extract_strided_slice %206 {offsets = [0, 197], sizes = [16, 256], strides = [1, 1]} : vector<16x896xbf16> to vector<16x256xbf16>
    %216 = vector.extract_strided_slice %206 {offsets = [0, 200], sizes = [16, 256], strides = [1, 1]} : vector<16x896xbf16> to vector<16x256xbf16>
    %217 = vector.extract_strided_slice %206 {offsets = [0, 203], sizes = [16, 256], strides = [1, 1]} : vector<16x896xbf16> to vector<16x256xbf16>
    %218 = tpu.concatenate %209, %210, %211, %212, %213, %214, %215, %216, %217 in 0 : vector<16x256xbf16>, vector<16x256xbf16>, vector<16x256xbf16>, vector<16x256xbf16>, vector<16x256xbf16>, vector<16x256xbf16>, vector<16x256xbf16>, vector<16x256xbf16>, vector<16x256xbf16> -> vector<144x256xbf16>
    %cst_85 = arith.constant dense<0.000000e+00> : vector<16x256xf32>
    %219 = tpu.matmul %208, %218, %cst_85 {dimension_numbers = #tpu.dot_dimension_numbers<[1], [0], [0], [1], [0, 0, 1, 1], [], []>} : vector<16x144xbf16>, vector<144x256xbf16>, vector<16x256xf32> -> vector<16x256xf32>
    %220 = vector.extract_strided_slice %206 {offsets = [0, 309], sizes = [16, 256], strides = [1, 1]} : vector<16x896xbf16> to vector<16x256xbf16>
    %221 = vector.extract_strided_slice %206 {offsets = [0, 312], sizes = [16, 256], strides = [1, 1]} : vector<16x896xbf16> to vector<16x256xbf16>
    %222 = vector.extract_strided_slice %206 {offsets = [0, 315], sizes = [16, 256], strides = [1, 1]} : vector<16x896xbf16> to vector<16x256xbf16>
    %223 = vector.extract_strided_slice %206 {offsets = [0, 381], sizes = [16, 256], strides = [1, 1]} : vector<16x896xbf16> to vector<16x256xbf16>
    %224 = vector.extract_strided_slice %206 {offsets = [0, 384], sizes = [16, 256], strides = [1, 1]} : vector<16x896xbf16> to vector<16x256xbf16>
    %225 = vector.extract_strided_slice %206 {offsets = [0, 387], sizes = [16, 256], strides = [1, 1]} : vector<16x896xbf16> to vector<16x256xbf16>
    %226 = vector.extract_strided_slice %206 {offsets = [0, 453], sizes = [16, 256], strides = [1, 1]} : vector<16x896xbf16> to vector<16x256xbf16>
    %227 = vector.extract_strided_slice %206 {offsets = [0, 456], sizes = [16, 256], strides = [1, 1]} : vector<16x896xbf16> to vector<16x256xbf16>
    %228 = vector.extract_strided_slice %206 {offsets = [0, 459], sizes = [16, 256], strides = [1, 1]} : vector<16x896xbf16> to vector<16x256xbf16>
    %229 = tpu.concatenate %220, %221, %222, %223, %224, %225, %226, %227, %228 in 0 : vector<16x256xbf16>, vector<16x256xbf16>, vector<16x256xbf16>, vector<16x256xbf16>, vector<16x256xbf16>, vector<16x256xbf16>, vector<16x256xbf16>, vector<16x256xbf16>, vector<16x256xbf16> -> vector<144x256xbf16>
    %cst_86 = arith.constant dense<0.000000e+00> : vector<16x256xf32>
    %230 = tpu.matmul %208, %229, %cst_86 {dimension_numbers = #tpu.dot_dimension_numbers<[1], [0], [0], [1], [0, 0, 1, 1], [], []>} : vector<16x144xbf16>, vector<144x256xbf16>, vector<16x256xf32> -> vector<16x256xf32>
    %231 = vector.extract_strided_slice %206 {offsets = [0, 565], sizes = [16, 64], strides = [1, 1]} : vector<16x896xbf16> to vector<16x64xbf16>
    %232 = vector.extract_strided_slice %206 {offsets = [0, 568], sizes = [16, 64], strides = [1, 1]} : vector<16x896xbf16> to vector<16x64xbf16>
    %233 = vector.extract_strided_slice %206 {offsets = [0, 571], sizes = [16, 64], strides = [1, 1]} : vector<16x896xbf16> to vector<16x64xbf16>
    %234 = vector.extract_strided_slice %206 {offsets = [0, 637], sizes = [16, 64], strides = [1, 1]} : vector<16x896xbf16> to vector<16x64xbf16>
    %235 = vector.extract_strided_slice %206 {offsets = [0, 640], sizes = [16, 64], strides = [1, 1]} : vector<16x896xbf16> to vector<16x64xbf16>
    %236 = vector.extract_strided_slice %206 {offsets = [0, 643], sizes = [16, 64], strides = [1, 1]} : vector<16x896xbf16> to vector<16x64xbf16>
    %237 = vector.extract_strided_slice %206 {offsets = [0, 709], sizes = [16, 64], strides = [1, 1]} : vector<16x896xbf16> to vector<16x64xbf16>
    %238 = vector.extract_strided_slice %206 {offsets = [0, 712], sizes = [16, 64], strides = [1, 1]} : vector<16x896xbf16> to vector<16x64xbf16>
    %239 = vector.extract_strided_slice %206 {offsets = [0, 715], sizes = [16, 64], strides = [1, 1]} : vector<16x896xbf16> to vector<16x64xbf16>
    %240 = tpu.concatenate %231, %232, %233, %234, %235, %236, %237, %238, %239 in 0 : vector<16x64xbf16>, vector<16x64xbf16>, vector<16x64xbf16>, vector<16x64xbf16>, vector<16x64xbf16>, vector<16x64xbf16>, vector<16x64xbf16>, vector<16x64xbf16>, vector<16x64xbf16> -> vector<144x64xbf16>
    %cst_87 = arith.constant dense<0.000000e+00> : vector<16x64xf32>
    %241 = tpu.matmul %208, %240, %cst_87 {dimension_numbers = #tpu.dot_dimension_numbers<[1], [0], [0], [1], [0, 0, 1, 1], [], []>} : vector<16x144xbf16>, vector<144x64xbf16>, vector<16x64xf32> -> vector<16x64xf32>
    %242 = tpu.concatenate %219, %230, %241 in 1 : vector<16x256xf32>, vector<16x256xf32>, vector<16x64xf32> -> vector<16x576xf32>
    %c4_88 = arith.constant 4 : index
    %c0_89 = arith.constant 0 : index
    %c0_90 = arith.constant 0 : index
    %243 = vector.load %arg3[%c4_88, %c0_89, %c0_90] : memref<8x16x1xf32, #tpu.memory_space<vmem>>, vector<1x16x1xf32>
    %244 = vector.shape_cast %243 : vector<1x16x1xf32> to vector<16x1xf32>
    %245 = vector.broadcast %244 : vector<16x1xf32> to vector<16x576xf32>
    %246 = arith.addf %242, %245 : vector<16x576xf32>
    %cst_91 = arith.constant 0.000000e+00 : f32
    %247 = vector.broadcast %cst_91 : f32 to vector<16x576xf32>
    %248 = arith.maximumf %246, %247 : vector<16x576xf32>
    %249 = vector.broadcast %14 : vector<1x576xf32> to vector<16x576xf32>
    %250 = arith.mulf %248, %249 : vector<16x576xf32>
    %c0_92 = arith.constant 0 : index
    %c128_93 = arith.constant 128 : index
    %251 = vector.load %arg12[%c0_92, %c128_93] : memref<16x896xf32, #tpu.memory_space<vmem>>, vector<16x576xf32>
    %252 = arith.addf %250, %251 : vector<16x576xf32>
    %c0_94 = arith.constant 0 : index
    %c128_95 = arith.constant 128 : index
    %253 = vector.load %arg15[%c0_94, %c128_95] : memref<16x896xf32, #tpu.memory_space<vmem>>, vector<16x576xf32>
    tpu.vector_store %arg15[%c0_94, %c128_95], %252 {strides = array<i32>} : memref<16x896xf32, #tpu.memory_space<vmem>>, vector<16x576xf32>,
    %c0_96 = arith.constant 0 : index
    %c0_97 = arith.constant 0 : index
    %254 = vector.load %arg15[%c0_96, %c0_97] : memref<16x896xf32, #tpu.memory_space<vmem>>, vector<16x896xf32>
    %255 = arith.truncf %254 : vector<16x896xf32> to vector<16x896xbf16>
    %c5 = arith.constant 5 : index
    %c0_98 = arith.constant 0 : index
    %c0_99 = arith.constant 0 : index
    %256 = vector.load %arg2[%c5, %c0_98, %c0_99] : memref<8x16x144xbf16, #tpu.memory_space<vmem>>, vector<1x16x144xbf16>
    %257 = vector.shape_cast %256 : vector<1x16x144xbf16> to vector<16x144xbf16>
    %258 = vector.extract_strided_slice %255 {offsets = [0, 78], sizes = [16, 256], strides = [1, 1]} : vector<16x896xbf16> to vector<16x256xbf16>
    %259 = vector.extract_strided_slice %255 {offsets = [0, 80], sizes = [16, 256], strides = [1, 1]} : vector<16x896xbf16> to vector<16x256xbf16>
    %260 = vector.extract_strided_slice %255 {offsets = [0, 82], sizes = [16, 256], strides = [1, 1]} : vector<16x896xbf16> to vector<16x256xbf16>
    %261 = vector.extract_strided_slice %255 {offsets = [0, 126], sizes = [16, 256], strides = [1, 1]} : vector<16x896xbf16> to vector<16x256xbf16>
    %262 = vector.extract_strided_slice %255 {offsets = [0, 128], sizes = [16, 256], strides = [1, 1]} : vector<16x896xbf16> to vector<16x256xbf16>
    %263 = vector.extract_strided_slice %255 {offsets = [0, 130], sizes = [16, 256], strides = [1, 1]} : vector<16x896xbf16> to vector<16x256xbf16>
    %264 = vector.extract_strided_slice %255 {offsets = [0, 174], sizes = [16, 256], strides = [1, 1]} : vector<16x896xbf16> to vector<16x256xbf16>
    %265 = vector.extract_strided_slice %255 {offsets = [0, 176], sizes = [16, 256], strides = [1, 1]} : vector<16x896xbf16> to vector<16x256xbf16>
    %266 = vector.extract_strided_slice %255 {offsets = [0, 178], sizes = [16, 256], strides = [1, 1]} : vector<16x896xbf16> to vector<16x256xbf16>
    %267 = tpu.concatenate %258, %259, %260, %261, %262, %263, %264, %265, %266 in 0 : vector<16x256xbf16>, vector<16x256xbf16>, vector<16x256xbf16>, vector<16x256xbf16>, vector<16x256xbf16>, vector<16x256xbf16>, vector<16x256xbf16>, vector<16x256xbf16>, vector<16x256xbf16> -> vector<144x256xbf16>
    %cst_100 = arith.constant dense<0.000000e+00> : vector<16x256xf32>
    %268 = tpu.matmul %257, %267, %cst_100 {dimension_numbers = #tpu.dot_dimension_numbers<[1], [0], [0], [1], [0, 0, 1, 1], [], []>} : vector<16x144xbf16>, vector<144x256xbf16>, vector<16x256xf32> -> vector<16x256xf32>
    %269 = vector.extract_strided_slice %255 {offsets = [0, 334], sizes = [16, 256], strides = [1, 1]} : vector<16x896xbf16> to vector<16x256xbf16>
    %270 = vector.extract_strided_slice %255 {offsets = [0, 336], sizes = [16, 256], strides = [1, 1]} : vector<16x896xbf16> to vector<16x256xbf16>
    %271 = vector.extract_strided_slice %255 {offsets = [0, 338], sizes = [16, 256], strides = [1, 1]} : vector<16x896xbf16> to vector<16x256xbf16>
    %272 = vector.extract_strided_slice %255 {offsets = [0, 382], sizes = [16, 256], strides = [1, 1]} : vector<16x896xbf16> to vector<16x256xbf16>
    %273 = vector.extract_strided_slice %255 {offsets = [0, 384], sizes = [16, 256], strides = [1, 1]} : vector<16x896xbf16> to vector<16x256xbf16>
    %274 = vector.extract_strided_slice %255 {offsets = [0, 386], sizes = [16, 256], strides = [1, 1]} : vector<16x896xbf16> to vector<16x256xbf16>
    %275 = vector.extract_strided_slice %255 {offsets = [0, 430], sizes = [16, 256], strides = [1, 1]} : vector<16x896xbf16> to vector<16x256xbf16>
    %276 = vector.extract_strided_slice %255 {offsets = [0, 432], sizes = [16, 256], strides = [1, 1]} : vector<16x896xbf16> to vector<16x256xbf16>
    %277 = vector.extract_strided_slice %255 {offsets = [0, 434], sizes = [16, 256], strides = [1, 1]} : vector<16x896xbf16> to vector<16x256xbf16>
    %278 = tpu.concatenate %269, %270, %271, %272, %273, %274, %275, %276, %277 in 0 : vector<16x256xbf16>, vector<16x256xbf16>, vector<16x256xbf16>, vector<16x256xbf16>, vector<16x256xbf16>, vector<16x256xbf16>, vector<16x256xbf16>, vector<16x256xbf16>, vector<16x256xbf16> -> vector<144x256xbf16>
    %cst_101 = arith.constant dense<0.000000e+00> : vector<16x256xf32>
    %279 = tpu.matmul %257, %278, %cst_101 {dimension_numbers = #tpu.dot_dimension_numbers<[1], [0], [0], [1], [0, 0, 1, 1], [], []>} : vector<16x144xbf16>, vector<144x256xbf16>, vector<16x256xf32> -> vector<16x256xf32>
    %280 = vector.extract_strided_slice %255 {offsets = [0, 590], sizes = [16, 64], strides = [1, 1]} : vector<16x896xbf16> to vector<16x64xbf16>
    %281 = vector.extract_strided_slice %255 {offsets = [0, 592], sizes = [16, 64], strides = [1, 1]} : vector<16x896xbf16> to vector<16x64xbf16>
    %282 = vector.extract_strided_slice %255 {offsets = [0, 594], sizes = [16, 64], strides = [1, 1]} : vector<16x896xbf16> to vector<16x64xbf16>
    %283 = vector.extract_strided_slice %255 {offsets = [0, 638], sizes = [16, 64], strides = [1, 1]} : vector<16x896xbf16> to vector<16x64xbf16>
    %284 = vector.extract_strided_slice %255 {offsets = [0, 640], sizes = [16, 64], strides = [1, 1]} : vector<16x896xbf16> to vector<16x64xbf16>
    %285 = vector.extract_strided_slice %255 {offsets = [0, 642], sizes = [16, 64], strides = [1, 1]} : vector<16x896xbf16> to vector<16x64xbf16>
    %286 = vector.extract_strided_slice %255 {offsets = [0, 686], sizes = [16, 64], strides = [1, 1]} : vector<16x896xbf16> to vector<16x64xbf16>
    %287 = vector.extract_strided_slice %255 {offsets = [0, 688], sizes = [16, 64], strides = [1, 1]} : vector<16x896xbf16> to vector<16x64xbf16>
    %288 = vector.extract_strided_slice %255 {offsets = [0, 690], sizes = [16, 64], strides = [1, 1]} : vector<16x896xbf16> to vector<16x64xbf16>
    %289 = tpu.concatenate %280, %281, %282, %283, %284, %285, %286, %287, %288 in 0 : vector<16x64xbf16>, vector<16x64xbf16>, vector<16x64xbf16>, vector<16x64xbf16>, vector<16x64xbf16>, vector<16x64xbf16>, vector<16x64xbf16>, vector<16x64xbf16>, vector<16x64xbf16> -> vector<144x64xbf16>
    %cst_102 = arith.constant dense<0.000000e+00> : vector<16x64xf32>
    %290 = tpu.matmul %257, %289, %cst_102 {dimension_numbers = #tpu.dot_dimension_numbers<[1], [0], [0], [1], [0, 0, 1, 1], [], []>} : vector<16x144xbf16>, vector<144x64xbf16>, vector<16x64xf32> -> vector<16x64xf32>
    %291 = tpu.concatenate %268, %279, %290 in 1 : vector<16x256xf32>, vector<16x256xf32>, vector<16x64xf32> -> vector<16x576xf32>
    %c5_103 = arith.constant 5 : index
    %c0_104 = arith.constant 0 : index
    %c0_105 = arith.constant 0 : index
    %292 = vector.load %arg3[%c5_103, %c0_104, %c0_105] : memref<8x16x1xf32, #tpu.memory_space<vmem>>, vector<1x16x1xf32>
    %293 = vector.shape_cast %292 : vector<1x16x1xf32> to vector<16x1xf32>
    %294 = vector.broadcast %293 : vector<16x1xf32> to vector<16x576xf32>
    %295 = arith.addf %291, %294 : vector<16x576xf32>
    %296 = vector.broadcast %14 : vector<1x576xf32> to vector<16x576xf32>
    %297 = arith.mulf %295, %296 : vector<16x576xf32>
    %c0_106 = arith.constant 0 : index
    %c128_107 = arith.constant 128 : index
    %298 = vector.load %arg13[%c0_106, %c128_107] : memref<16x896xf32, #tpu.memory_space<vmem>>, vector<16x576xf32>
    %299 = arith.addf %297, %298 : vector<16x576xf32>
    %c0_108 = arith.constant 0 : index
    %c128_109 = arith.constant 128 : index
    %300 = vector.load %arg14[%c0_108, %c128_109] : memref<16x896xf32, #tpu.memory_space<vmem>>, vector<16x576xf32>
    tpu.vector_store %arg14[%c0_108, %c128_109], %299 {strides = array<i32>} : memref<16x896xf32, #tpu.memory_space<vmem>>, vector<16x576xf32>,
    %c0_110 = arith.constant 0 : index
    %c0_111 = arith.constant 0 : index
    %301 = vector.load %arg14[%c0_110, %c0_111] : memref<16x896xf32, #tpu.memory_space<vmem>>, vector<16x896xf32>
    %c0_112 = arith.constant 0 : index
    %c0_113 = arith.constant 0 : index
    %302 = vector.load %arg11[%c0_112, %c0_113] : memref<16x896xf32, #tpu.memory_space<vmem>>, vector<16x896xf32>
    %303 = arith.addf %301, %302 : vector<16x896xf32>
    %c0_114 = arith.constant 0 : index
    %c0_115 = arith.constant 0 : index
    %304 = vector.load %arg16[%c0_114, %c0_115] : memref<16x896xf32, #tpu.memory_space<vmem>>, vector<16x896xf32>
    tpu.vector_store %arg16[%c0_114, %c0_115], %303 {strides = array<i32>} : memref<16x896xf32, #tpu.memory_space<vmem>>, vector<16x896xf32>,
    %c0_116 = arith.constant 0 : index
    %c0_117 = arith.constant 0 : index
    %305 = vector.load %arg16[%c0_116, %c0_117] : memref<16x896xf32, #tpu.memory_space<vmem>>, vector<16x896xf32>
    %306 = arith.truncf %305 : vector<16x896xf32> to vector<16x896xbf16>
    %c6 = arith.constant 6 : index
    %c0_118 = arith.constant 0 : index
    %c0_119 = arith.constant 0 : index
    %307 = vector.load %arg2[%c6, %c0_118, %c0_119] : memref<8x16x144xbf16, #tpu.memory_space<vmem>>, vector<1x16x144xbf16>
    %308 = vector.shape_cast %307 : vector<1x16x144xbf16> to vector<16x144xbf16>
    %309 = vector.extract_strided_slice %306 {offsets = [0, 103], sizes = [16, 256], strides = [1, 1]} : vector<16x896xbf16> to vector<16x256xbf16>
    %310 = vector.extract_strided_slice %306 {offsets = [0, 104], sizes = [16, 256], strides = [1, 1]} : vector<16x896xbf16> to vector<16x256xbf16>
    %311 = vector.extract_strided_slice %306 {offsets = [0, 105], sizes = [16, 256], strides = [1, 1]} : vector<16x896xbf16> to vector<16x256xbf16>
    %312 = vector.extract_strided_slice %306 {offsets = [0, 127], sizes = [16, 256], strides = [1, 1]} : vector<16x896xbf16> to vector<16x256xbf16>
    %313 = vector.extract_strided_slice %306 {offsets = [0, 128], sizes = [16, 256], strides = [1, 1]} : vector<16x896xbf16> to vector<16x256xbf16>
    %314 = vector.extract_strided_slice %306 {offsets = [0, 129], sizes = [16, 256], strides = [1, 1]} : vector<16x896xbf16> to vector<16x256xbf16>
    %315 = vector.extract_strided_slice %306 {offsets = [0, 151], sizes = [16, 256], strides = [1, 1]} : vector<16x896xbf16> to vector<16x256xbf16>
    %316 = vector.extract_strided_slice %306 {offsets = [0, 152], sizes = [16, 256], strides = [1, 1]} : vector<16x896xbf16> to vector<16x256xbf16>
    %317 = vector.extract_strided_slice %306 {offsets = [0, 153], sizes = [16, 256], strides = [1, 1]} : vector<16x896xbf16> to vector<16x256xbf16>
    %318 = tpu.concatenate %309, %310, %311, %312, %313, %314, %315, %316, %317 in 0 : vector<16x256xbf16>, vector<16x256xbf16>, vector<16x256xbf16>, vector<16x256xbf16>, vector<16x256xbf16>, vector<16x256xbf16>, vector<16x256xbf16>, vector<16x256xbf16>, vector<16x256xbf16> -> vector<144x256xbf16>
    %cst_120 = arith.constant dense<0.000000e+00> : vector<16x256xf32>
    %319 = tpu.matmul %308, %318, %cst_120 {dimension_numbers = #tpu.dot_dimension_numbers<[1], [0], [0], [1], [0, 0, 1, 1], [], []>} : vector<16x144xbf16>, vector<144x256xbf16>, vector<16x256xf32> -> vector<16x256xf32>
    %320 = vector.extract_strided_slice %306 {offsets = [0, 359], sizes = [16, 256], strides = [1, 1]} : vector<16x896xbf16> to vector<16x256xbf16>
    %321 = vector.extract_strided_slice %306 {offsets = [0, 360], sizes = [16, 256], strides = [1, 1]} : vector<16x896xbf16> to vector<16x256xbf16>
    %322 = vector.extract_strided_slice %306 {offsets = [0, 361], sizes = [16, 256], strides = [1, 1]} : vector<16x896xbf16> to vector<16x256xbf16>
    %323 = vector.extract_strided_slice %306 {offsets = [0, 383], sizes = [16, 256], strides = [1, 1]} : vector<16x896xbf16> to vector<16x256xbf16>
    %324 = vector.extract_strided_slice %306 {offsets = [0, 384], sizes = [16, 256], strides = [1, 1]} : vector<16x896xbf16> to vector<16x256xbf16>
    %325 = vector.extract_strided_slice %306 {offsets = [0, 385], sizes = [16, 256], strides = [1, 1]} : vector<16x896xbf16> to vector<16x256xbf16>
    %326 = vector.extract_strided_slice %306 {offsets = [0, 407], sizes = [16, 256], strides = [1, 1]} : vector<16x896xbf16> to vector<16x256xbf16>
    %327 = vector.extract_strided_slice %306 {offsets = [0, 408], sizes = [16, 256], strides = [1, 1]} : vector<16x896xbf16> to vector<16x256xbf16>
    %328 = vector.extract_strided_slice %306 {offsets = [0, 409], sizes = [16, 256], strides = [1, 1]} : vector<16x896xbf16> to vector<16x256xbf16>
    %329 = tpu.concatenate %320, %321, %322, %323, %324, %325, %326, %327, %328 in 0 : vector<16x256xbf16>, vector<16x256xbf16>, vector<16x256xbf16>, vector<16x256xbf16>, vector<16x256xbf16>, vector<16x256xbf16>, vector<16x256xbf16>, vector<16x256xbf16>, vector<16x256xbf16> -> vector<144x256xbf16>
    %cst_121 = arith.constant dense<0.000000e+00> : vector<16x256xf32>
    %330 = tpu.matmul %308, %329, %cst_121 {dimension_numbers = #tpu.dot_dimension_numbers<[1], [0], [0], [1], [0, 0, 1, 1], [], []>} : vector<16x144xbf16>, vector<144x256xbf16>, vector<16x256xf32> -> vector<16x256xf32>
    %331 = vector.extract_strided_slice %306 {offsets = [0, 615], sizes = [16, 64], strides = [1, 1]} : vector<16x896xbf16> to vector<16x64xbf16>
    %332 = vector.extract_strided_slice %306 {offsets = [0, 616], sizes = [16, 64], strides = [1, 1]} : vector<16x896xbf16> to vector<16x64xbf16>
    %333 = vector.extract_strided_slice %306 {offsets = [0, 617], sizes = [16, 64], strides = [1, 1]} : vector<16x896xbf16> to vector<16x64xbf16>
    %334 = vector.extract_strided_slice %306 {offsets = [0, 639], sizes = [16, 64], strides = [1, 1]} : vector<16x896xbf16> to vector<16x64xbf16>
    %335 = vector.extract_strided_slice %306 {offsets = [0, 640], sizes = [16, 64], strides = [1, 1]} : vector<16x896xbf16> to vector<16x64xbf16>
    %336 = vector.extract_strided_slice %306 {offsets = [0, 641], sizes = [16, 64], strides = [1, 1]} : vector<16x896xbf16> to vector<16x64xbf16>
    %337 = vector.extract_strided_slice %306 {offsets = [0, 663], sizes = [16, 64], strides = [1, 1]} : vector<16x896xbf16> to vector<16x64xbf16>
    %338 = vector.extract_strided_slice %306 {offsets = [0, 664], sizes = [16, 64], strides = [1, 1]} : vector<16x896xbf16> to vector<16x64xbf16>
    %339 = vector.extract_strided_slice %306 {offsets = [0, 665], sizes = [16, 64], strides = [1, 1]} : vector<16x896xbf16> to vector<16x64xbf16>
    %340 = tpu.concatenate %331, %332, %333, %334, %335, %336, %337, %338, %339 in 0 : vector<16x64xbf16>, vector<16x64xbf16>, vector<16x64xbf16>, vector<16x64xbf16>, vector<16x64xbf16>, vector<16x64xbf16>, vector<16x64xbf16>, vector<16x64xbf16>, vector<16x64xbf16> -> vector<144x64xbf16>
    %cst_122 = arith.constant dense<0.000000e+00> : vector<16x64xf32>
    %341 = tpu.matmul %308, %340, %cst_122 {dimension_numbers = #tpu.dot_dimension_numbers<[1], [0], [0], [1], [0, 0, 1, 1], [], []>} : vector<16x144xbf16>, vector<144x64xbf16>, vector<16x64xf32> -> vector<16x64xf32>
    %342 = tpu.concatenate %319, %330, %341 in 1 : vector<16x256xf32>, vector<16x256xf32>, vector<16x64xf32> -> vector<16x576xf32>
    %c6_123 = arith.constant 6 : index
    %c0_124 = arith.constant 0 : index
    %c0_125 = arith.constant 0 : index
    %343 = vector.load %arg3[%c6_123, %c0_124, %c0_125] : memref<8x16x1xf32, #tpu.memory_space<vmem>>, vector<1x16x1xf32>
    %344 = vector.shape_cast %343 : vector<1x16x1xf32> to vector<16x1xf32>
    %345 = vector.broadcast %344 : vector<16x1xf32> to vector<16x576xf32>
    %346 = arith.addf %342, %345 : vector<16x576xf32>
    %cst_126 = arith.constant 0.000000e+00 : f32
    %347 = vector.broadcast %cst_126 : f32 to vector<16x576xf32>
    %348 = arith.maximumf %346, %347 : vector<16x576xf32>
    %349 = vector.broadcast %14 : vector<1x576xf32> to vector<16x576xf32>
    %350 = arith.mulf %348, %349 : vector<16x576xf32>
    %c0_127 = arith.constant 0 : index
    %c128_128 = arith.constant 128 : index
    %351 = vector.load %arg10[%c0_127, %c128_128] : memref<16x896xf32, #tpu.memory_space<vmem>>, vector<16x576xf32>
    %352 = arith.addf %350, %351 : vector<16x576xf32>
    %c0_129 = arith.constant 0 : index
    %c128_130 = arith.constant 128 : index
    %353 = vector.load %arg15[%c0_129, %c128_130] : memref<16x896xf32, #tpu.memory_space<vmem>>, vector<16x576xf32>
    tpu.vector_store %arg15[%c0_129, %c128_130], %352 {strides = array<i32>} : memref<16x896xf32, #tpu.memory_space<vmem>>, vector<16x576xf32>,
    %c0_131 = arith.constant 0 : index
    %c0_132 = arith.constant 0 : index
    %354 = vector.load %arg15[%c0_131, %c0_132] : memref<16x896xf32, #tpu.memory_space<vmem>>, vector<16x896xf32>
    %355 = arith.truncf %354 : vector<16x896xf32> to vector<16x896xbf16>
    %c7 = arith.constant 7 : index
    %c0_133 = arith.constant 0 : index
    %c0_134 = arith.constant 0 : index
    %356 = vector.load %arg2[%c7, %c0_133, %c0_134] : memref<8x16x144xbf16, #tpu.memory_space<vmem>>, vector<1x16x144xbf16>
    %357 = vector.shape_cast %356 : vector<1x16x144xbf16> to vector<16x144xbf16>
    %358 = vector.extract_strided_slice %355 {offsets = [0, 103], sizes = [16, 256], strides = [1, 1]} : vector<16x896xbf16> to vector<16x256xbf16>
    %359 = vector.extract_strided_slice %355 {offsets = [0, 104], sizes = [16, 256], strides = [1, 1]} : vector<16x896xbf16> to vector<16x256xbf16>
    %360 = vector.extract_strided_slice %355 {offsets = [0, 105], sizes = [16, 256], strides = [1, 1]} : vector<16x896xbf16> to vector<16x256xbf16>
    %361 = vector.extract_strided_slice %355 {offsets = [0, 127], sizes = [16, 256], strides = [1, 1]} : vector<16x896xbf16> to vector<16x256xbf16>
    %362 = vector.extract_strided_slice %355 {offsets = [0, 128], sizes = [16, 256], strides = [1, 1]} : vector<16x896xbf16> to vector<16x256xbf16>
    %363 = vector.extract_strided_slice %355 {offsets = [0, 129], sizes = [16, 256], strides = [1, 1]} : vector<16x896xbf16> to vector<16x256xbf16>
    %364 = vector.extract_strided_slice %355 {offsets = [0, 151], sizes = [16, 256], strides = [1, 1]} : vector<16x896xbf16> to vector<16x256xbf16>
    %365 = vector.extract_strided_slice %355 {offsets = [0, 152], sizes = [16, 256], strides = [1, 1]} : vector<16x896xbf16> to vector<16x256xbf16>
    %366 = vector.extract_strided_slice %355 {offsets = [0, 153], sizes = [16, 256], strides = [1, 1]} : vector<16x896xbf16> to vector<16x256xbf16>
    %367 = tpu.concatenate %358, %359, %360, %361, %362, %363, %364, %365, %366 in 0 : vector<16x256xbf16>, vector<16x256xbf16>, vector<16x256xbf16>, vector<16x256xbf16>, vector<16x256xbf16>, vector<16x256xbf16>, vector<16x256xbf16>, vector<16x256xbf16>, vector<16x256xbf16> -> vector<144x256xbf16>
    %cst_135 = arith.constant dense<0.000000e+00> : vector<16x256xf32>
    %368 = tpu.matmul %357, %367, %cst_135 {dimension_numbers = #tpu.dot_dimension_numbers<[1], [0], [0], [1], [0, 0, 1, 1], [], []>} : vector<16x144xbf16>, vector<144x256xbf16>, vector<16x256xf32> -> vector<16x256xf32>
    %369 = vector.extract_strided_slice %355 {offsets = [0, 359], sizes = [16, 256], strides = [1, 1]} : vector<16x896xbf16> to vector<16x256xbf16>
    %370 = vector.extract_strided_slice %355 {offsets = [0, 360], sizes = [16, 256], strides = [1, 1]} : vector<16x896xbf16> to vector<16x256xbf16>
    %371 = vector.extract_strided_slice %355 {offsets = [0, 361], sizes = [16, 256], strides = [1, 1]} : vector<16x896xbf16> to vector<16x256xbf16>
    %372 = vector.extract_strided_slice %355 {offsets = [0, 383], sizes = [16, 256], strides = [1, 1]} : vector<16x896xbf16> to vector<16x256xbf16>
    %373 = vector.extract_strided_slice %355 {offsets = [0, 384], sizes = [16, 256], strides = [1, 1]} : vector<16x896xbf16> to vector<16x256xbf16>
    %374 = vector.extract_strided_slice %355 {offsets = [0, 385], sizes = [16, 256], strides = [1, 1]} : vector<16x896xbf16> to vector<16x256xbf16>
    %375 = vector.extract_strided_slice %355 {offsets = [0, 407], sizes = [16, 256], strides = [1, 1]} : vector<16x896xbf16> to vector<16x256xbf16>
    %376 = vector.extract_strided_slice %355 {offsets = [0, 408], sizes = [16, 256], strides = [1, 1]} : vector<16x896xbf16> to vector<16x256xbf16>
    %377 = vector.extract_strided_slice %355 {offsets = [0, 409], sizes = [16, 256], strides = [1, 1]} : vector<16x896xbf16> to vector<16x256xbf16>
    %378 = tpu.concatenate %369, %370, %371, %372, %373, %374, %375, %376, %377 in 0 : vector<16x256xbf16>, vector<16x256xbf16>, vector<16x256xbf16>, vector<16x256xbf16>, vector<16x256xbf16>, vector<16x256xbf16>, vector<16x256xbf16>, vector<16x256xbf16>, vector<16x256xbf16> -> vector<144x256xbf16>
    %cst_136 = arith.constant dense<0.000000e+00> : vector<16x256xf32>
    %379 = tpu.matmul %357, %378, %cst_136 {dimension_numbers = #tpu.dot_dimension_numbers<[1], [0], [0], [1], [0, 0, 1, 1], [], []>} : vector<16x144xbf16>, vector<144x256xbf16>, vector<16x256xf32> -> vector<16x256xf32>
    %380 = vector.extract_strided_slice %355 {offsets = [0, 615], sizes = [16, 64], strides = [1, 1]} : vector<16x896xbf16> to vector<16x64xbf16>
    %381 = vector.extract_strided_slice %355 {offsets = [0, 616], sizes = [16, 64], strides = [1, 1]} : vector<16x896xbf16> to vector<16x64xbf16>
    %382 = vector.extract_strided_slice %355 {offsets = [0, 617], sizes = [16, 64], strides = [1, 1]} : vector<16x896xbf16> to vector<16x64xbf16>
    %383 = vector.extract_strided_slice %355 {offsets = [0, 639], sizes = [16, 64], strides = [1, 1]} : vector<16x896xbf16> to vector<16x64xbf16>
    %384 = vector.extract_strided_slice %355 {offsets = [0, 640], sizes = [16, 64], strides = [1, 1]} : vector<16x896xbf16> to vector<16x64xbf16>
    %385 = vector.extract_strided_slice %355 {offsets = [0, 641], sizes = [16, 64], strides = [1, 1]} : vector<16x896xbf16> to vector<16x64xbf16>
    %386 = vector.extract_strided_slice %355 {offsets = [0, 663], sizes = [16, 64], strides = [1, 1]} : vector<16x896xbf16> to vector<16x64xbf16>
    %387 = vector.extract_strided_slice %355 {offsets = [0, 664], sizes = [16, 64], strides = [1, 1]} : vector<16x896xbf16> to vector<16x64xbf16>
    %388 = vector.extract_strided_slice %355 {offsets = [0, 665], sizes = [16, 64], strides = [1, 1]} : vector<16x896xbf16> to vector<16x64xbf16>
    %389 = tpu.concatenate %380, %381, %382, %383, %384, %385, %386, %387, %388 in 0 : vector<16x64xbf16>, vector<16x64xbf16>, vector<16x64xbf16>, vector<16x64xbf16>, vector<16x64xbf16>, vector<16x64xbf16>, vector<16x64xbf16>, vector<16x64xbf16>, vector<16x64xbf16> -> vector<144x64xbf16>
    %cst_137 = arith.constant dense<0.000000e+00> : vector<16x64xf32>
    %390 = tpu.matmul %357, %389, %cst_137 {dimension_numbers = #tpu.dot_dimension_numbers<[1], [0], [0], [1], [0, 0, 1, 1], [], []>} : vector<16x144xbf16>, vector<144x64xbf16>, vector<16x64xf32> -> vector<16x64xf32>
    %391 = tpu.concatenate %368, %379, %390 in 1 : vector<16x256xf32>, vector<16x256xf32>, vector<16x64xf32> -> vector<16x576xf32>
    %c7_138 = arith.constant 7 : index
    %c0_139 = arith.constant 0 : index
    %c0_140 = arith.constant 0 : index
    %392 = vector.load %arg3[%c7_138, %c0_139, %c0_140] : memref<8x16x1xf32, #tpu.memory_space<vmem>>, vector<1x16x1xf32>
    %393 = vector.shape_cast %392 : vector<1x16x1xf32> to vector<16x1xf32>
    %394 = vector.broadcast %393 : vector<16x1xf32> to vector<16x576xf32>
    %395 = arith.addf %391, %394 : vector<16x576xf32>
    %396 = vector.broadcast %14 : vector<1x576xf32> to vector<16x576xf32>
    %397 = arith.mulf %395, %396 : vector<16x576xf32>
    %c0_141 = arith.constant 0 : index
    %c128_142 = arith.constant 128 : index
    %398 = vector.load %arg14[%c0_141, %c128_142] : memref<16x896xf32, #tpu.memory_space<vmem>>, vector<16x576xf32>
    %399 = arith.addf %397, %398 : vector<16x576xf32>
    %cst_143 = arith.constant dense<0.000000e+00> : vector<16xf32>
    %400 = vector.multi_reduction <add>, %399, %cst_143 [1] : vector<16x576xf32> to vector<16xf32>
    %401 = vector.shape_cast %400 : vector<16xf32> to vector<16x1xf32>
    %cst_144 = arith.constant 3.906250e-03 : f32
    %402 = vector.broadcast %cst_144 : f32 to vector<16x1xf32>
    %403 = arith.mulf %401, %402 : vector<16x1xf32>
    %c0_145 = arith.constant 0 : index
    %c0_146 = arith.constant 0 : index
    %404 = vector.load %arg5[%c0_145, %c0_146] : memref<2x16xf32, #tpu.memory_space<vmem>>, vector<2x16xf32>
    %cst_147 = arith.constant dense<0.000000e+00> : vector<2x1xf32>
    %405 = tpu.matmul %404, %403, %cst_147 {dimension_numbers = #tpu.dot_dimension_numbers<[1], [0], [0], [1], [0, 0, 1, 1], [], []>} : vector<2x16xf32>, vector<16x1xf32>, vector<2x1xf32> -> vector<2x1xf32>
    %c0_148 = arith.constant 0 : index
    %c0_149 = arith.constant 0 : index
    %406 = vector.load %arg6[%c0_148, %c0_149] : memref<2x1xf32, #tpu.memory_space<vmem>>, vector<2x1xf32>
    %407 = arith.addf %405, %406 : vector<2x1xf32>
    %cst_150 = arith.constant 0.000000e+00 : f32
    %408 = vector.broadcast %cst_150 : f32 to vector<2x1xf32>
    %409 = arith.maximumf %407, %408 : vector<2x1xf32>
    %c0_151 = arith.constant 0 : index
    %c0_152 = arith.constant 0 : index
    %410 = vector.load %arg7[%c0_151, %c0_152] : memref<16x2xf32, #tpu.memory_space<vmem>>, vector<16x2xf32>
    %cst_153 = arith.constant dense<0.000000e+00> : vector<16x1xf32>
    %411 = tpu.matmul %410, %409, %cst_153 {dimension_numbers = #tpu.dot_dimension_numbers<[1], [0], [0], [1], [0, 0, 1, 1], [], []>} : vector<16x2xf32>, vector<2x1xf32>, vector<16x1xf32> -> vector<16x1xf32>
    %c0_154 = arith.constant 0 : index
    %c0_155 = arith.constant 0 : index
    %412 = vector.load %arg8[%c0_154, %c0_155] : memref<16x1xf32, #tpu.memory_space<vmem>>, vector<16x1xf32>
    %413 = arith.addf %411, %412 : vector<16x1xf32>
    %414 = arith.negf %413 : vector<16x1xf32>
    %415 = math.exp %414 : vector<16x1xf32>
    %cst_156 = arith.constant 1.000000e+00 : f32
    %416 = vector.broadcast %cst_156 : f32 to vector<16x1xf32>
    %417 = arith.addf %416, %415 : vector<16x1xf32>
    %418 = arith.divf %416, %417 : vector<16x1xf32>
    %419 = vector.broadcast %418 : vector<16x1xf32> to vector<16x576xf32>
    %420 = arith.mulf %399, %419 : vector<16x576xf32>
    %421 = arith.addf %16, %420 : vector<16x576xf32>
    %c0_157 = arith.constant 0 : index
    %c0_158 = arith.constant 0 : index
    %c0_159 = arith.constant 0 : index
    %422 = vector.load %arg9[%c0_157, %c0_158, %c0_159] : memref<1x16x576xf32, #tpu.memory_space<vmem>>, vector<1x16x576xf32>
    %423 = vector.shape_cast %422 : vector<1x16x576xf32> to vector<16x576xf32>
    %424 = vector.shape_cast %421 : vector<16x576xf32> to vector<1x16x576xf32>
    tpu.vector_store %arg9[%c0_157, %c0_158, %c0_159], %424 {strides = array<i32>} : memref<1x16x576xf32, #tpu.memory_space<vmem>>, vector<1x16x576xf32>,
    return
  }
  func.func @transform_0(%arg0: i32) -> (i32, i32, i32) {
    %c0_i32 = arith.constant 0 : i32
    %c0_i32_0 = arith.constant 0 : i32
    %c0_i32_1 = arith.constant 0 : i32
    return %arg0, %c0_i32, %c0_i32_0 : i32, i32, i32
  }
  func.func @transform_1(%arg0: i32) -> (i32, i32, i32) {
    %c0_i32 = arith.constant 0 : i32
    %c0_i32_0 = arith.constant 0 : i32
    %c0_i32_1 = arith.constant 0 : i32
    %c0_i32_2 = arith.constant 0 : i32
    return %c0_i32, %c0_i32_0, %c0_i32_1 : i32, i32, i32
  }
  func.func @transform_2(%arg0: i32) -> (i32, i32, i32) {
    %c0_i32 = arith.constant 0 : i32
    %c0_i32_0 = arith.constant 0 : i32
    %c0_i32_1 = arith.constant 0 : i32
    %c0_i32_2 = arith.constant 0 : i32
    return %c0_i32, %c0_i32_0, %c0_i32_1 : i32, i32, i32
  }
  func.func @transform_3(%arg0: i32) -> (i32, i32) {
    %c0_i32 = arith.constant 0 : i32
    %c0_i32_0 = arith.constant 0 : i32
    %c0_i32_1 = arith.constant 0 : i32
    return %c0_i32, %c0_i32_0 : i32, i32
  }
  func.func @transform_4(%arg0: i32) -> (i32, i32) {
    %c0_i32 = arith.constant 0 : i32
    %c0_i32_0 = arith.constant 0 : i32
    %c0_i32_1 = arith.constant 0 : i32
    return %c0_i32, %c0_i32_0 : i32, i32
  }
  func.func @transform_5(%arg0: i32) -> (i32, i32) {
    %c0_i32 = arith.constant 0 : i32
    %c0_i32_0 = arith.constant 0 : i32
    %c0_i32_1 = arith.constant 0 : i32
    return %c0_i32, %c0_i32_0 : i32, i32
  }
  func.func @transform_6(%arg0: i32) -> (i32, i32) {
    %c0_i32 = arith.constant 0 : i32
    %c0_i32_0 = arith.constant 0 : i32
    %c0_i32_1 = arith.constant 0 : i32
    return %c0_i32, %c0_i32_0 : i32, i32
  }
  func.func @transform_7(%arg0: i32) -> (i32, i32) {
    %c0_i32 = arith.constant 0 : i32
    %c0_i32_0 = arith.constant 0 : i32
    %c0_i32_1 = arith.constant 0 : i32
    return %c0_i32, %c0_i32_0 : i32, i32
  }
  func.func @transform_8(%arg0: i32) -> (i32, i32, i32) {
    %c0_i32 = arith.constant 0 : i32
    %c0_i32_0 = arith.constant 0 : i32
    %c0_i32_1 = arith.constant 0 : i32
    return %arg0, %c0_i32, %c0_i32_0 : i32, i32, i32
  }
}

</mosaic_0001>

<llo_original>
// kernel: hdrab_forward.1
$region0: #{hdrab_forward.1}
  #allocation0 [shape = 'u32[]', space=smem, size = 0x4, offset = 0x4, fixed_abs, tag = 'smem constant byte address 0x4 - core index']
  #allocation1 [shape = 'u32[144,128]{1,0:T(1,128)}', space=vmem, size = 0x12000, scoped, tag = 'internal scratch']
  #allocation2 [shape = 'f32[16,896]{1,0:T(8,128)}', space=vmem, size = 0xe000, scoped, tag = 'scratch operand']
  #allocation3 [shape = 'f32[16,896]{1,0:T(8,128)}', space=vmem, size = 0xe000, scoped, tag = 'scratch operand']
  #allocation4 [shape = 'f32[16,896]{1,0:T(8,128)}', space=vmem, size = 0xe000, scoped, tag = 'scratch operand']
  #allocation5 [shape = 'f32[16,896]{1,0:T(8,128)}', space=vmem, size = 0xe000, scoped, tag = 'scratch operand']
  #allocation6 [shape = 'f32[16,896]{1,0:T(8,128)}', space=vmem, size = 0xe000, scoped, tag = 'scratch operand']
  #allocation7 [shape = 'f32[16,896]{1,0:T(8,128)}', space=vmem, size = 0xe000, scoped, tag = 'scratch operand']
  #allocation8 [shape = 'f32[16,896]{1,0:T(8,128)}', space=vmem, size = 0xe000, scoped, tag = 'scratch operand']
  %s0 = inlined_call_operand.vmem [shape: f32[2,16,896], index: 0, kind: input, shape index: {}]
  %s1 = inlined_call_operand.vmem [shape: bf16[8,16,144], index: 1, kind: input, shape index: {}]
  %s2 = inlined_call_operand.vmem [shape: f32[8,16,1], index: 2, kind: input, shape index: {}]
  %s3 = inlined_call_operand.vmem [shape: f32[1,576], index: 3, kind: input, shape index: {}]
  %s4 = inlined_call_operand.vmem [shape: f32[2,16], index: 4, kind: input, shape index: {}]
  %s5 = inlined_call_operand.vmem [shape: f32[2,1], index: 5, kind: input, shape index: {}]
  %s6 = inlined_call_operand.vmem [shape: f32[16,2], index: 6, kind: input, shape index: {}]
  %s7 = inlined_call_operand.vmem [shape: f32[16,1], index: 7, kind: input, shape index: {}]
  %s8 = inlined_call_operand.vmem [shape: f32[2,16,576], index: 8, kind: output, shape index: {}]
  %s9 = sld [smem:[#allocation0]]
  $region65: #{hdrab_forward.1} parent=0
    _
  %s11 = ssub.s32 1, %s9
  %s12 = scalar_select 0, %s11, %s9
  loop: start=0, step=1, limit=4
  $region2: #{hdrab_forward.1} parent=0 // loop_pre_header
    _
  $region3: #{hdrab_forward.1} parent=0 // loop_header
    %s14 = sphi 0, %s18
    %p15 = scmp.ge.s32.totalorder %s14, 4
    %s24 = sphi 0, %s26
    %s27 = sphi 0, %s24
    %s28 = sphi 0, %s27
    %s44 = sphi 0, %s28
    %s48 = sphi 0, %s48
    %s50 = sphi 0, %s48
    %s51 = sphi 0, %s50
    %s65 = sphi 0, %s51
    %s69 = sphi 0, %s69
    %s71 = sphi 0, %s69
    %s72 = sphi 0, %s71
    %s86 = sphi 0, %s72
    %s90 = sphi 0, %s90
    %s92 = sphi 0, %s90
    %s93 = sphi 0, %s92
    %s107 = sphi 0, %s93
    %s111 = sphi 0, %s111
    %s113 = sphi 0, %s111
    %s114 = sphi 0, %s113
    %s128 = sphi 0, %s114
    %s132 = sphi 0, %s132
    %s134 = sphi 0, %s132
    %s135 = sphi 0, %s134
    %s149 = sphi 0, %s135
    %s153 = sphi 0, %s153
    %s155 = sphi 0, %s153
    %s156 = sphi 0, %s155
    %s170 = sphi 0, %s156
    %s174 = sphi 0, %s174
    %s176 = sphi 0, %s174
    %s177 = sphi 0, %s176
    %s191 = sphi 0, %s177
    %s197 = sphi 0, %s199
    %s200 = sphi 0, %s197
    %s201 = sphi 0, %s200
    %s217 = sphi 0, %s201
  $region4: #{hdrab_forward.1} parent=0 // loop_header_branch
    %17 = sbr.rel (%p15) target = $region8
  $region5: #{hdrab_forward.1} parent=0 // loop_body
    %s19 = ssub.s32 %s14, 1
    %s20 = ssub.s32 %s14, 2
    %s21 = sadd.s32 %s14, 1
    %s22 = ssub.s32 %s14, %s21
    %p23 = scmp.eq.s32.totalorder %s22, 0
    %s25 = sadd.s32 %s24, 1
    %s26 = scalar_select %p23, %s24, %s25
    %p29 = pneg %p23
    %p30 = scmp.eq.s32.totalorder %s14, 1
    %p31 = por %p29, %p30
    %p32 = scmp.ne.s32.totalorder %s24, %s27
    %p33 = scmp.eq.s32.totalorder %s14, 0
    %p34 = por %p32, %p33
    %p35 = scmp.ne.s32.totalorder %s24, %s27
    %p36 = scmp.eq.s32.totalorder %s19, 1
    %p37 = por %p35, %p36
    %p38 = scmp.ne.s32.totalorder %s27, %s28
    %p39 = scmp.eq.s32.totalorder %s19, 0
    %p40 = por %p38, %p39
    %p41 = scmp.ne.s32.totalorder %s27, %s28
    %p42 = scmp.eq.s32.totalorder %s20, 1
    %p43 = por %p41, %p42
    %p45 = scmp.ne.s32.totalorder %s28, %s44
    %p46 = scmp.eq.s32.totalorder %s20, 0
    %p47 = por %p45, %p46
    %s49 = sadd.s32 %s48, 1
    %p52 = scmp.eq.s32.totalorder %s14, 1
    %p53 = scmp.ne.s32.totalorder %s48, %s50
    %p54 = scmp.eq.s32.totalorder %s14, 0
    %p55 = por %p53, %p54
    %p56 = scmp.ne.s32.totalorder %s48, %s50
    %p57 = scmp.eq.s32.totalorder %s19, 1
    %p58 = por %p56, %p57
    %p59 = scmp.ne.s32.totalorder %s50, %s51
    %p60 = scmp.eq.s32.totalorder %s19, 0
    %p61 = por %p59, %p60
    %p62 = scmp.ne.s32.totalorder %s50, %s51
    %p63 = scmp.eq.s32.totalorder %s20, 1
    %p64 = por %p62, %p63
    %p66 = scmp.ne.s32.totalorder %s51, %s65
    %p67 = scmp.eq.s32.totalorder %s20, 0
    %p68 = por %p66, %p67
    %s70 = sadd.s32 %s69, 1
    %p73 = scmp.eq.s32.totalorder %s14, 1
    %p74 = scmp.ne.s32.totalorder %s69, %s71
    %p75 = scmp.eq.s32.totalorder %s14, 0
    %p76 = por %p74, %p75
    %p77 = scmp.ne.s32.totalorder %s69, %s71
    %p78 = scmp.eq.s32.totalorder %s19, 1
    %p79 = por %p77, %p78
    %p80 = scmp.ne.s32.totalorder %s71, %s72
    %p81 = scmp.eq.s32.totalorder %s19, 0
    %p82 = por %p80, %p81
    %p83 = scmp.ne.s32.totalorder %s71, %s72
    %p84 = scmp.eq.s32.totalorder %s20, 1
    %p85 = por %p83, %p84
    %p87 = scmp.ne.s32.totalorder %s72, %s86
    %p88 = scmp.eq.s32.totalorder %s20, 0
    %p89 = por %p87, %p88
    %s91 = sadd.s32 %s90, 1
    %p94 = scmp.eq.s32.totalorder %s14, 1
    %p95 = scmp.ne.s32.totalorder %s90, %s92
    %p96 = scmp.eq.s32.totalorder %s14, 0
    %p97 = por %p95, %p96
    %p98 = scmp.ne.s32.totalorder %s90, %s92
    %p99 = scmp.eq.s32.totalorder %s19, 1
    %p100 = por %p98, %p99
    %p101 = scmp.ne.s32.totalorder %s92, %s93
    %p102 = scmp.eq.s32.totalorder %s19, 0
    %p103 = por %p101, %p102
    %p104 = scmp.ne.s32.totalorder %s92, %s93
    %p105 = scmp.eq.s32.totalorder %s20, 1
    %p106 = por %p104, %p105
    %p108 = scmp.ne.s32.totalorder %s93, %s107
    %p109 = scmp.eq.s32.totalorder %s20, 0
    %p110 = por %p108, %p109
    %s112 = sadd.s32 %s111, 1
    %p115 = scmp.eq.s32.totalorder %s14, 1
    %p116 = scmp.ne.s32.totalorder %s111, %s113
    %p117 = scmp.eq.s32.totalorder %s14, 0
    %p118 = por %p116, %p117
    %p119 = scmp.ne.s32.totalorder %s111, %s113
    %p120 = scmp.eq.s32.totalorder %s19, 1
    %p121 = por %p119, %p120
    %p122 = scmp.ne.s32.totalorder %s113, %s114
    %p123 = scmp.eq.s32.totalorder %s19, 0
    %p124 = por %p122, %p123
    %p125 = scmp.ne.s32.totalorder %s113, %s114
    %p126 = scmp.eq.s32.totalorder %s20, 1
    %p127 = por %p125, %p126
    %p129 = scmp.ne.s32.totalorder %s114, %s128
    %p130 = scmp.eq.s32.totalorder %s20, 0
    %p131 = por %p129, %p130
    %s133 = sadd.s32 %s132, 1
    %p136 = scmp.eq.s32.totalorder %s14, 1
    %p137 = scmp.ne.s32.totalorder %s132, %s134
    %p138 = scmp.eq.s32.totalorder %s14, 0
    %p139 = por %p137, %p138
    %p140 = scmp.ne.s32.totalorder %s132, %s134
    %p141 = scmp.eq.s32.totalorder %s19, 1
    %p142 = por %p140, %p141
    %p143 = scmp.ne.s32.totalorder %s134, %s135
    %p144 = scmp.eq.s32.totalorder %s19, 0
    %p145 = por %p143, %p144
    %p146 = scmp.ne.s32.totalorder %s134, %s135
    %p147 = scmp.eq.s32.totalorder %s20, 1
    %p148 = por %p146, %p147
    %p150 = scmp.ne.s32.totalorder %s135, %s149
    %p151 = scmp.eq.s32.totalorder %s20, 0
    %p152 = por %p150, %p151
    %s154 = sadd.s32 %s153, 1
    %p157 = scmp.eq.s32.totalorder %s14, 1
    %p158 = scmp.ne.s32.totalorder %s153, %s155
    %p159 = scmp.eq.s32.totalorder %s14, 0
    %p160 = por %p158, %p159
    %p161 = scmp.ne.s32.totalorder %s153, %s155
    %p162 = scmp.eq.s32.totalorder %s19, 1
    %p163 = por %p161, %p162
    %p164 = scmp.ne.s32.totalorder %s155, %s156
    %p165 = scmp.eq.s32.totalorder %s19, 0
    %p166 = por %p164, %p165
    %p167 = scmp.ne.s32.totalorder %s155, %s156
    %p168 = scmp.eq.s32.totalorder %s20, 1
    %p169 = por %p167, %p168
    %p171 = scmp.ne.s32.totalorder %s156, %s170
    %p172 = scmp.eq.s32.totalorder %s20, 0
    %p173 = por %p171, %p172
    %s175 = sadd.s32 %s174, 1
    %p178 = scmp.eq.s32.totalorder %s14, 1
    %p179 = scmp.ne.s32.totalorder %s174, %s176
    %p180 = scmp.eq.s32.totalorder %s14, 0
    %p181 = por %p179, %p180
    %p182 = scmp.ne.s32.totalorder %s174, %s176
    %p183 = scmp.eq.s32.totalorder %s19, 1
    %p184 = por %p182, %p183
    %p185 = scmp.ne.s32.totalorder %s176, %s177
    %p186 = scmp.eq.s32.totalorder %s19, 0
    %p187 = por %p185, %p186
    %p188 = scmp.ne.s32.totalorder %s176, %s177
    %p189 = scmp.eq.s32.totalorder %s20, 1
    %p190 = por %p188, %p189
    %p192 = scmp.ne.s32.totalorder %s177, %s191
    %p193 = scmp.eq.s32.totalorder %s20, 0
    %p194 = por %p192, %p193
    %s195 = ssub.s32 %s14, %s21
    %p196 = scmp.eq.s32.totalorder %s195, 0
    %s198 = sadd.s32 %s197, 1
    %s199 = scalar_select %p196, %s197, %s198
    %p202 = pneg %p196
    %p203 = scmp.eq.s32.totalorder %s14, 1
    %p204 = por %p202, %p203
    %p205 = scmp.ne.s32.totalorder %s197, %s200
    %p206 = scmp.eq.s32.totalorder %s14, 0
    %p207 = por %p205, %p206
    %p208 = scmp.ne.s32.totalorder %s197, %s200
    %p209 = scmp.eq.s32.totalorder %s19, 1
    %p210 = por %p208, %p209
    %p211 = scmp.ne.s32.totalorder %s200, %s201
    %p212 = scmp.eq.s32.totalorder %s19, 0
    %p213 = por %p211, %p212
    %p214 = scmp.ne.s32.totalorder %s200, %s201
    %p215 = scmp.eq.s32.totalorder %s20, 1
    %p216 = por %p214, %p215
    %p218 = scmp.ne.s32.totalorder %s201, %s217
    %p219 = scmp.eq.s32.totalorder %s20, 0
    %p220 = por %p218, %p219
    %p221 = scmp.le.s32.totalorder 1, %s14
    %p222 = scmp.lt.s32.totalorder %s14, 3
    %p223 = pnand %p221, %p222
    %p224 = pneg %p223
    // Predicated region
    $region9: #{hdrab_forward.1} parent=5 // pred_check
      _
    $region10: #{hdrab_forward.1} parent=5 // pred_check_branch
      %226 = sbr.rel (%p223) target = $region12
    $region11: #{hdrab_forward.1} parent=5 // pred_region
      %s227 = ssub.s32 %s14, 1
      // Predicated region
      $region13: #{hdrab_forward.1} parent=11 // pred_check
        %p228 = pneg %p61
      $region14: #{hdrab_forward.1} parent=11 // pred_check_branch
        %230 = sbr.rel (%p228) target = $region16
      $region15: #{hdrab_forward.1} parent=11 // pred_region
        _
      $region16: #{hdrab_forward.1} parent=11 // pred_fallthru
        _
      // Predicated region
      $region17: #{hdrab_forward.1} parent=11 // pred_check
        %p231 = pneg %p82
      $region18: #{hdrab_forward.1} parent=11 // pred_check_branch
        %233 = sbr.rel (%p231) target = $region20
      $region19: #{hdrab_forward.1} parent=11 // pred_region
        _
      $region20: #{hdrab_forward.1} parent=11 // pred_fallthru
        _
      // Predicated region
      $region21: #{hdrab_forward.1} parent=11 // pred_check
        %p234 = pneg %p103
      $region22: #{hdrab_forward.1} parent=11 // pred_check_branch
        %236 = sbr.rel (%p234) target = $region24
      $region23: #{hdrab_forward.1} parent=11 // pred_region
        _
      $region24: #{hdrab_forward.1} parent=11 // pred_fallthru
        _
      // Predicated region
      $region25: #{hdrab_forward.1} parent=11 // pred_check
        %p237 = pneg %p124
      $region26: #{hdrab_forward.1} parent=11 // pred_check_branch
        %239 = sbr.rel (%p237) target = $region28
      $region27: #{hdrab_forward.1} parent=11 // pred_region
        _
      $region28: #{hdrab_forward.1} parent=11 // pred_fallthru
        _
      // Predicated region
      $region29: #{hdrab_forward.1} parent=11 // pred_check
        %p240 = pneg %p145
      $region30: #{hdrab_forward.1} parent=11 // pred_check_branch
        %242 = sbr.rel (%p240) target = $region32
      $region31: #{hdrab_forward.1} parent=11 // pred_region
        _
      $region32: #{hdrab_forward.1} parent=11 // pred_fallthru
        _
      // Predicated region
      $region33: #{hdrab_forward.1} parent=11 // pred_check
        %p243 = pneg %p166
      $region34: #{hdrab_forward.1} parent=11 // pred_check_branch
        %245 = sbr.rel (%p243) target = $region36
      $region35: #{hdrab_forward.1} parent=11 // pred_region
        _
      $region36: #{hdrab_forward.1} parent=11 // pred_fallthru
        _
      // Predicated region
      $region37: #{hdrab_forward.1} parent=11 // pred_check
        %p246 = pneg %p187
      $region38: #{hdrab_forward.1} parent=11 // pred_check_branch
        %248 = sbr.rel (%p246) target = $region40
      $region39: #{hdrab_forward.1} parent=11 // pred_region
        _
      $region40: #{hdrab_forward.1} parent=11 // pred_fallthru
        _
    $region12: #{hdrab_forward.1} parent=5 // pred_fallthru
      _
    %p249 = scmp.lt.s32.totalorder %s14, 2
    // Predicated region
    $region41: #{hdrab_forward.1} parent=5 // pred_check
      %p250 = pneg %p249
    $region42: #{hdrab_forward.1} parent=5 // pred_check_branch
      %252 = sbr.rel (%p250) target = $region44
    $region43: #{hdrab_forward.1} parent=5 // pred_region
      // Predicated region
      $region45: #{hdrab_forward.1} parent=43 // pred_check
        %p253 = pneg %p34
      $region46: #{hdrab_forward.1} parent=43 // pred_check_branch
        %255 = sbr.rel (%p253) target = $region48
      $region47: #{hdrab_forward.1} parent=43 // pred_region
        %p256 = scmp.lt.s32.totalorder %s14, 1
        %s257 = scalar_select %p256, %s14, 1
        %s258 = smul.addr %s257, 14
        %s259 = smul.addr %s258, 8
        %s260 = scalar_lea.vmem %s0, %s259
      $region48: #{hdrab_forward.1} parent=43 // pred_fallthru
        _
    $region44: #{hdrab_forward.1} parent=5 // pred_fallthru
      _
    %p261 = scmp.le.s32.totalorder 1, %s14
    %p262 = scmp.lt.s32.totalorder %s14, 3
    %p263 = pnand %p261, %p262
    %p264 = pneg %p263
    // Predicated region
    $region49: #{hdrab_forward.1} parent=5 // pred_check
      _
    $region50: #{hdrab_forward.1} parent=5 // pred_check_branch
      %266 = sbr.rel (%p263) target = $region52
    $region51: #{hdrab_forward.1} parent=5 // pred_region
      %s267 = ssub.s32 %s14, 1
      %p268 = scmp.lt.s32.totalorder %s19, 1
      %s269 = scalar_select %p268, %s19, 1
      %s270 = smul.addr %s269, 14
      %s271 = smul.addr %s270, 8
      %s272 = scalar_lea.vmem %s0, %s271
      %p273 = pneg %p40
      %p274 = pneg %p37
      %p275 = pneg %p61
      %p276 = pneg %p58
      %p277 = pneg %p82
      %p278 = pneg %p79
      %p279 = pneg %p103
      %p280 = pneg %p100
      %p281 = pneg %p124
      %p282 = pneg %p121
      %p283 = pneg %p145
      %p284 = pneg %p142
      %p285 = pneg %p166
      %p286 = pneg %p163
      %p287 = pneg %p187
      %p288 = pneg %p184
      %p289 = pneg %p213
      %p290 = pneg %p210
      %p291 = scmp.lt.s32.totalorder %s19, 1
      %s292 = scalar_select %p291, %s19, 1
      %s293 = smul.addr %s292, 10
      %s294 = smul.addr %s293, 8
      %s295 = scalar_lea.vmem %s8, %s294
      %p296 = scmp.lt.s32.totalorder %s19, 1
      %s297 = scalar_select %p296, %s19, 1
      %s298 = smul.addr %s297, 14
      %s299 = smul.addr %s298, 8
      %s300 = scalar_lea.vmem %s0, %s299
      %p301 = scmp.lt.s32.totalorder %s19, 1
      %s302 = scalar_select %p301, %s19, 1
      %s303 = smul.addr %s302, 10
      %s304 = smul.addr %s303, 8
      %s305 = scalar_lea.vmem %s8, %s304
      %307 = vst [vmem:[#allocation2] sm:$0xff] 0.0
      %308 = vst [vmem:[#allocation2 + $0x38] sm:$0xff] 0.0
      %vm309 = vcmask 1048064
      %310 = vst.msk [vmem:[#allocation2 + $0x28] sm:$0xff] %vm309, 0.0
      %311 = vst [vmem:[#allocation2 + $0x30] sm:$0xff] 0.0
      %312 = vst.msk [vmem:[#allocation2 + $0x60] sm:$0xff] %vm309, 0.0
      %313 = vst [vmem:[#allocation2 + $0x68] sm:$0xff] 0.0
      %314 = vst [vmem:[#allocation3] sm:$0xff] 0.0
      %315 = vst [vmem:[#allocation3 + $0x38] sm:$0xff] 0.0
      %316 = vst.msk [vmem:[#allocation3 + $0x28] sm:$0xff] %vm309, 0.0
      %317 = vst [vmem:[#allocation3 + $0x30] sm:$0xff] 0.0
      %318 = vst.msk [vmem:[#allocation3 + $0x60] sm:$0xff] %vm309, 0.0
      %319 = vst [vmem:[#allocation3 + $0x68] sm:$0xff] 0.0
      %320 = vst [vmem:[#allocation4] sm:$0xff] 0.0
      %321 = vst [vmem:[#allocation4 + $0x38] sm:$0xff] 0.0
      %322 = vst.msk [vmem:[#allocation4 + $0x28] sm:$0xff] %vm309, 0.0
      %323 = vst [vmem:[#allocation4 + $0x30] sm:$0xff] 0.0
      %324 = vst.msk [vmem:[#allocation4 + $0x60] sm:$0xff] %vm309, 0.0
      %325 = vst [vmem:[#allocation4 + $0x68] sm:$0xff] 0.0
      %326 = vst [vmem:[#allocation5] sm:$0xff] 0.0
      %327 = vst [vmem:[#allocation5 + $0x38] sm:$0xff] 0.0
      %328 = vst.msk [vmem:[#allocation5 + $0x28] sm:$0xff] %vm309, 0.0
      %329 = vst [vmem:[#allocation5 + $0x30] sm:$0xff] 0.0
      %330 = vst.msk [vmem:[#allocation5 + $0x60] sm:$0xff] %vm309, 0.0
      %331 = vst [vmem:[#allocation5 + $0x68] sm:$0xff] 0.0
      %332 = vst [vmem:[#allocation6] sm:$0xff] 0.0
      %333 = vst [vmem:[#allocation6 + $0x38] sm:$0xff] 0.0
      %334 = vst.msk [vmem:[#allocation6 + $0x28] sm:$0xff] %vm309, 0.0
      %335 = vst [vmem:[#allocation6 + $0x30] sm:$0xff] 0.0
      %336 = vst.msk [vmem:[#allocation6 + $0x60] sm:$0xff] %vm309, 0.0
      %337 = vst [vmem:[#allocation6 + $0x68] sm:$0xff] 0.0
      %338 = vst [vmem:[#allocation7] sm:$0xff] 0.0
      %339 = vst [vmem:[#allocation7 + $0x38] sm:$0xff] 0.0
      %340 = vst.msk [vmem:[#allocation7 + $0x28] sm:$0xff] %vm309, 0.0
      %341 = vst [vmem:[#allocation7 + $0x30] sm:$0xff] 0.0
      %342 = vst.msk [vmem:[#allocation7 + $0x60] sm:$0xff] %vm309, 0.0
      %343 = vst [vmem:[#allocation7 + $0x68] sm:$0xff] 0.0
      %v344 = vld [vmem:[%s3] sm:$0x1f]
      %v345 = vld [vmem:[%s300 + $0x8] sm:$0xff]
      %v346 = vld [vmem:[%s300 + $0x10] sm:$0xff]
      %v347 = vld [vmem:[%s300 + $0x18] sm:$0xff]
      %v348 = vld [vmem:[%s300 + $0x20] sm:$0xff]
      %v349 = vld [vmem:[%s300 + $0x28] sm:$0xff]
      %v350 = vld [vmem:[%s300 + $0x40] sm:$0xff]
      %v351 = vld [vmem:[%s300 + $0x48] sm:$0xff]
      %v352 = vld [vmem:[%s300 + $0x50] sm:$0xff]
      %v353 = vld [vmem:[%s300 + $0x58] sm:$0xff]
      %v354 = vld [vmem:[%s300 + $0x60] sm:$0xff]
      %v355 = vld [vmem:[%s300] sm:$0xff]
      %v356 = vld [vmem:[%s300 + $0x8] sm:$0xff]
      %v357 = vld [vmem:[%s300 + $0x10] sm:$0xff]
      %v358 = vld [vmem:[%s300 + $0x18] sm:$0xff]
      %v359 = vld [vmem:[%s300 + $0x20] sm:$0xff]
      %v360 = vld [vmem:[%s300 + $0x28] sm:$0xff]
      %v361 = vld [vmem:[%s300 + $0x38] sm:$0xff]
      %v362 = vld [vmem:[%s300 + $0x40] sm:$0xff]
      %v363 = vld [vmem:[%s300 + $0x48] sm:$0xff]
      %v364 = vld [vmem:[%s300 + $0x50] sm:$0xff]
      %v365 = vld [vmem:[%s300 + $0x58] sm:$0xff]
      %v366 = vld [vmem:[%s300 + $0x60] sm:$0xff]
      %v367 = vpack.c.bf16 %v361, %v355
      %v368 = vpack.c.bf16 %v362, %v356
      %v369 = vpack.c.bf16 %v363, %v357
      %v370 = vpack.c.bf16 %v364, %v358
      %v371 = vpack.c.bf16 %v365, %v359
      %v372 = vpack.c.bf16 %v366, %v360
      %v373 = vld [vmem:[%s1] sm:$0xff]
      %v374 = vld [vmem:[%s1 + $0x8] sm:$0xff]
      %378 = vrot.lane.b32.xlu0 %v367, 127
      %v379 = vpop.permute.xlu0 %378
      %380 = vrot.lane.b32.xlu0 %v368, 127
      %v381 = vpop.permute.xlu0 %380
      %382 = vrot.lane.b32.xlu0 %v369, 127
      %v383 = vpop.permute.xlu0 %382
      %vm384 = vcmask 1039360
      %v385 = vsel %vm384, %v379, %v381
      %v386 = vsel %vm384, %v381, %v383
      %387 = vrot.lane.b32.xlu0 %v367, 126
      %v388 = vpop.permute.xlu0 %387
      %389 = vrot.lane.b32.xlu0 %v368, 126
      %v390 = vpop.permute.xlu0 %389
      %391 = vrot.lane.b32.xlu0 %v369, 126
      %v392 = vpop.permute.xlu0 %391
      %vm393 = vcmask 1031168
      %v394 = vsel %vm393, %v388, %v390
      %v395 = vsel %vm393, %v390, %v392
      %396 = vrot.lane.b32.xlu0 %v367, 104
      %v397 = vpop.permute.xlu0 %396
      %398 = vrot.lane.b32.xlu0 %v368, 104
      %v399 = vpop.permute.xlu0 %398
      %400 = vrot.lane.b32.xlu0 %v369, 104
      %v401 = vpop.permute.xlu0 %400
      %vm402 = vcmask 850944
      %v403 = vsel %vm402, %v397, %v399
      %v404 = vsel %vm402, %v399, %v401
      %405 = vrot.lane.b32.xlu0 %v368, 103
      %v406 = vpop.permute.xlu0 %405
      %407 = vrot.lane.b32.xlu0 %v369, 103
      %v408 = vpop.permute.xlu0 %407
      %vm409 = vcmask 842752
      %v410 = vsel %vm409, %v406, %v408
      %412 = vrot.lane.b32.xlu0 %v368, 102
      %v413 = vpop.permute.xlu0 %412
      %414 = vrot.lane.b32.xlu0 %v369, 102
      %v415 = vpop.permute.xlu0 %414
      %416 = vrot.lane.b32.xlu0 %v370, 102
      %v417 = vpop.permute.xlu0 %416
      %vm418 = vcmask 834560
      %v419 = vsel %vm418, %v413, %v415
      %v420 = vsel %vm418, %v415, %v417
      %421 = vrot.lane.b32.xlu0 %v368, 80
      %v422 = vpop.permute.xlu0 %421
      %423 = vrot.lane.b32.xlu0 %v369, 80
      %v424 = vpop.permute.xlu0 %423
      %425 = vrot.lane.b32.xlu0 %v370, 80
      %v426 = vpop.permute.xlu0 %425
      %vm427 = vcmask 654336
      %v428 = vsel %vm427, %v422, %v424
      %v429 = vsel %vm427, %v424, %v426
      %430 = vrot.lane.b32.xlu0 %v368, 79
      %v431 = vpop.permute.xlu0 %430
      %432 = vrot.lane.b32.xlu0 %v369, 79
      %v433 = vpop.permute.xlu0 %432
      %434 = vrot.lane.b32.xlu0 %v370, 79
      %v435 = vpop.permute.xlu0 %434
      %vm436 = vcmask 646144
      %v437 = vsel %vm436, %v431, %v433
      %v438 = vsel %vm436, %v433, %v435
      %439 = vrot.lane.b32.xlu0 %v368, 78
      %v440 = vpop.permute.xlu0 %439
      %441 = vrot.lane.b32.xlu0 %v369, 78
      %v442 = vpop.permute.xlu0 %441
      %443 = vrot.lane.b32.xlu0 %v370, 78
      %v444 = vpop.permute.xlu0 %443
      %vm445 = vcmask 637952
      %v446 = vsel %vm445, %v440, %v442
      %v447 = vsel %vm445, %v442, %v444
      %v450 = vunpack.c.l.b16 %v373
      %v451 = vunpack.c.h.b16 %v373
      %v452 = vunpack.c.l.b16 %v374
      %v453 = vunpack.c.h.b16 %v374
      %v454 = vpack.c.b16 %v452, %v450
      %v455 = vpack.c.b16 %v453, %v451
      %457 = vrot.lane.b32.xlu0 %v367, 25
      %v458 = vpop.permute.xlu0 %457
      %459 = vrot.lane.b32.xlu0 %v368, 25
      %v460 = vpop.permute.xlu0 %459
      %461 = vrot.lane.b32.xlu0 %v369, 25
      %v462 = vpop.permute.xlu0 %461
      %463 = vrot.lane.b32.xlu0 %v385, 25
      %v464 = vpop.permute.xlu0 %463
      %465 = vrot.lane.b32.xlu0 %v386, 25
      %v466 = vpop.permute.xlu0 %465
      %467 = vrot.lane.b32.xlu0 %v383, 25
      %v468 = vpop.permute.xlu0 %467
      %469 = vrot.lane.b32.xlu0 %v394, 25
      %v470 = vpop.permute.xlu0 %469
      %471 = vrot.lane.b32.xlu0 %v395, 25
      %v472 = vpop.permute.xlu0 %471
      %473 = vrot.lane.b32.xlu0 %v392, 25
      %v474 = vpop.permute.xlu0 %473
      %475 = vrot.lane.b32.xlu0 %v403, 25
      %v476 = vpop.permute.xlu0 %475
      %477 = vrot.lane.b32.xlu0 %v404, 25
      %v478 = vpop.permute.xlu0 %477
      %479 = vrot.lane.b32.xlu0 %v401, 25
      %v480 = vpop.permute.xlu0 %479
      %481 = vrot.lane.b32.xlu0 %v406, 25
      %v482 = vpop.permute.xlu0 %481
      %483 = vrot.lane.b32.xlu0 %v410, 25
      %v484 = vpop.permute.xlu0 %483
      %485 = vrot.lane.b32.xlu0 %v408, 25
      %v486 = vpop.permute.xlu0 %485
      %487 = vrot.lane.b32.xlu0 %v413, 25
      %v488 = vpop.permute.xlu0 %487
      %489 = vrot.lane.b32.xlu0 %v419, 25
      %v490 = vpop.permute.xlu0 %489
      %491 = vrot.lane.b32.xlu0 %v420, 25
      %v492 = vpop.permute.xlu0 %491
      %493 = vrot.lane.b32.xlu0 %v422, 25
      %v494 = vpop.permute.xlu0 %493
      %495 = vrot.lane.b32.xlu0 %v428, 25
      %v496 = vpop.permute.xlu0 %495
      %497 = vrot.lane.b32.xlu0 %v429, 25
      %v498 = vpop.permute.xlu0 %497
      %499 = vrot.lane.b32.xlu0 %v431, 25
      %v500 = vpop.permute.xlu0 %499
      %501 = vrot.lane.b32.xlu0 %v437, 25
      %v502 = vpop.permute.xlu0 %501
      %503 = vrot.lane.b32.xlu0 %v438, 25
      %v504 = vpop.permute.xlu0 %503
      %505 = vrot.lane.b32.xlu0 %v440, 25
      %v506 = vpop.permute.xlu0 %505
      %507 = vrot.lane.b32.xlu0 %v446, 25
      %v508 = vpop.permute.xlu0 %507
      %509 = vrot.lane.b32.xlu0 %v447, 25
      %v510 = vpop.permute.xlu0 %509
      %vm511 = vcmask 203776
      %v512 = vsel %vm511, %v458, %v460
      %v513 = vsel %vm511, %v460, %v462
      %v514 = vsel %vm511, %v464, %v466
      %v515 = vsel %vm511, %v466, %v468
      %v516 = vsel %vm511, %v470, %v472
      %v517 = vsel %vm511, %v472, %v474
      %v518 = vsel %vm511, %v476, %v478
      %v519 = vsel %vm511, %v478, %v480
      %v520 = vsel %vm511, %v482, %v484
      %v521 = vsel %vm511, %v484, %v486
      %v522 = vsel %vm511, %v488, %v490
      %v523 = vsel %vm511, %v490, %v492
      %v524 = vsel %vm511, %v494, %v496
      %v525 = vsel %vm511, %v496, %v498
      %v526 = vsel %vm511, %v500, %v502
      %v527 = vsel %vm511, %v502, %v504
      %v528 = vsel %vm511, %v506, %v508
      %v529 = vsel %vm511, %v508, %v510
      %vm548 = vcmask 130048
      %v550 = vsel %vm548, %v455, 0
      %552 = vmatprep.subr.bf16.mxu0 %v527
      %553 = vmatpush1.bf16.msra.mxu0 %v526
      %554 = vmatprep.subr.bf16.mxu0 %v525
      %555 = vmatpush1.bf16.msra.mxu0 %v524
      %556 = vmatprep.subr.bf16.mxu0 %v523
      %557 = vmatpush1.bf16.msra.mxu0 %v522
      %558 = vmatprep.subr.bf16.mxu0 %v521
      %559 = vmatpush1.bf16.msra.mxu0 %v520
      %560 = vmatprep.subr.bf16.mxu0 %v519
      %561 = vmatpush1.bf16.msra.mxu0 %v518
      %562 = vmatprep.subr.bf16.mxu0 %v517
      %563 = vmatpush1.bf16.msra.mxu0 %v516
      %564 = vmatprep.subr.bf16.mxu0 %v515
      %565 = vmatpush1.bf16.msra.mxu0 %v514
      %566 = vmatprep.subr.bf16.mxu0 %v513
      %567 = vmatpush1.bf16.msra.mxu0 %v512
      %568 = vmatprep.subr.bf16.mxu0 0
      %569 = vmatpush2.bf16.msra.mxu0 0
      %570 = vmatprep.subr.bf16.mxu0 0
      %571 = vmatpush2.bf16.msra.mxu0 0
      %572 = vmatprep.subr.bf16.mxu0 0
      %573 = vmatpush2.bf16.msra.mxu0 0
      %574 = vmatprep.subr.bf16.mxu0 0
      %575 = vmatpush2.bf16.msra.mxu0 0
      %576 = vmatprep.subr.bf16.mxu0 0
      %577 = vmatpush2.bf16.msra.mxu0 0
      %578 = vmatprep.subr.bf16.mxu0 0
      %579 = vmatpush2.bf16.msra.mxu0 0
      %580 = vmatprep.subr.bf16.mxu0 0
      %581 = vmatpush2.bf16.msra.mxu0 0
      %582 = vmatprep.subr.bf16.mxu0 %v529
      %583 = vmatpush2.bf16.msra.mxu0 %v528
      %584 = vmatprep.mubr.bf16.mxu0 %v550
      %585 = vmatmul.mubr.bf16.gmra.mxu0 %v454
      %v586 = vpop.f32.mrf.mxu0
      %v587 = vadd.f32 0.0, %v586
      %v588 = vpop.f32.mrf.mxu0
      %v589 = vadd.f32 0.0, %v588
      %v590 = vpop.f32.mrf.mxu0
      %v591 = vadd.f32 0.0, %v590
      %v592 = vpop.f32.mrf.mxu0
      %v593 = vadd.f32 0.0, %v592
      %594 = vdwg.mxu0
      %596 = vrot.lane.b32.xlu0 %v370, 127
      %v597 = vpop.permute.xlu0 %596
      %598 = vrot.lane.b32.xlu0 %v371, 127
      %v599 = vpop.permute.xlu0 %598
      %v600 = vsel %vm384, %v383, %v597
      %v601 = vsel %vm384, %v597, %v599
      %602 = vrot.lane.b32.xlu0 %v370, 126
      %v603 = vpop.permute.xlu0 %602
      %604 = vrot.lane.b32.xlu0 %v371, 126
      %v605 = vpop.permute.xlu0 %604
      %v606 = vsel %vm393, %v392, %v603
      %v607 = vsel %vm393, %v603, %v605
      %608 = vrot.lane.b32.xlu0 %v370, 104
      %v609 = vpop.permute.xlu0 %608
      %610 = vrot.lane.b32.xlu0 %v371, 104
      %v611 = vpop.permute.xlu0 %610
      %v612 = vsel %vm402, %v401, %v609
      %v613 = vsel %vm402, %v609, %v611
      %614 = vrot.lane.b32.xlu0 %v370, 103
      %v615 = vpop.permute.xlu0 %614
      %616 = vrot.lane.b32.xlu0 %v371, 103
      %v617 = vpop.permute.xlu0 %616
      %v618 = vsel %vm409, %v615, %v617
      %620 = vrot.lane.b32.xlu0 %v371, 102
      %v621 = vpop.permute.xlu0 %620
      %622 = vrot.lane.b32.xlu0 %v372, 102
      %v623 = vpop.permute.xlu0 %622
      %v624 = vsel %vm418, %v417, %v621
      %v625 = vsel %vm418, %v621, %v623
      %626 = vrot.lane.b32.xlu0 %v371, 80
      %v627 = vpop.permute.xlu0 %626
      %628 = vrot.lane.b32.xlu0 %v372, 80
      %v629 = vpop.permute.xlu0 %628
      %v630 = vsel %vm427, %v426, %v627
      %v631 = vsel %vm427, %v627, %v629
      %632 = vrot.lane.b32.xlu0 %v371, 79
      %v633 = vpop.permute.xlu0 %632
      %634 = vrot.lane.b32.xlu0 %v372, 79
      %v635 = vpop.permute.xlu0 %634
      %v636 = vsel %vm436, %v435, %v633
      %v637 = vsel %vm436, %v633, %v635
      %638 = vrot.lane.b32.xlu0 %v371, 78
      %v639 = vpop.permute.xlu0 %638
      %640 = vrot.lane.b32.xlu0 %v372, 78
      %v641 = vpop.permute.xlu0 %640
      %v642 = vsel %vm445, %v444, %v639
      %v643 = vsel %vm445, %v639, %v641
      %644 = vrot.lane.b32.xlu0 %v370, 25
      %v645 = vpop.permute.xlu0 %644
      %646 = vrot.lane.b32.xlu0 %v371, 25
      %v647 = vpop.permute.xlu0 %646
      %648 = vrot.lane.b32.xlu0 %v600, 25
      %v649 = vpop.permute.xlu0 %648
      %650 = vrot.lane.b32.xlu0 %v601, 25
      %v651 = vpop.permute.xlu0 %650
      %652 = vrot.lane.b32.xlu0 %v599, 25
      %v653 = vpop.permute.xlu0 %652
      %654 = vrot.lane.b32.xlu0 %v606, 25
      %v655 = vpop.permute.xlu0 %654
      %656 = vrot.lane.b32.xlu0 %v607, 25
      %v657 = vpop.permute.xlu0 %656
      %658 = vrot.lane.b32.xlu0 %v605, 25
      %v659 = vpop.permute.xlu0 %658
      %660 = vrot.lane.b32.xlu0 %v612, 25
      %v661 = vpop.permute.xlu0 %660
      %662 = vrot.lane.b32.xlu0 %v613, 25
      %v663 = vpop.permute.xlu0 %662
      %664 = vrot.lane.b32.xlu0 %v611, 25
      %v665 = vpop.permute.xlu0 %664
      %666 = vrot.lane.b32.xlu0 %v615, 25
      %v667 = vpop.permute.xlu0 %666
      %668 = vrot.lane.b32.xlu0 %v618, 25
      %v669 = vpop.permute.xlu0 %668
      %670 = vrot.lane.b32.xlu0 %v617, 25
      %v671 = vpop.permute.xlu0 %670
      %672 = vrot.lane.b32.xlu0 %v417, 25
      %v673 = vpop.permute.xlu0 %672
      %674 = vrot.lane.b32.xlu0 %v624, 25
      %v675 = vpop.permute.xlu0 %674
      %676 = vrot.lane.b32.xlu0 %v625, 25
      %v677 = vpop.permute.xlu0 %676
      %678 = vrot.lane.b32.xlu0 %v426, 25
      %v679 = vpop.permute.xlu0 %678
      %680 = vrot.lane.b32.xlu0 %v630, 25
      %v681 = vpop.permute.xlu0 %680
      %682 = vrot.lane.b32.xlu0 %v631, 25
      %v683 = vpop.permute.xlu0 %682
      %684 = vrot.lane.b32.xlu0 %v435, 25
      %v685 = vpop.permute.xlu0 %684
      %686 = vrot.lane.b32.xlu0 %v636, 25
      %v687 = vpop.permute.xlu0 %686
      %688 = vrot.lane.b32.xlu0 %v637, 25
      %v689 = vpop.permute.xlu0 %688
      %690 = vrot.lane.b32.xlu0 %v444, 25
      %v691 = vpop.permute.xlu0 %690
      %692 = vrot.lane.b32.xlu0 %v642, 25
      %v693 = vpop.permute.xlu0 %692
      %694 = vrot.lane.b32.xlu0 %v643, 25
      %v695 = vpop.permute.xlu0 %694
      %v696 = vsel %vm511, %v462, %v645
      %v697 = vsel %vm511, %v645, %v647
      %v698 = vsel %vm511, %v649, %v651
      %v699 = vsel %vm511, %v651, %v653
      %v700 = vsel %vm511, %v655, %v657
      %v701 = vsel %vm511, %v657, %v659
      %v702 = vsel %vm511, %v661, %v663
      %v703 = vsel %vm511, %v663, %v665
      %v704 = vsel %vm511, %v667, %v669
      %v705 = vsel %vm511, %v669, %v671
      %v706 = vsel %vm511, %v673, %v675
      %v707 = vsel %vm511, %v675, %v677
      %v708 = vsel %vm511, %v679, %v681
      %v709 = vsel %vm511, %v681, %v683
      %v710 = vsel %vm511, %v685, %v687
      %v711 = vsel %vm511, %v687, %v689
      %v712 = vsel %vm511, %v691, %v693
      %v713 = vsel %vm511, %v693, %v695
      %732 = vmatprep.subr.bf16.mxu0 %v711
      %733 = vmatpush1.bf16.msra.mxu0 %v710
      %734 = vmatprep.subr.bf16.mxu0 %v709
      %735 = vmatpush1.bf16.msra.mxu0 %v708
      %736 = vmatprep.subr.bf16.mxu0 %v707
      %737 = vmatpush1.bf16.msra.mxu0 %v706
      %738 = vmatprep.subr.bf16.mxu0 %v705
      %739 = vmatpush1.bf16.msra.mxu0 %v704
      %740 = vmatprep.subr.bf16.mxu0 %v703
      %741 = vmatpush1.bf16.msra.mxu0 %v702
      %742 = vmatprep.subr.bf16.mxu0 %v701
      %743 = vmatpush1.bf16.msra.mxu0 %v700
      %744 = vmatprep.subr.bf16.mxu0 %v699
      %745 = vmatpush1.bf16.msra.mxu0 %v698
      %746 = vmatprep.subr.bf16.mxu0 %v697
      %747 = vmatpush1.bf16.msra.mxu0 %v696
      %748 = vmatprep.subr.bf16.mxu0 0
      %749 = vmatpush2.bf16.msra.mxu0 0
      %750 = vmatprep.subr.bf16.mxu0 0
      %751 = vmatpush2.bf16.msra.mxu0 0
      %752 = vmatprep.subr.bf16.mxu0 0
      %753 = vmatpush2.bf16.msra.mxu0 0
      %754 = vmatprep.subr.bf16.mxu0 0
      %755 = vmatpush2.bf16.msra.mxu0 0
      %756 = vmatprep.subr.bf16.mxu0 0
      %757 = vmatpush2.bf16.msra.mxu0 0
      %758 = vmatprep.subr.bf16.mxu0 0
      %759 = vmatpush2.bf16.msra.mxu0 0
      %760 = vmatprep.subr.bf16.mxu0 0
      %761 = vmatpush2.bf16.msra.mxu0 0
      %762 = vmatprep.subr.bf16.mxu0 %v713
      %763 = vmatpush2.bf16.msra.mxu0 %v712
      %764 = vmatprep.mubr.bf16.mxu0 %v550
      %765 = vmatmul.mubr.bf16.gmra.mxu0 %v454
      %v766 = vpop.f32.mrf.mxu0
      %v767 = vadd.f32 0.0, %v766
      %v768 = vpop.f32.mrf.mxu0
      %v769 = vadd.f32 0.0, %v768
      %v770 = vpop.f32.mrf.mxu0
      %v771 = vadd.f32 0.0, %v770
      %v772 = vpop.f32.mrf.mxu0
      %v773 = vadd.f32 0.0, %v772
      %774 = vdwg.mxu0
      %775 = vrot.lane.b32.xlu0 %v372, 127
      %v776 = vpop.permute.xlu0 %775
      %v777 = vsel %vm384, %v599, %v776
      %778 = vrot.lane.b32.xlu0 %v372, 126
      %v779 = vpop.permute.xlu0 %778
      %v780 = vsel %vm393, %v605, %v779
      %781 = vrot.lane.b32.xlu0 %v372, 104
      %v782 = vpop.permute.xlu0 %781
      %v783 = vsel %vm402, %v611, %v782
      %784 = vrot.lane.b32.xlu0 %v372, 103
      %v785 = vpop.permute.xlu0 %784
      %786 = vrot.lane.b32.xlu0 %v372, 25
      %v787 = vpop.permute.xlu0 %786
      %788 = vrot.lane.b32.xlu0 %v777, 25
      %v789 = vpop.permute.xlu0 %788
      %790 = vrot.lane.b32.xlu0 %v776, 25
      %v791 = vpop.permute.xlu0 %790
      %792 = vrot.lane.b32.xlu0 %v780, 25
      %v793 = vpop.permute.xlu0 %792
      %794 = vrot.lane.b32.xlu0 %v779, 25
      %v795 = vpop.permute.xlu0 %794
      %796 = vrot.lane.b32.xlu0 %v783, 25
      %v797 = vpop.permute.xlu0 %796
      %798 = vrot.lane.b32.xlu0 %v782, 25
      %v799 = vpop.permute.xlu0 %798
      %800 = vrot.lane.b32.xlu0 %v785, 25
      %v801 = vpop.permute.xlu0 %800
      %802 = vrot.lane.b32.xlu0 %v623, 25
      %v803 = vpop.permute.xlu0 %802
      %804 = vrot.lane.b32.xlu0 %v629, 25
      %v805 = vpop.permute.xlu0 %804
      %806 = vrot.lane.b32.xlu0 %v635, 25
      %v807 = vpop.permute.xlu0 %806
      %808 = vrot.lane.b32.xlu0 %v641, 25
      %v809 = vpop.permute.xlu0 %808
      %v810 = vsel %vm511, %v647, %v787
      %v811 = vsel %vm511, %v789, %v791
      %v812 = vsel %vm511, %v793, %v795
      %v813 = vsel %vm511, %v797, %v799
      %823 = vmatprep.subr.bf16.mxu0 0
      %824 = vmatpush1.bf16.msra.mxu0 %v807
      %825 = vmatprep.subr.bf16.mxu0 0
      %826 = vmatpush1.bf16.msra.mxu0 %v805
      %827 = vmatprep.subr.bf16.mxu0 0
      %828 = vmatpush1.bf16.msra.mxu0 %v803
      %829 = vmatprep.subr.bf16.mxu0 0
      %830 = vmatpush1.bf16.msra.mxu0 %v801
      %831 = vmatprep.subr.bf16.mxu0 0
      %832 = vmatpush1.bf16.msra.mxu0 %v813
      %833 = vmatprep.subr.bf16.mxu0 0
      %834 = vmatpush1.bf16.msra.mxu0 %v812
      %835 = vmatprep.subr.bf16.mxu0 0
      %836 = vmatpush1.bf16.msra.mxu0 %v811
      %837 = vmatprep.subr.bf16.mxu0 0
      %838 = vmatpush1.bf16.msra.mxu0 %v810
      %839 = vmatprep.subr.bf16.mxu0 0
      %840 = vmatpush2.bf16.msra.mxu0 0
      %841 = vmatprep.subr.bf16.mxu0 0
      %842 = vmatpush2.bf16.msra.mxu0 0
      %843 = vmatprep.subr.bf16.mxu0 0
      %844 = vmatpush2.bf16.msra.mxu0 0
      %845 = vmatprep.subr.bf16.mxu0 0
      %846 = vmatpush2.bf16.msra.mxu0 0
      %847 = vmatprep.subr.bf16.mxu0 0
      %848 = vmatpush2.bf16.msra.mxu0 0
      %849 = vmatprep.subr.bf16.mxu0 0
      %850 = vmatpush2.bf16.msra.mxu0 0
      %851 = vmatprep.subr.bf16.mxu0 0
      %852 = vmatpush2.bf16.msra.mxu0 0
      %853 = vmatprep.subr.bf16.mxu0 0
      %854 = vmatpush2.bf16.msra.mxu0 %v809
      %855 = vmatprep.mubr.bf16.mxu0 %v550
      %856 = vmatmul.mubr.bf16.gmra.mxu0 %v454
      %v857 = vpop.f32.mrf.mxu0
      %v858 = vadd.f32 0.0, %v857
      %v859 = vpop.f32.mrf.mxu0
      %v860 = vpop.f32.mrf.mxu0
      %v861 = vadd.f32 0.0, %v860
      %v862 = vpop.f32.mrf.mxu0
      %863 = vdwg.mxu0
      %v864 = vld [vmem:[%s2] sm:$0xff]
      %v865 = vld [vmem:[%s2 + $0x8] sm:$0xff]
      %867 = vset.pattern.permute.xlu0 0
      %868 = vperm.xlu0 %867, %v864
      %v869 = vpop.permute.xlu0 %868
      %872 = vset.pattern.permute.xlu0 0
      %873 = vperm.xlu0 %872, %v865
      %v874 = vpop.permute.xlu0 %873
      %v876 = vadd.f32 %v587, %v869
      %v877 = vadd.f32 %v589, %v869
      %v878 = vadd.f32 %v767, %v869
      %v879 = vadd.f32 %v769, %v869
      %v880 = vadd.f32 %v858, %v869
      %v881 = vadd.f32 %v591, %v874
      %v882 = vadd.f32 %v593, %v874
      %v883 = vadd.f32 %v771, %v874
      %v884 = vadd.f32 %v773, %v874
      %v885 = vadd.f32 %v861, %v874
      %v886 = vmax.f32 %v876, 0.0
      %v887 = vmax.f32 %v877, 0.0
      %v888 = vmax.f32 %v878, 0.0
      %v889 = vmax.f32 %v879, 0.0
      %v890 = vmax.f32 %v880, 0.0
      %v891 = vmax.f32 %v881, 0.0
      %v892 = vmax.f32 %v882, 0.0
      %v893 = vmax.f32 %v883, 0.0
      %v894 = vmax.f32 %v884, 0.0
      %v895 = vmax.f32 %v885, 0.0
      %v897 = vlaneseq
      %v898 = vshrl.u32 %v897, 7
      %v899 = vsub.s32 0, %v898
      %v900 = vrot.slane %v344, %v899
      %v901 = vlaneseq
      %v902 = vshrl.u32 %v901, 7
      %v903 = vsub.s32 1, %v902
      %v904 = vrot.slane %v344, %v903
      %v905 = vlaneseq
      %v906 = vshrl.u32 %v905, 7
      %v907 = vsub.s32 2, %v906
      %v908 = vrot.slane %v344, %v907
      %v909 = vlaneseq
      %v910 = vshrl.u32 %v909, 7
      %v911 = vsub.s32 3, %v910
      %v912 = vrot.slane %v344, %v911
      %v913 = vlaneseq
      %v914 = vshrl.u32 %v913, 7
      %v915 = vsub.s32 4, %v914
      %v916 = vrot.slane %v344, %v915
      %v922 = vmul.f32 %v886, %v900
      %v923 = vmul.f32 %v887, %v904
      %v924 = vmul.f32 %v888, %v908
      %v925 = vmul.f32 %v889, %v912
      %v926 = vmul.f32 %v890, %v916
      %v927 = vmul.f32 %v891, %v900
      %v928 = vmul.f32 %v892, %v904
      %v929 = vmul.f32 %v893, %v908
      %v930 = vmul.f32 %v894, %v912
      %v931 = vmul.f32 %v895, %v916
      %932 = vst [vmem:[#allocation2 + $0x8] sm:$0xff] %v922
      %933 = vst [vmem:[#allocation2 + $0x10] sm:$0xff] %v923
      %934 = vst [vmem:[#allocation2 + $0x18] sm:$0xff] %v924
      %935 = vst [vmem:[#allocation2 + $0x20] sm:$0xff] %v925
      %vm936 = vcmask 523264
      %937 = vst.msk [vmem:[#allocation2 + $0x28] sm:$0xff] %vm936, %v926
      %938 = vst [vmem:[#allocation2 + $0x40] sm:$0xff] %v927
      %939 = vst [vmem:[#allocation2 + $0x48] sm:$0xff] %v928
      %940 = vst [vmem:[#allocation2 + $0x50] sm:$0xff] %v929
      %941 = vst [vmem:[#allocation2 + $0x58] sm:$0xff] %v930
      %942 = vst.msk [vmem:[#allocation2 + $0x60] sm:$0xff] %vm936, %v931
      %v943 = vld [vmem:[#allocation2] sm:$0xff]
      %v944 = vld [vmem:[#allocation2 + $0x8] sm:$0xff]
      %v945 = vld [vmem:[#allocation2 + $0x10] sm:$0xff]
      %v946 = vld [vmem:[#allocation2 + $0x18] sm:$0xff]
      %v947 = vld [vmem:[#allocation2 + $0x20] sm:$0xff]
      %v948 = vld [vmem:[#allocation2 + $0x28] sm:$0xff]
      %v949 = vld [vmem:[#allocation2 + $0x38] sm:$0xff]
      %v950 = vld [vmem:[#allocation2 + $0x40] sm:$0xff]
      %v951 = vld [vmem:[#allocation2 + $0x48] sm:$0xff]
      %v952 = vld [vmem:[#allocation2 + $0x50] sm:$0xff]
      %v953 = vld [vmem:[#allocation2 + $0x58] sm:$0xff]
      %v954 = vld [vmem:[#allocation2 + $0x60] sm:$0xff]
      %v955 = vpack.c.bf16 %v949, %v943
      %v956 = vpack.c.bf16 %v950, %v944
      %v957 = vpack.c.bf16 %v951, %v945
      %v958 = vpack.c.bf16 %v952, %v946
      %v959 = vpack.c.bf16 %v953, %v947
      %v960 = vpack.c.bf16 %v954, %v948
      %s961 = scalar_lea.vmem %s1, 16
      %v962 = vld [vmem:[%s961] sm:$0xff]
      %v963 = vld [vmem:[%s961 + $0x8] sm:$0xff]
      %967 = vrot.lane.b32.xlu0 %v955, 126
      %v968 = vpop.permute.xlu0 %967
      %969 = vrot.lane.b32.xlu0 %v956, 126
      %v970 = vpop.permute.xlu0 %969
      %971 = vrot.lane.b32.xlu0 %v957, 126
      %v972 = vpop.permute.xlu0 %971
      %v973 = vsel %vm393, %v968, %v970
      %v974 = vsel %vm393, %v970, %v972
      %975 = vrot.lane.b32.xlu0 %v955, 124
      %v976 = vpop.permute.xlu0 %975
      %977 = vrot.lane.b32.xlu0 %v956, 124
      %v978 = vpop.permute.xlu0 %977
      %979 = vrot.lane.b32.xlu0 %v957, 124
      %v980 = vpop.permute.xlu0 %979
      %vm981 = vcmask 1014784
      %v982 = vsel %vm981, %v976, %v978
      %v983 = vsel %vm981, %v978, %v980
      %984 = vrot.lane.b32.xlu0 %v955, 80
      %v985 = vpop.permute.xlu0 %984
      %986 = vrot.lane.b32.xlu0 %v956, 80
      %v987 = vpop.permute.xlu0 %986
      %988 = vrot.lane.b32.xlu0 %v957, 80
      %v989 = vpop.permute.xlu0 %988
      %v990 = vsel %vm427, %v985, %v987
      %v991 = vsel %vm427, %v987, %v989
      %992 = vrot.lane.b32.xlu0 %v956, 78
      %v993 = vpop.permute.xlu0 %992
      %994 = vrot.lane.b32.xlu0 %v957, 78
      %v995 = vpop.permute.xlu0 %994
      %v996 = vsel %vm445, %v993, %v995
      %998 = vrot.lane.b32.xlu0 %v956, 76
      %v999 = vpop.permute.xlu0 %998
      %1000 = vrot.lane.b32.xlu0 %v957, 76
      %v1001 = vpop.permute.xlu0 %1000
      %1002 = vrot.lane.b32.xlu0 %v958, 76
      %v1003 = vpop.permute.xlu0 %1002
      %vm1004 = vcmask 621568
      %v1005 = vsel %vm1004, %v999, %v1001
      %v1006 = vsel %vm1004, %v1001, %v1003
      %1007 = vrot.lane.b32.xlu0 %v956, 32
      %v1008 = vpop.permute.xlu0 %1007
      %1009 = vrot.lane.b32.xlu0 %v957, 32
      %v1010 = vpop.permute.xlu0 %1009
      %1011 = vrot.lane.b32.xlu0 %v958, 32
      %v1012 = vpop.permute.xlu0 %1011
      %vm1013 = vcmask 261120
      %v1014 = vsel %vm1013, %v1008, %v1010
      %v1015 = vsel %vm1013, %v1010, %v1012
      %1016 = vrot.lane.b32.xlu0 %v956, 30
      %v1017 = vpop.permute.xlu0 %1016
      %1018 = vrot.lane.b32.xlu0 %v957, 30
      %v1019 = vpop.permute.xlu0 %1018
      %1020 = vrot.lane.b32.xlu0 %v958, 30
      %v1021 = vpop.permute.xlu0 %1020
      %vm1022 = vcmask 244736
      %v1023 = vsel %vm1022, %v1017, %v1019
      %v1024 = vsel %vm1022, %v1019, %v1021
      %1025 = vrot.lane.b32.xlu0 %v956, 28
      %v1026 = vpop.permute.xlu0 %1025
      %1027 = vrot.lane.b32.xlu0 %v957, 28
      %v1028 = vpop.permute.xlu0 %1027
      %1029 = vrot.lane.b32.xlu0 %v958, 28
      %v1030 = vpop.permute.xlu0 %1029
      %vm1031 = vcmask 228352
      %v1032 = vsel %vm1031, %v1026, %v1028
      %v1033 = vsel %vm1031, %v1028, %v1030
      %v1036 = vunpack.c.l.b16 %v962
      %v1037 = vunpack.c.h.b16 %v962
      %v1038 = vunpack.c.l.b16 %v963
      %v1039 = vunpack.c.h.b16 %v963
      %v1040 = vpack.c.b16 %v1038, %v1036
      %v1041 = vpack.c.b16 %v1039, %v1037
      %1043 = vrot.lane.b32.xlu0 %v955, 50
      %v1044 = vpop.permute.xlu0 %1043
      %1045 = vrot.lane.b32.xlu0 %v956, 50
      %v1046 = vpop.permute.xlu0 %1045
      %1047 = vrot.lane.b32.xlu0 %v957, 50
      %v1048 = vpop.permute.xlu0 %1047
      %1049 = vrot.lane.b32.xlu0 %v973, 50
      %v1050 = vpop.permute.xlu0 %1049
      %1051 = vrot.lane.b32.xlu0 %v974, 50
      %v1052 = vpop.permute.xlu0 %1051
      %1053 = vrot.lane.b32.xlu0 %v972, 50
      %v1054 = vpop.permute.xlu0 %1053
      %1055 = vrot.lane.b32.xlu0 %v982, 50
      %v1056 = vpop.permute.xlu0 %1055
      %1057 = vrot.lane.b32.xlu0 %v983, 50
      %v1058 = vpop.permute.xlu0 %1057
      %1059 = vrot.lane.b32.xlu0 %v980, 50
      %v1060 = vpop.permute.xlu0 %1059
      %1061 = vrot.lane.b32.xlu0 %v990, 50
      %v1062 = vpop.permute.xlu0 %1061
      %1063 = vrot.lane.b32.xlu0 %v991, 50
      %v1064 = vpop.permute.xlu0 %1063
      %1065 = vrot.lane.b32.xlu0 %v989, 50
      %v1066 = vpop.permute.xlu0 %1065
      %1067 = vrot.lane.b32.xlu0 %v993, 50
      %v1068 = vpop.permute.xlu0 %1067
      %1069 = vrot.lane.b32.xlu0 %v996, 50
      %v1070 = vpop.permute.xlu0 %1069
      %1071 = vrot.lane.b32.xlu0 %v995, 50
      %v1072 = vpop.permute.xlu0 %1071
      %1073 = vrot.lane.b32.xlu0 %v999, 50
      %v1074 = vpop.permute.xlu0 %1073
      %1075 = vrot.lane.b32.xlu0 %v1005, 50
      %v1076 = vpop.permute.xlu0 %1075
      %1077 = vrot.lane.b32.xlu0 %v1006, 50
      %v1078 = vpop.permute.xlu0 %1077
      %1079 = vrot.lane.b32.xlu0 %v1008, 50
      %v1080 = vpop.permute.xlu0 %1079
      %1081 = vrot.lane.b32.xlu0 %v1014, 50
      %v1082 = vpop.permute.xlu0 %1081
      %1083 = vrot.lane.b32.xlu0 %v1015, 50
      %v1084 = vpop.permute.xlu0 %1083
      %1085 = vrot.lane.b32.xlu0 %v1017, 50
      %v1086 = vpop.permute.xlu0 %1085
      %1087 = vrot.lane.b32.xlu0 %v1023, 50
      %v1088 = vpop.permute.xlu0 %1087
      %1089 = vrot.lane.b32.xlu0 %v1024, 50
      %v1090 = vpop.permute.xlu0 %1089
      %1091 = vrot.lane.b32.xlu0 %v1026, 50
      %v1092 = vpop.permute.xlu0 %1091
      %1093 = vrot.lane.b32.xlu0 %v1032, 50
      %v1094 = vpop.permute.xlu0 %1093
      %1095 = vrot.lane.b32.xlu0 %v1033, 50
      %v1096 = vpop.permute.xlu0 %1095
      %vm1097 = vcmask 408576
      %v1098 = vsel %vm1097, %v1044, %v1046
      %v1099 = vsel %vm1097, %v1046, %v1048
      %v1100 = vsel %vm1097, %v1050, %v1052
      %v1101 = vsel %vm1097, %v1052, %v1054
      %v1102 = vsel %vm1097, %v1056, %v1058
      %v1103 = vsel %vm1097, %v1058, %v1060
      %v1104 = vsel %vm1097, %v1062, %v1064
      %v1105 = vsel %vm1097, %v1064, %v1066
      %v1106 = vsel %vm1097, %v1068, %v1070
      %v1107 = vsel %vm1097, %v1070, %v1072
      %v1108 = vsel %vm1097, %v1074, %v1076
      %v1109 = vsel %vm1097, %v1076, %v1078
      %v1110 = vsel %vm1097, %v1080, %v1082
      %v1111 = vsel %vm1097, %v1082, %v1084
      %v1112 = vsel %vm1097, %v1086, %v1088
      %v1113 = vsel %vm1097, %v1088, %v1090
      %v1114 = vsel %vm1097, %v1092, %v1094
      %v1115 = vsel %vm1097, %v1094, %v1096
      %v1135 = vsel %vm548, %v1041, 0
      %1137 = vmatprep.subr.bf16.mxu0 %v1113
      %1138 = vmatpush1.bf16.msra.mxu0 %v1112
      %1139 = vmatprep.subr.bf16.mxu0 %v1111
      %1140 = vmatpush1.bf16.msra.mxu0 %v1110
      %1141 = vmatprep.subr.bf16.mxu0 %v1109
      %1142 = vmatpush1.bf16.msra.mxu0 %v1108
      %1143 = vmatprep.subr.bf16.mxu0 %v1107
      %1144 = vmatpush1.bf16.msra.mxu0 %v1106
      %1145 = vmatprep.subr.bf16.mxu0 %v1105
      %1146 = vmatpush1.bf16.msra.mxu0 %v1104
      %1147 = vmatprep.subr.bf16.mxu0 %v1103
      %1148 = vmatpush1.bf16.msra.mxu0 %v1102
      %1149 = vmatprep.subr.bf16.mxu0 %v1101
      %1150 = vmatpush1.bf16.msra.mxu0 %v1100
      %1151 = vmatprep.subr.bf16.mxu0 %v1099
      %1152 = vmatpush1.bf16.msra.mxu0 %v1098
      %1153 = vmatprep.subr.bf16.mxu0 0
      %1154 = vmatpush2.bf16.msra.mxu0 0
      %1155 = vmatprep.subr.bf16.mxu0 0
      %1156 = vmatpush2.bf16.msra.mxu0 0
      %1157 = vmatprep.subr.bf16.mxu0 0
      %1158 = vmatpush2.bf16.msra.mxu0 0
      %1159 = vmatprep.subr.bf16.mxu0 0
      %1160 = vmatpush2.bf16.msra.mxu0 0
      %1161 = vmatprep.subr.bf16.mxu0 0
      %1162 = vmatpush2.bf16.msra.mxu0 0
      %1163 = vmatprep.subr.bf16.mxu0 0
      %1164 = vmatpush2.bf16.msra.mxu0 0
      %1165 = vmatprep.subr.bf16.mxu0 0
      %1166 = vmatpush2.bf16.msra.mxu0 0
      %1167 = vmatprep.subr.bf16.mxu0 %v1115
      %1168 = vmatpush2.bf16.msra.mxu0 %v1114
      %1169 = vmatprep.mubr.bf16.mxu0 %v1135
      %1170 = vmatmul.mubr.bf16.gmra.mxu0 %v1040
      %v1171 = vpop.f32.mrf.mxu0
      %v1172 = vadd.f32 0.0, %v1171
      %v1173 = vpop.f32.mrf.mxu0
      %v1174 = vadd.f32 0.0, %v1173
      %v1175 = vpop.f32.mrf.mxu0
      %v1176 = vadd.f32 0.0, %v1175
      %v1177 = vpop.f32.mrf.mxu0
      %v1178 = vadd.f32 0.0, %v1177
      %1179 = vdwg.mxu0
      %1181 = vrot.lane.b32.xlu0 %v958, 126
      %v1182 = vpop.permute.xlu0 %1181
      %1183 = vrot.lane.b32.xlu0 %v959, 126
      %v1184 = vpop.permute.xlu0 %1183
      %v1185 = vsel %vm393, %v972, %v1182
      %v1186 = vsel %vm393, %v1182, %v1184
      %1187 = vrot.lane.b32.xlu0 %v958, 124
      %v1188 = vpop.permute.xlu0 %1187
      %1189 = vrot.lane.b32.xlu0 %v959, 124
      %v1190 = vpop.permute.xlu0 %1189
      %v1191 = vsel %vm981, %v980, %v1188
      %v1192 = vsel %vm981, %v1188, %v1190
      %1193 = vrot.lane.b32.xlu0 %v958, 80
      %v1194 = vpop.permute.xlu0 %1193
      %1195 = vrot.lane.b32.xlu0 %v959, 80
      %v1196 = vpop.permute.xlu0 %1195
      %v1197 = vsel %vm427, %v989, %v1194
      %v1198 = vsel %vm427, %v1194, %v1196
      %1199 = vrot.lane.b32.xlu0 %v958, 78
      %v1200 = vpop.permute.xlu0 %1199
      %1201 = vrot.lane.b32.xlu0 %v959, 78
      %v1202 = vpop.permute.xlu0 %1201
      %v1203 = vsel %vm445, %v1200, %v1202
      %1205 = vrot.lane.b32.xlu0 %v959, 76
      %v1206 = vpop.permute.xlu0 %1205
      %1207 = vrot.lane.b32.xlu0 %v960, 76
      %v1208 = vpop.permute.xlu0 %1207
      %v1209 = vsel %vm1004, %v1003, %v1206
      %v1210 = vsel %vm1004, %v1206, %v1208
      %1211 = vrot.lane.b32.xlu0 %v959, 32
      %v1212 = vpop.permute.xlu0 %1211
      %1213 = vrot.lane.b32.xlu0 %v960, 32
      %v1214 = vpop.permute.xlu0 %1213
      %v1215 = vsel %vm1013, %v1012, %v1212
      %v1216 = vsel %vm1013, %v1212, %v1214
      %1217 = vrot.lane.b32.xlu0 %v959, 30
      %v1218 = vpop.permute.xlu0 %1217
      %1219 = vrot.lane.b32.xlu0 %v960, 30
      %v1220 = vpop.permute.xlu0 %1219
      %v1221 = vsel %vm1022, %v1021, %v1218
      %v1222 = vsel %vm1022, %v1218, %v1220
      %1223 = vrot.lane.b32.xlu0 %v959, 28
      %v1224 = vpop.permute.xlu0 %1223
      %1225 = vrot.lane.b32.xlu0 %v960, 28
      %v1226 = vpop.permute.xlu0 %1225
      %v1227 = vsel %vm1031, %v1030, %v1224
      %v1228 = vsel %vm1031, %v1224, %v1226
      %1229 = vrot.lane.b32.xlu0 %v958, 50
      %v1230 = vpop.permute.xlu0 %1229
      %1231 = vrot.lane.b32.xlu0 %v959, 50
      %v1232 = vpop.permute.xlu0 %1231
      %1233 = vrot.lane.b32.xlu0 %v1185, 50
      %v1234 = vpop.permute.xlu0 %1233
      %1235 = vrot.lane.b32.xlu0 %v1186, 50
      %v1236 = vpop.permute.xlu0 %1235
      %1237 = vrot.lane.b32.xlu0 %v1184, 50
      %v1238 = vpop.permute.xlu0 %1237
      %1239 = vrot.lane.b32.xlu0 %v1191, 50
      %v1240 = vpop.permute.xlu0 %1239
      %1241 = vrot.lane.b32.xlu0 %v1192, 50
      %v1242 = vpop.permute.xlu0 %1241
      %1243 = vrot.lane.b32.xlu0 %v1190, 50
      %v1244 = vpop.permute.xlu0 %1243
      %1245 = vrot.lane.b32.xlu0 %v1197, 50
      %v1246 = vpop.permute.xlu0 %1245
      %1247 = vrot.lane.b32.xlu0 %v1198, 50
      %v1248 = vpop.permute.xlu0 %1247
      %1249 = vrot.lane.b32.xlu0 %v1196, 50
      %v1250 = vpop.permute.xlu0 %1249
      %1251 = vrot.lane.b32.xlu0 %v1200, 50
      %v1252 = vpop.permute.xlu0 %1251
      %1253 = vrot.lane.b32.xlu0 %v1203, 50
      %v1254 = vpop.permute.xlu0 %1253
      %1255 = vrot.lane.b32.xlu0 %v1202, 50
      %v1256 = vpop.permute.xlu0 %1255
      %1257 = vrot.lane.b32.xlu0 %v1003, 50
      %v1258 = vpop.permute.xlu0 %1257
      %1259 = vrot.lane.b32.xlu0 %v1209, 50
      %v1260 = vpop.permute.xlu0 %1259
      %1261 = vrot.lane.b32.xlu0 %v1210, 50
      %v1262 = vpop.permute.xlu0 %1261
      %1263 = vrot.lane.b32.xlu0 %v1012, 50
      %v1264 = vpop.permute.xlu0 %1263
      %1265 = vrot.lane.b32.xlu0 %v1215, 50
      %v1266 = vpop.permute.xlu0 %1265
      %1267 = vrot.lane.b32.xlu0 %v1216, 50
      %v1268 = vpop.permute.xlu0 %1267
      %1269 = vrot.lane.b32.xlu0 %v1021, 50
      %v1270 = vpop.permute.xlu0 %1269
      %1271 = vrot.lane.b32.xlu0 %v1221, 50
      %v1272 = vpop.permute.xlu0 %1271
      %1273 = vrot.lane.b32.xlu0 %v1222, 50
      %v1274 = vpop.permute.xlu0 %1273
      %1275 = vrot.lane.b32.xlu0 %v1030, 50
      %v1276 = vpop.permute.xlu0 %1275
      %1277 = vrot.lane.b32.xlu0 %v1227, 50
      %v1278 = vpop.permute.xlu0 %1277
      %1279 = vrot.lane.b32.xlu0 %v1228, 50
      %v1280 = vpop.permute.xlu0 %1279
      %v1281 = vsel %vm1097, %v1048, %v1230
      %v1282 = vsel %vm1097, %v1230, %v1232
      %v1283 = vsel %vm1097, %v1234, %v1236
      %v1284 = vsel %vm1097, %v1236, %v1238
      %v1285 = vsel %vm1097, %v1240, %v1242
      %v1286 = vsel %vm1097, %v1242, %v1244
      %v1287 = vsel %vm1097, %v1246, %v1248
      %v1288 = vsel %vm1097, %v1248, %v1250
      %v1289 = vsel %vm1097, %v1252, %v1254
      %v1290 = vsel %vm1097, %v1254, %v1256
      %v1291 = vsel %vm1097, %v1258, %v1260
      %v1292 = vsel %vm1097, %v1260, %v1262
      %v1293 = vsel %vm1097, %v1264, %v1266
      %v1294 = vsel %vm1097, %v1266, %v1268
      %v1295 = vsel %vm1097, %v1270, %v1272
      %v1296 = vsel %vm1097, %v1272, %v1274
      %v1297 = vsel %vm1097, %v1276, %v1278
      %v1298 = vsel %vm1097, %v1278, %v1280
      %1317 = vmatprep.subr.bf16.mxu0 %v1296
      %1318 = vmatpush1.bf16.msra.mxu0 %v1295
      %1319 = vmatprep.subr.bf16.mxu0 %v1294
      %1320 = vmatpush1.bf16.msra.mxu0 %v1293
      %1321 = vmatprep.subr.bf16.mxu0 %v1292
      %1322 = vmatpush1.bf16.msra.mxu0 %v1291
      %1323 = vmatprep.subr.bf16.mxu0 %v1290
      %1324 = vmatpush1.bf16.msra.mxu0 %v1289
      %1325 = vmatprep.subr.bf16.mxu0 %v1288
      %1326 = vmatpush1.bf16.msra.mxu0 %v1287
      %1327 = vmatprep.subr.bf16.mxu0 %v1286
      %1328 = vmatpush1.bf16.msra.mxu0 %v1285
      %1329 = vmatprep.subr.bf16.mxu0 %v1284
      %1330 = vmatpush1.bf16.msra.mxu0 %v1283
      %1331 = vmatprep.subr.bf16.mxu0 %v1282
      %1332 = vmatpush1.bf16.msra.mxu0 %v1281
      %1333 = vmatprep.subr.bf16.mxu0 0
      %1334 = vmatpush2.bf16.msra.mxu0 0
      %1335 = vmatprep.subr.bf16.mxu0 0
      %1336 = vmatpush2.bf16.msra.mxu0 0
      %1337 = vmatprep.subr.bf16.mxu0 0
      %1338 = vmatpush2.bf16.msra.mxu0 0
      %1339 = vmatprep.subr.bf16.mxu0 0
      %1340 = vmatpush2.bf16.msra.mxu0 0
      %1341 = vmatprep.subr.bf16.mxu0 0
      %1342 = vmatpush2.bf16.msra.mxu0 0
      %1343 = vmatprep.subr.bf16.mxu0 0
      %1344 = vmatpush2.bf16.msra.mxu0 0
      %1345 = vmatprep.subr.bf16.mxu0 0
      %1346 = vmatpush2.bf16.msra.mxu0 0
      %1347 = vmatprep.subr.bf16.mxu0 %v1298
      %1348 = vmatpush2.bf16.msra.mxu0 %v1297
      %1349 = vmatprep.mubr.bf16.mxu0 %v1135
      %1350 = vmatmul.mubr.bf16.gmra.mxu0 %v1040
      %v1351 = vpop.f32.mrf.mxu0
      %v1352 = vadd.f32 0.0, %v1351
      %v1353 = vpop.f32.mrf.mxu0
      %v1354 = vadd.f32 0.0, %v1353
      %v1355 = vpop.f32.mrf.mxu0
      %v1356 = vadd.f32 0.0, %v1355
      %v1357 = vpop.f32.mrf.mxu0
      %v1358 = vadd.f32 0.0, %v1357
      %1359 = vdwg.mxu0
      %1360 = vrot.lane.b32.xlu0 %v960, 126
      %v1361 = vpop.permute.xlu0 %1360
      %v1362 = vsel %vm393, %v1184, %v1361
      %1363 = vrot.lane.b32.xlu0 %v960, 124
      %v1364 = vpop.permute.xlu0 %1363
      %v1365 = vsel %vm981, %v1190, %v1364
      %1366 = vrot.lane.b32.xlu0 %v960, 80
      %v1367 = vpop.permute.xlu0 %1366
      %v1368 = vsel %vm427, %v1196, %v1367
      %1369 = vrot.lane.b32.xlu0 %v960, 78
      %v1370 = vpop.permute.xlu0 %1369
      %1371 = vrot.lane.b32.xlu0 %v960, 50
      %v1372 = vpop.permute.xlu0 %1371
      %1373 = vrot.lane.b32.xlu0 %v1362, 50
      %v1374 = vpop.permute.xlu0 %1373
      %1375 = vrot.lane.b32.xlu0 %v1361, 50
      %v1376 = vpop.permute.xlu0 %1375
      %1377 = vrot.lane.b32.xlu0 %v1365, 50
      %v1378 = vpop.permute.xlu0 %1377
      %1379 = vrot.lane.b32.xlu0 %v1364, 50
      %v1380 = vpop.permute.xlu0 %1379
      %1381 = vrot.lane.b32.xlu0 %v1368, 50
      %v1382 = vpop.permute.xlu0 %1381
      %1383 = vrot.lane.b32.xlu0 %v1367, 50
      %v1384 = vpop.permute.xlu0 %1383
      %1385 = vrot.lane.b32.xlu0 %v1370, 50
      %v1386 = vpop.permute.xlu0 %1385
      %1387 = vrot.lane.b32.xlu0 %v1208, 50
      %v1388 = vpop.permute.xlu0 %1387
      %1389 = vrot.lane.b32.xlu0 %v1214, 50
      %v1390 = vpop.permute.xlu0 %1389
      %1391 = vrot.lane.b32.xlu0 %v1220, 50
      %v1392 = vpop.permute.xlu0 %1391
      %1393 = vrot.lane.b32.xlu0 %v1226, 50
      %v1394 = vpop.permute.xlu0 %1393
      %v1395 = vsel %vm1097, %v1232, %v1372
      %v1396 = vsel %vm1097, %v1374, %v1376
      %v1397 = vsel %vm1097, %v1378, %v1380
      %v1398 = vsel %vm1097, %v1382, %v1384
      %1408 = vmatprep.subr.bf16.mxu0 0
      %1409 = vmatpush1.bf16.msra.mxu0 %v1392
      %1410 = vmatprep.subr.bf16.mxu0 0
      %1411 = vmatpush1.bf16.msra.mxu0 %v1390
      %1412 = vmatprep.subr.bf16.mxu0 0
      %1413 = vmatpush1.bf16.msra.mxu0 %v1388
      %1414 = vmatprep.subr.bf16.mxu0 0
      %1415 = vmatpush1.bf16.msra.mxu0 %v1386
      %1416 = vmatprep.subr.bf16.mxu0 0
      %1417 = vmatpush1.bf16.msra.mxu0 %v1398
      %1418 = vmatprep.subr.bf16.mxu0 0
      %1419 = vmatpush1.bf16.msra.mxu0 %v1397
      %1420 = vmatprep.subr.bf16.mxu0 0
      %1421 = vmatpush1.bf16.msra.mxu0 %v1396
      %1422 = vmatprep.subr.bf16.mxu0 0
      %1423 = vmatpush1.bf16.msra.mxu0 %v1395
      %1424 = vmatprep.subr.bf16.mxu0 0
      %1425 = vmatpush2.bf16.msra.mxu0 0
      %1426 = vmatprep.subr.bf16.mxu0 0
      %1427 = vmatpush2.bf16.msra.mxu0 0
      %1428 = vmatprep.subr.bf16.mxu0 0
      %1429 = vmatpush2.bf16.msra.mxu0 0
      %1430 = vmatprep.subr.bf16.mxu0 0
      %1431 = vmatpush2.bf16.msra.mxu0 0
      %1432 = vmatprep.subr.bf16.mxu0 0
      %1433 = vmatpush2.bf16.msra.mxu0 0
      %1434 = vmatprep.subr.bf16.mxu0 0
      %1435 = vmatpush2.bf16.msra.mxu0 0
      %1436 = vmatprep.subr.bf16.mxu0 0
      %1437 = vmatpush2.bf16.msra.mxu0 0
      %1438 = vmatprep.subr.bf16.mxu0 0
      %1439 = vmatpush2.bf16.msra.mxu0 %v1394
      %1440 = vmatprep.mubr.bf16.mxu0 %v1135
      %1441 = vmatmul.mubr.bf16.gmra.mxu0 %v1040
      %v1442 = vpop.f32.mrf.mxu0
      %v1443 = vadd.f32 0.0, %v1442
      %v1444 = vpop.f32.mrf.mxu0
      %v1445 = vpop.f32.mrf.mxu0
      %v1446 = vadd.f32 0.0, %v1445
      %v1447 = vpop.f32.mrf.mxu0
      %1448 = vdwg.mxu0
      %s1449 = scalar_lea.vmem %s2, 16
      %v1450 = vld [vmem:[%s1449] sm:$0xff]
      %v1451 = vld [vmem:[%s1449 + $0x8] sm:$0xff]
      %1453 = vset.pattern.permute.xlu0 0
      %1454 = vperm.xlu0 %1453, %v1450
      %v1455 = vpop.permute.xlu0 %1454
      %1458 = vset.pattern.permute.xlu0 0
      %1459 = vperm.xlu0 %1458, %v1451
      %v1460 = vpop.permute.xlu0 %1459
      %v1462 = vadd.f32 %v1172, %v1455
      %v1463 = vadd.f32 %v1174, %v1455
      %v1464 = vadd.f32 %v1352, %v1455
      %v1465 = vadd.f32 %v1354, %v1455
      %v1466 = vadd.f32 %v1443, %v1455
      %v1467 = vadd.f32 %v1176, %v1460
      %v1468 = vadd.f32 %v1178, %v1460
      %v1469 = vadd.f32 %v1356, %v1460
      %v1470 = vadd.f32 %v1358, %v1460
      %v1471 = vadd.f32 %v1446, %v1460
      %v1472 = vmul.f32 %v1462, %v900
      %v1473 = vmul.f32 %v1463, %v904
      %v1474 = vmul.f32 %v1464, %v908
      %v1475 = vmul.f32 %v1465, %v912
      %v1476 = vmul.f32 %v1466, %v916
      %v1477 = vmul.f32 %v1467, %v900
      %v1478 = vmul.f32 %v1468, %v904
      %v1479 = vmul.f32 %v1469, %v908
      %v1480 = vmul.f32 %v1470, %v912
      %v1481 = vmul.f32 %v1471, %v916
      %v1482 = vadd.f32 %v1472, %v345
      %v1483 = vadd.f32 %v1473, %v346
      %v1484 = vadd.f32 %v1474, %v347
      %v1485 = vadd.f32 %v1475, %v348
      %v1486 = vadd.f32 %v1476, %v349
      %v1487 = vadd.f32 %v1477, %v350
      %v1488 = vadd.f32 %v1478, %v351
      %v1489 = vadd.f32 %v1479, %v352
      %v1490 = vadd.f32 %v1480, %v353
      %v1491 = vadd.f32 %v1481, %v354
      %1492 = vst [vmem:[#allocation3 + $0x8] sm:$0xff] %v1482
      %1493 = vst [vmem:[#allocation3 + $0x10] sm:$0xff] %v1483
      %1494 = vst [vmem:[#allocation3 + $0x18] sm:$0xff] %v1484
      %1495 = vst [vmem:[#allocation3 + $0x20] sm:$0xff] %v1485
      %1496 = vst.msk [vmem:[#allocation3 + $0x28] sm:$0xff] %vm936, %v1486
      %1497 = vst [vmem:[#allocation3 + $0x40] sm:$0xff] %v1487
      %1498 = vst [vmem:[#allocation3 + $0x48] sm:$0xff] %v1488
      %1499 = vst [vmem:[#allocation3 + $0x50] sm:$0xff] %v1489
      %1500 = vst [vmem:[#allocation3 + $0x58] sm:$0xff] %v1490
      %1501 = vst.msk [vmem:[#allocation3 + $0x60] sm:$0xff] %vm936, %v1491
      %v1502 = vld [vmem:[#allocation3] sm:$0xff]
      %v1503 = vld [vmem:[#allocation3 + $0x8] sm:$0xff]
      %v1504 = vld [vmem:[#allocation3 + $0x10] sm:$0xff]
      %v1505 = vld [vmem:[#allocation3 + $0x18] sm:$0xff]
      %v1506 = vld [vmem:[#allocation3 + $0x20] sm:$0xff]
      %v1507 = vld [vmem:[#allocation3 + $0x28] sm:$0xff]
      %v1508 = vld [vmem:[#allocation3 + $0x30] sm:$0xff]
      %v1509 = vld [vmem:[#allocation3 + $0x38] sm:$0xff]
      %v1510 = vld [vmem:[#allocation3 + $0x40] sm:$0xff]
      %v1511 = vld [vmem:[#allocation3 + $0x48] sm:$0xff]
      %v1512 = vld [vmem:[#allocation3 + $0x50] sm:$0xff]
      %v1513 = vld [vmem:[#allocation3 + $0x58] sm:$0xff]
      %v1514 = vld [vmem:[#allocation3 + $0x60] sm:$0xff]
      %v1515 = vld [vmem:[#allocation3 + $0x68] sm:$0xff]
      %v1516 = vpack.c.bf16 %v1509, %v1502
      %v1517 = vpack.c.bf16 %v1510, %v1503
      %v1518 = vpack.c.bf16 %v1511, %v1504
      %v1519 = vpack.c.bf16 %v1512, %v1505
      %v1520 = vpack.c.bf16 %v1513, %v1506
      %v1521 = vpack.c.bf16 %v1514, %v1507
      %v1522 = vpack.c.bf16 %v1515, %v1508
      %s1523 = scalar_lea.vmem %s1, 32
      %v1524 = vld [vmem:[%s1523] sm:$0xff]
      %v1525 = vld [vmem:[%s1523 + $0x8] sm:$0xff]
      %1529 = vrot.lane.b32.xlu0 %v1516, 125
      %v1530 = vpop.permute.xlu0 %1529
      %1531 = vrot.lane.b32.xlu0 %v1517, 125
      %v1532 = vpop.permute.xlu0 %1531
      %1533 = vrot.lane.b32.xlu0 %v1518, 125
      %v1534 = vpop.permute.xlu0 %1533
      %vm1535 = vcmask 1022976
      %v1536 = vsel %vm1535, %v1530, %v1532
      %v1537 = vsel %vm1535, %v1532, %v1534
      %1538 = vrot.lane.b32.xlu0 %v1516, 122
      %v1539 = vpop.permute.xlu0 %1538
      %1540 = vrot.lane.b32.xlu0 %v1517, 122
      %v1541 = vpop.permute.xlu0 %1540
      %1542 = vrot.lane.b32.xlu0 %v1518, 122
      %v1543 = vpop.permute.xlu0 %1542
      %vm1544 = vcmask 998400
      %v1545 = vsel %vm1544, %v1539, %v1541
      %v1546 = vsel %vm1544, %v1541, %v1543
      %1547 = vrot.lane.b32.xlu0 %v1516, 56
      %v1548 = vpop.permute.xlu0 %1547
      %1549 = vrot.lane.b32.xlu0 %v1517, 56
      %v1550 = vpop.permute.xlu0 %1549
      %1551 = vrot.lane.b32.xlu0 %v1518, 56
      %v1552 = vpop.permute.xlu0 %1551
      %vm1553 = vcmask 457728
      %v1554 = vsel %vm1553, %v1548, %v1550
      %v1555 = vsel %vm1553, %v1550, %v1552
      %1556 = vrot.lane.b32.xlu0 %v1517, 53
      %v1557 = vpop.permute.xlu0 %1556
      %1558 = vrot.lane.b32.xlu0 %v1518, 53
      %v1559 = vpop.permute.xlu0 %1558
      %vm1560 = vcmask 433152
      %v1561 = vsel %vm1560, %v1557, %v1559
      %1563 = vrot.lane.b32.xlu0 %v1517, 50
      %v1564 = vpop.permute.xlu0 %1563
      %1565 = vrot.lane.b32.xlu0 %v1518, 50
      %v1566 = vpop.permute.xlu0 %1565
      %1567 = vrot.lane.b32.xlu0 %v1519, 50
      %v1568 = vpop.permute.xlu0 %1567
      %v1569 = vsel %vm1097, %v1564, %v1566
      %v1570 = vsel %vm1097, %v1566, %v1568
      %1571 = vrot.lane.b32.xlu0 %v1517, 112
      %v1572 = vpop.permute.xlu0 %1571
      %1573 = vrot.lane.b32.xlu0 %v1518, 112
      %v1574 = vpop.permute.xlu0 %1573
      %1575 = vrot.lane.b32.xlu0 %v1519, 112
      %v1576 = vpop.permute.xlu0 %1575
      %vm1577 = vcmask 916480
      %v1578 = vsel %vm1577, %v1572, %v1574
      %v1579 = vsel %vm1577, %v1574, %v1576
      %1580 = vrot.lane.b32.xlu0 %v1517, 109
      %v1581 = vpop.permute.xlu0 %1580
      %1582 = vrot.lane.b32.xlu0 %v1518, 109
      %v1583 = vpop.permute.xlu0 %1582
      %1584 = vrot.lane.b32.xlu0 %v1519, 109
      %v1585 = vpop.permute.xlu0 %1584
      %vm1586 = vcmask 891904
      %v1587 = vsel %vm1586, %v1581, %v1583
      %v1588 = vsel %vm1586, %v1583, %v1585
      %1589 = vrot.lane.b32.xlu0 %v1517, 106
      %v1590 = vpop.permute.xlu0 %1589
      %1591 = vrot.lane.b32.xlu0 %v1518, 106
      %v1592 = vpop.permute.xlu0 %1591
      %1593 = vrot.lane.b32.xlu0 %v1519, 106
      %v1594 = vpop.permute.xlu0 %1593
      %vm1595 = vcmask 867328
      %v1596 = vsel %vm1595, %v1590, %v1592
      %v1597 = vsel %vm1595, %v1592, %v1594
      %v1600 = vunpack.c.l.b16 %v1524
      %v1601 = vunpack.c.h.b16 %v1524
      %v1602 = vunpack.c.l.b16 %v1525
      %v1603 = vunpack.c.h.b16 %v1525
      %v1604 = vpack.c.b16 %v1602, %v1600
      %v1605 = vpack.c.b16 %v1603, %v1601
      %1607 = vrot.lane.b32.xlu0 %v1516, 75
      %v1608 = vpop.permute.xlu0 %1607
      %1609 = vrot.lane.b32.xlu0 %v1517, 75
      %v1610 = vpop.permute.xlu0 %1609
      %1611 = vrot.lane.b32.xlu0 %v1518, 75
      %v1612 = vpop.permute.xlu0 %1611
      %1613 = vrot.lane.b32.xlu0 %v1536, 75
      %v1614 = vpop.permute.xlu0 %1613
      %1615 = vrot.lane.b32.xlu0 %v1537, 75
      %v1616 = vpop.permute.xlu0 %1615
      %1617 = vrot.lane.b32.xlu0 %v1534, 75
      %v1618 = vpop.permute.xlu0 %1617
      %1619 = vrot.lane.b32.xlu0 %v1545, 75
      %v1620 = vpop.permute.xlu0 %1619
      %1621 = vrot.lane.b32.xlu0 %v1546, 75
      %v1622 = vpop.permute.xlu0 %1621
      %1623 = vrot.lane.b32.xlu0 %v1543, 75
      %v1624 = vpop.permute.xlu0 %1623
      %1625 = vrot.lane.b32.xlu0 %v1554, 75
      %v1626 = vpop.permute.xlu0 %1625
      %1627 = vrot.lane.b32.xlu0 %v1555, 75
      %v1628 = vpop.permute.xlu0 %1627
      %1629 = vrot.lane.b32.xlu0 %v1552, 75
      %v1630 = vpop.permute.xlu0 %1629
      %1631 = vrot.lane.b32.xlu0 %v1557, 75
      %v1632 = vpop.permute.xlu0 %1631
      %1633 = vrot.lane.b32.xlu0 %v1561, 75
      %v1634 = vpop.permute.xlu0 %1633
      %1635 = vrot.lane.b32.xlu0 %v1559, 75
      %v1636 = vpop.permute.xlu0 %1635
      %1637 = vrot.lane.b32.xlu0 %v1564, 75
      %v1638 = vpop.permute.xlu0 %1637
      %1639 = vrot.lane.b32.xlu0 %v1569, 75
      %v1640 = vpop.permute.xlu0 %1639
      %1641 = vrot.lane.b32.xlu0 %v1570, 75
      %v1642 = vpop.permute.xlu0 %1641
      %1643 = vrot.lane.b32.xlu0 %v1578, 75
      %v1644 = vpop.permute.xlu0 %1643
      %1645 = vrot.lane.b32.xlu0 %v1579, 75
      %v1646 = vpop.permute.xlu0 %1645
      %1647 = vrot.lane.b32.xlu0 %v1576, 75
      %v1648 = vpop.permute.xlu0 %1647
      %1649 = vrot.lane.b32.xlu0 %v1587, 75
      %v1650 = vpop.permute.xlu0 %1649
      %1651 = vrot.lane.b32.xlu0 %v1588, 75
      %v1652 = vpop.permute.xlu0 %1651
      %1653 = vrot.lane.b32.xlu0 %v1585, 75
      %v1654 = vpop.permute.xlu0 %1653
      %1655 = vrot.lane.b32.xlu0 %v1596, 75
      %v1656 = vpop.permute.xlu0 %1655
      %1657 = vrot.lane.b32.xlu0 %v1597, 75
      %v1658 = vpop.permute.xlu0 %1657
      %1659 = vrot.lane.b32.xlu0 %v1594, 75
      %v1660 = vpop.permute.xlu0 %1659
      %vm1661 = vcmask 613376
      %v1662 = vsel %vm1661, %v1608, %v1610
      %v1663 = vsel %vm1661, %v1610, %v1612
      %v1664 = vsel %vm1661, %v1614, %v1616
      %v1665 = vsel %vm1661, %v1616, %v1618
      %v1666 = vsel %vm1661, %v1620, %v1622
      %v1667 = vsel %vm1661, %v1622, %v1624
      %v1668 = vsel %vm1661, %v1626, %v1628
      %v1669 = vsel %vm1661, %v1628, %v1630
      %v1670 = vsel %vm1661, %v1632, %v1634
      %v1671 = vsel %vm1661, %v1634, %v1636
      %v1672 = vsel %vm1661, %v1638, %v1640
      %v1673 = vsel %vm1661, %v1640, %v1642
      %v1674 = vsel %vm1661, %v1644, %v1646
      %v1675 = vsel %vm1661, %v1646, %v1648
      %v1676 = vsel %vm1661, %v1650, %v1652
      %v1677 = vsel %vm1661, %v1652, %v1654
      %v1678 = vsel %vm1661, %v1656, %v1658
      %v1679 = vsel %vm1661, %v1658, %v1660
      %v1699 = vsel %vm548, %v1605, 0
      %1701 = vmatprep.subr.bf16.mxu0 %v1677
      %1702 = vmatpush1.bf16.msra.mxu0 %v1676
      %1703 = vmatprep.subr.bf16.mxu0 %v1675
      %1704 = vmatpush1.bf16.msra.mxu0 %v1674
      %1705 = vmatprep.subr.bf16.mxu0 %v1673
      %1706 = vmatpush1.bf16.msra.mxu0 %v1672
      %1707 = vmatprep.subr.bf16.mxu0 %v1671
      %1708 = vmatpush1.bf16.msra.mxu0 %v1670
      %1709 = vmatprep.subr.bf16.mxu0 %v1669
      %1710 = vmatpush1.bf16.msra.mxu0 %v1668
      %1711 = vmatprep.subr.bf16.mxu0 %v1667
      %1712 = vmatpush1.bf16.msra.mxu0 %v1666
      %1713 = vmatprep.subr.bf16.mxu0 %v1665
      %1714 = vmatpush1.bf16.msra.mxu0 %v1664
      %1715 = vmatprep.subr.bf16.mxu0 %v1663
      %1716 = vmatpush1.bf16.msra.mxu0 %v1662
      %1717 = vmatprep.subr.bf16.mxu0 0
      %1718 = vmatpush2.bf16.msra.mxu0 0
      %1719 = vmatprep.subr.bf16.mxu0 0
      %1720 = vmatpush2.bf16.msra.mxu0 0
      %1721 = vmatprep.subr.bf16.mxu0 0
      %1722 = vmatpush2.bf16.msra.mxu0 0
      %1723 = vmatprep.subr.bf16.mxu0 0
      %1724 = vmatpush2.bf16.msra.mxu0 0
      %1725 = vmatprep.subr.bf16.mxu0 0
      %1726 = vmatpush2.bf16.msra.mxu0 0
      %1727 = vmatprep.subr.bf16.mxu0 0
      %1728 = vmatpush2.bf16.msra.mxu0 0
      %1729 = vmatprep.subr.bf16.mxu0 0
      %1730 = vmatpush2.bf16.msra.mxu0 0
      %1731 = vmatprep.subr.bf16.mxu0 %v1679
      %1732 = vmatpush2.bf16.msra.mxu0 %v1678
      %1733 = vmatprep.mubr.bf16.mxu0 %v1699
      %1734 = vmatmul.mubr.bf16.gmra.mxu0 %v1604
      %v1735 = vpop.f32.mrf.mxu0
      %v1736 = vadd.f32 0.0, %v1735
      %v1737 = vpop.f32.mrf.mxu0
      %v1738 = vadd.f32 0.0, %v1737
      %v1739 = vpop.f32.mrf.mxu0
      %v1740 = vadd.f32 0.0, %v1739
      %v1741 = vpop.f32.mrf.mxu0
      %v1742 = vadd.f32 0.0, %v1741
      %1743 = vdwg.mxu0
      %1745 = vrot.lane.b32.xlu0 %v1519, 125
      %v1746 = vpop.permute.xlu0 %1745
      %1747 = vrot.lane.b32.xlu0 %v1520, 125
      %v1748 = vpop.permute.xlu0 %1747
      %v1749 = vsel %vm1535, %v1534, %v1746
      %v1750 = vsel %vm1535, %v1746, %v1748
      %1751 = vrot.lane.b32.xlu0 %v1519, 122
      %v1752 = vpop.permute.xlu0 %1751
      %1753 = vrot.lane.b32.xlu0 %v1520, 122
      %v1754 = vpop.permute.xlu0 %1753
      %v1755 = vsel %vm1544, %v1543, %v1752
      %v1756 = vsel %vm1544, %v1752, %v1754
      %1757 = vrot.lane.b32.xlu0 %v1519, 56
      %v1758 = vpop.permute.xlu0 %1757
      %1759 = vrot.lane.b32.xlu0 %v1520, 56
      %v1760 = vpop.permute.xlu0 %1759
      %v1761 = vsel %vm1553, %v1552, %v1758
      %v1762 = vsel %vm1553, %v1758, %v1760
      %1763 = vrot.lane.b32.xlu0 %v1519, 53
      %v1764 = vpop.permute.xlu0 %1763
      %1765 = vrot.lane.b32.xlu0 %v1520, 53
      %v1766 = vpop.permute.xlu0 %1765
      %v1767 = vsel %vm1560, %v1764, %v1766
      %1769 = vrot.lane.b32.xlu0 %v1520, 50
      %v1770 = vpop.permute.xlu0 %1769
      %1771 = vrot.lane.b32.xlu0 %v1521, 50
      %v1772 = vpop.permute.xlu0 %1771
      %v1773 = vsel %vm1097, %v1568, %v1770
      %v1774 = vsel %vm1097, %v1770, %v1772
      %1775 = vrot.lane.b32.xlu0 %v1520, 112
      %v1776 = vpop.permute.xlu0 %1775
      %1777 = vrot.lane.b32.xlu0 %v1521, 112
      %v1778 = vpop.permute.xlu0 %1777
      %v1779 = vsel %vm1577, %v1576, %v1776
      %v1780 = vsel %vm1577, %v1776, %v1778
      %1781 = vrot.lane.b32.xlu0 %v1520, 109
      %v1782 = vpop.permute.xlu0 %1781
      %1783 = vrot.lane.b32.xlu0 %v1521, 109
      %v1784 = vpop.permute.xlu0 %1783
      %v1785 = vsel %vm1586, %v1585, %v1782
      %v1786 = vsel %vm1586, %v1782, %v1784
      %1787 = vrot.lane.b32.xlu0 %v1520, 106
      %v1788 = vpop.permute.xlu0 %1787
      %1789 = vrot.lane.b32.xlu0 %v1521, 106
      %v1790 = vpop.permute.xlu0 %1789
      %v1791 = vsel %vm1595, %v1594, %v1788
      %v1792 = vsel %vm1595, %v1788, %v1790
      %1793 = vrot.lane.b32.xlu0 %v1519, 75
      %v1794 = vpop.permute.xlu0 %1793
      %1795 = vrot.lane.b32.xlu0 %v1520, 75
      %v1796 = vpop.permute.xlu0 %1795
      %1797 = vrot.lane.b32.xlu0 %v1749, 75
      %v1798 = vpop.permute.xlu0 %1797
      %1799 = vrot.lane.b32.xlu0 %v1750, 75
      %v1800 = vpop.permute.xlu0 %1799
      %1801 = vrot.lane.b32.xlu0 %v1748, 75
      %v1802 = vpop.permute.xlu0 %1801
      %1803 = vrot.lane.b32.xlu0 %v1755, 75
      %v1804 = vpop.permute.xlu0 %1803
      %1805 = vrot.lane.b32.xlu0 %v1756, 75
      %v1806 = vpop.permute.xlu0 %1805
      %1807 = vrot.lane.b32.xlu0 %v1754, 75
      %v1808 = vpop.permute.xlu0 %1807
      %1809 = vrot.lane.b32.xlu0 %v1761, 75
      %v1810 = vpop.permute.xlu0 %1809
      %1811 = vrot.lane.b32.xlu0 %v1762, 75
      %v1812 = vpop.permute.xlu0 %1811
      %1813 = vrot.lane.b32.xlu0 %v1760, 75
      %v1814 = vpop.permute.xlu0 %1813
      %1815 = vrot.lane.b32.xlu0 %v1764, 75
      %v1816 = vpop.permute.xlu0 %1815
      %1817 = vrot.lane.b32.xlu0 %v1767, 75
      %v1818 = vpop.permute.xlu0 %1817
      %1819 = vrot.lane.b32.xlu0 %v1766, 75
      %v1820 = vpop.permute.xlu0 %1819
      %1821 = vrot.lane.b32.xlu0 %v1568, 75
      %v1822 = vpop.permute.xlu0 %1821
      %1823 = vrot.lane.b32.xlu0 %v1773, 75
      %v1824 = vpop.permute.xlu0 %1823
      %1825 = vrot.lane.b32.xlu0 %v1774, 75
      %v1826 = vpop.permute.xlu0 %1825
      %1827 = vrot.lane.b32.xlu0 %v1779, 75
      %v1828 = vpop.permute.xlu0 %1827
      %1829 = vrot.lane.b32.xlu0 %v1780, 75
      %v1830 = vpop.permute.xlu0 %1829
      %1831 = vrot.lane.b32.xlu0 %v1778, 75
      %v1832 = vpop.permute.xlu0 %1831
      %1833 = vrot.lane.b32.xlu0 %v1785, 75
      %v1834 = vpop.permute.xlu0 %1833
      %1835 = vrot.lane.b32.xlu0 %v1786, 75
      %v1836 = vpop.permute.xlu0 %1835
      %1837 = vrot.lane.b32.xlu0 %v1784, 75
      %v1838 = vpop.permute.xlu0 %1837
      %1839 = vrot.lane.b32.xlu0 %v1791, 75
      %v1840 = vpop.permute.xlu0 %1839
      %1841 = vrot.lane.b32.xlu0 %v1792, 75
      %v1842 = vpop.permute.xlu0 %1841
      %1843 = vrot.lane.b32.xlu0 %v1790, 75
      %v1844 = vpop.permute.xlu0 %1843
      %v1845 = vsel %vm1661, %v1612, %v1794
      %v1846 = vsel %vm1661, %v1794, %v1796
      %v1847 = vsel %vm1661, %v1798, %v1800
      %v1848 = vsel %vm1661, %v1800, %v1802
      %v1849 = vsel %vm1661, %v1804, %v1806
      %v1850 = vsel %vm1661, %v1806, %v1808
      %v1851 = vsel %vm1661, %v1810, %v1812
      %v1852 = vsel %vm1661, %v1812, %v1814
      %v1853 = vsel %vm1661, %v1816, %v1818
      %v1854 = vsel %vm1661, %v1818, %v1820
      %v1855 = vsel %vm1661, %v1822, %v1824
      %v1856 = vsel %vm1661, %v1824, %v1826
      %v1857 = vsel %vm1661, %v1828, %v1830
      %v1858 = vsel %vm1661, %v1830, %v1832
      %v1859 = vsel %vm1661, %v1834, %v1836
      %v1860 = vsel %vm1661, %v1836, %v1838
      %v1861 = vsel %vm1661, %v1840, %v1842
      %v1862 = vsel %vm1661, %v1842, %v1844
      %1881 = vmatprep.subr.bf16.mxu0 %v1860
      %1882 = vmatpush1.bf16.msra.mxu0 %v1859
      %1883 = vmatprep.subr.bf16.mxu0 %v1858
      %1884 = vmatpush1.bf16.msra.mxu0 %v1857
      %1885 = vmatprep.subr.bf16.mxu0 %v1856
      %1886 = vmatpush1.bf16.msra.mxu0 %v1855
      %1887 = vmatprep.subr.bf16.mxu0 %v1854
      %1888 = vmatpush1.bf16.msra.mxu0 %v1853
      %1889 = vmatprep.subr.bf16.mxu0 %v1852
      %1890 = vmatpush1.bf16.msra.mxu0 %v1851
      %1891 = vmatprep.subr.bf16.mxu0 %v1850
      %1892 = vmatpush1.bf16.msra.mxu0 %v1849
      %1893 = vmatprep.subr.bf16.mxu0 %v1848
      %1894 = vmatpush1.bf16.msra.mxu0 %v1847
      %1895 = vmatprep.subr.bf16.mxu0 %v1846
      %1896 = vmatpush1.bf16.msra.mxu0 %v1845
      %1897 = vmatprep.subr.bf16.mxu0 0
      %1898 = vmatpush2.bf16.msra.mxu0 0
      %1899 = vmatprep.subr.bf16.mxu0 0
      %1900 = vmatpush2.bf16.msra.mxu0 0
      %1901 = vmatprep.subr.bf16.mxu0 0
      %1902 = vmatpush2.bf16.msra.mxu0 0
      %1903 = vmatprep.subr.bf16.mxu0 0
      %1904 = vmatpush2.bf16.msra.mxu0 0
      %1905 = vmatprep.subr.bf16.mxu0 0
      %1906 = vmatpush2.bf16.msra.mxu0 0
      %1907 = vmatprep.subr.bf16.mxu0 0
      %1908 = vmatpush2.bf16.msra.mxu0 0
      %1909 = vmatprep.subr.bf16.mxu0 0
      %1910 = vmatpush2.bf16.msra.mxu0 0
      %1911 = vmatprep.subr.bf16.mxu0 %v1862
      %1912 = vmatpush2.bf16.msra.mxu0 %v1861
      %1913 = vmatprep.mubr.bf16.mxu0 %v1699
      %1914 = vmatmul.mubr.bf16.gmra.mxu0 %v1604
      %v1915 = vpop.f32.mrf.mxu0
      %v1916 = vadd.f32 0.0, %v1915
      %v1917 = vpop.f32.mrf.mxu0
      %v1918 = vadd.f32 0.0, %v1917
      %v1919 = vpop.f32.mrf.mxu0
      %v1920 = vadd.f32 0.0, %v1919
      %v1921 = vpop.f32.mrf.mxu0
      %v1922 = vadd.f32 0.0, %v1921
      %1923 = vdwg.mxu0
      %1924 = vrot.lane.b32.xlu0 %v1521, 56
      %v1925 = vpop.permute.xlu0 %1924
      %v1926 = vsel %vm1553, %v1760, %v1925
      %1927 = vrot.lane.b32.xlu0 %v1521, 53
      %v1928 = vpop.permute.xlu0 %1927
      %1930 = vrot.lane.b32.xlu0 %v1522, 112
      %v1931 = vpop.permute.xlu0 %1930
      %v1932 = vsel %vm1577, %v1778, %v1931
      %1933 = vrot.lane.b32.xlu0 %v1522, 109
      %v1934 = vpop.permute.xlu0 %1933
      %v1935 = vsel %vm1586, %v1784, %v1934
      %1936 = vrot.lane.b32.xlu0 %v1522, 106
      %v1937 = vpop.permute.xlu0 %1936
      %v1938 = vsel %vm1595, %v1790, %v1937
      %1939 = vrot.lane.b32.xlu0 %v1926, 75
      %v1940 = vpop.permute.xlu0 %1939
      %1941 = vrot.lane.b32.xlu0 %v1928, 75
      %v1942 = vpop.permute.xlu0 %1941
      %1943 = vrot.lane.b32.xlu0 %v1772, 75
      %v1944 = vpop.permute.xlu0 %1943
      %1945 = vrot.lane.b32.xlu0 %v1932, 75
      %v1946 = vpop.permute.xlu0 %1945
      %1947 = vrot.lane.b32.xlu0 %v1935, 75
      %v1948 = vpop.permute.xlu0 %1947
      %1949 = vrot.lane.b32.xlu0 %v1938, 75
      %v1950 = vpop.permute.xlu0 %1949
      %1960 = vmatprep.subr.bf16.mxu0 0
      %1961 = vmatpush1.bf16.msra.mxu0 %v1948
      %1962 = vmatprep.subr.bf16.mxu0 0
      %1963 = vmatpush1.bf16.msra.mxu0 %v1946
      %1964 = vmatprep.subr.bf16.mxu0 0
      %1965 = vmatpush1.bf16.msra.mxu0 %v1944
      %1966 = vmatprep.subr.bf16.mxu0 0
      %1967 = vmatpush1.bf16.msra.mxu0 %v1942
      %1968 = vmatprep.subr.bf16.mxu0 0
      %1969 = vmatpush1.bf16.msra.mxu0 %v1940
      %1970 = vmatprep.subr.bf16.mxu0 0
      %1971 = vmatpush1.bf16.msra.mxu0 %v1808
      %1972 = vmatprep.subr.bf16.mxu0 0
      %1973 = vmatpush1.bf16.msra.mxu0 %v1802
      %1974 = vmatprep.subr.bf16.mxu0 0
      %1975 = vmatpush1.bf16.msra.mxu0 %v1796
      %1976 = vmatprep.subr.bf16.mxu0 0
      %1977 = vmatpush2.bf16.msra.mxu0 0
      %1978 = vmatprep.subr.bf16.mxu0 0
      %1979 = vmatpush2.bf16.msra.mxu0 0
      %1980 = vmatprep.subr.bf16.mxu0 0
      %1981 = vmatpush2.bf16.msra.mxu0 0
      %1982 = vmatprep.subr.bf16.mxu0 0
      %1983 = vmatpush2.bf16.msra.mxu0 0
      %1984 = vmatprep.subr.bf16.mxu0 0
      %1985 = vmatpush2.bf16.msra.mxu0 0
      %1986 = vmatprep.subr.bf16.mxu0 0
      %1987 = vmatpush2.bf16.msra.mxu0 0
      %1988 = vmatprep.subr.bf16.mxu0 0
      %1989 = vmatpush2.bf16.msra.mxu0 0
      %1990 = vmatprep.subr.bf16.mxu0 0
      %1991 = vmatpush2.bf16.msra.mxu0 %v1950
      %1992 = vmatprep.mubr.bf16.mxu0 %v1699
      %1993 = vmatmul.mubr.bf16.gmra.mxu0 %v1604
      %v1994 = vpop.f32.mrf.mxu0
      %v1995 = vadd.f32 0.0, %v1994
      %v1996 = vpop.f32.mrf.mxu0
      %v1997 = vpop.f32.mrf.mxu0
      %v1998 = vadd.f32 0.0, %v1997
      %v1999 = vpop.f32.mrf.mxu0
      %2000 = vdwg.mxu0
      %s2001 = scalar_lea.vmem %s2, 32
      %v2002 = vld [vmem:[%s2001] sm:$0xff]
      %v2003 = vld [vmem:[%s2001 + $0x8] sm:$0xff]
      %2005 = vset.pattern.permute.xlu0 0
      %2006 = vperm.xlu0 %2005, %v2002
      %v2007 = vpop.permute.xlu0 %2006
      %2010 = vset.pattern.permute.xlu0 0
      %2011 = vperm.xlu0 %2010, %v2003
      %v2012 = vpop.permute.xlu0 %2011
      %v2014 = vadd.f32 %v1736, %v2007
      %v2015 = vadd.f32 %v1738, %v2007
      %v2016 = vadd.f32 %v1916, %v2007
      %v2017 = vadd.f32 %v1918, %v2007
      %v2018 = vadd.f32 %v1995, %v2007
      %v2019 = vadd.f32 %v1740, %v2012
      %v2020 = vadd.f32 %v1742, %v2012
      %v2021 = vadd.f32 %v1920, %v2012
      %v2022 = vadd.f32 %v1922, %v2012
      %v2023 = vadd.f32 %v1998, %v2012
      %v2024 = vmax.f32 %v2014, 0.0
      %v2025 = vmax.f32 %v2015, 0.0
      %v2026 = vmax.f32 %v2016, 0.0
      %v2027 = vmax.f32 %v2017, 0.0
      %v2028 = vmax.f32 %v2018, 0.0
      %v2029 = vmax.f32 %v2019, 0.0
      %v2030 = vmax.f32 %v2020, 0.0
      %v2031 = vmax.f32 %v2021, 0.0
      %v2032 = vmax.f32 %v2022, 0.0
      %v2033 = vmax.f32 %v2023, 0.0
      %v2034 = vmul.f32 %v2024, %v900
      %v2035 = vmul.f32 %v2025, %v904
      %v2036 = vmul.f32 %v2026, %v908
      %v2037 = vmul.f32 %v2027, %v912
      %v2038 = vmul.f32 %v2028, %v916
      %v2039 = vmul.f32 %v2029, %v900
      %v2040 = vmul.f32 %v2030, %v904
      %v2041 = vmul.f32 %v2031, %v908
      %v2042 = vmul.f32 %v2032, %v912
      %v2043 = vmul.f32 %v2033, %v916
      %2044 = vst [vmem:[#allocation4 + $0x8] sm:$0xff] %v2034
      %2045 = vst [vmem:[#allocation4 + $0x10] sm:$0xff] %v2035
      %2046 = vst [vmem:[#allocation4 + $0x18] sm:$0xff] %v2036
      %2047 = vst [vmem:[#allocation4 + $0x20] sm:$0xff] %v2037
      %2048 = vst.msk [vmem:[#allocation4 + $0x28] sm:$0xff] %vm936, %v2038
      %2049 = vst [vmem:[#allocation4 + $0x40] sm:$0xff] %v2039
      %2050 = vst [vmem:[#allocation4 + $0x48] sm:$0xff] %v2040
      %2051 = vst [vmem:[#allocation4 + $0x50] sm:$0xff] %v2041
      %2052 = vst [vmem:[#allocation4 + $0x58] sm:$0xff] %v2042
      %2053 = vst.msk [vmem:[#allocation4 + $0x60] sm:$0xff] %vm936, %v2043
      %v2054 = vld [vmem:[#allocation4] sm:$0xff]
      %v2055 = vld [vmem:[#allocation4 + $0x8] sm:$0xff]
      %v2056 = vld [vmem:[#allocation4 + $0x10] sm:$0xff]
      %v2057 = vld [vmem:[#allocation4 + $0x18] sm:$0xff]
      %v2058 = vld [vmem:[#allocation4 + $0x20] sm:$0xff]
      %v2059 = vld [vmem:[#allocation4 + $0x28] sm:$0xff]
      %v2060 = vld [vmem:[#allocation4 + $0x30] sm:$0xff]
      %v2061 = vld [vmem:[#allocation4 + $0x38] sm:$0xff]
      %v2062 = vld [vmem:[#allocation4 + $0x40] sm:$0xff]
      %v2063 = vld [vmem:[#allocation4 + $0x48] sm:$0xff]
      %v2064 = vld [vmem:[#allocation4 + $0x50] sm:$0xff]
      %v2065 = vld [vmem:[#allocation4 + $0x58] sm:$0xff]
      %v2066 = vld [vmem:[#allocation4 + $0x60] sm:$0xff]
      %v2067 = vld [vmem:[#allocation4 + $0x68] sm:$0xff]
      %v2068 = vpack.c.bf16 %v2061, %v2054
      %v2069 = vpack.c.bf16 %v2062, %v2055
      %v2070 = vpack.c.bf16 %v2063, %v2056
      %v2071 = vpack.c.bf16 %v2064, %v2057
      %v2072 = vpack.c.bf16 %v2065, %v2058
      %v2073 = vpack.c.bf16 %v2066, %v2059
      %v2074 = vpack.c.bf16 %v2067, %v2060
      %s2075 = scalar_lea.vmem %s1, 48
      %v2076 = vld [vmem:[%s2075] sm:$0xff]
      %v2077 = vld [vmem:[%s2075 + $0x8] sm:$0xff]
      %2081 = vrot.lane.b32.xlu0 %v2068, 124
      %v2082 = vpop.permute.xlu0 %2081
      %2083 = vrot.lane.b32.xlu0 %v2069, 124
      %v2084 = vpop.permute.xlu0 %2083
      %2085 = vrot.lane.b32.xlu0 %v2070, 124
      %v2086 = vpop.permute.xlu0 %2085
      %v2087 = vsel %vm981, %v2082, %v2084
      %v2088 = vsel %vm981, %v2084, %v2086
      %2089 = vrot.lane.b32.xlu0 %v2068, 120
      %v2090 = vpop.permute.xlu0 %2089
      %2091 = vrot.lane.b32.xlu0 %v2069, 120
      %v2092 = vpop.permute.xlu0 %2091
      %2093 = vrot.lane.b32.xlu0 %v2070, 120
      %v2094 = vpop.permute.xlu0 %2093
      %vm2095 = vcmask 982016
      %v2096 = vsel %vm2095, %v2090, %v2092
      %v2097 = vsel %vm2095, %v2092, %v2094
      %2098 = vrot.lane.b32.xlu0 %v2068, 32
      %v2099 = vpop.permute.xlu0 %2098
      %2100 = vrot.lane.b32.xlu0 %v2069, 32
      %v2101 = vpop.permute.xlu0 %2100
      %2102 = vrot.lane.b32.xlu0 %v2070, 32
      %v2103 = vpop.permute.xlu0 %2102
      %v2104 = vsel %vm1013, %v2099, %v2101
      %v2105 = vsel %vm1013, %v2101, %v2103
      %2106 = vrot.lane.b32.xlu0 %v2069, 28
      %v2107 = vpop.permute.xlu0 %2106
      %2108 = vrot.lane.b32.xlu0 %v2070, 28
      %v2109 = vpop.permute.xlu0 %2108
      %v2110 = vsel %vm1031, %v2107, %v2109
      %2112 = vrot.lane.b32.xlu0 %v2069, 24
      %v2113 = vpop.permute.xlu0 %2112
      %2114 = vrot.lane.b32.xlu0 %v2070, 24
      %v2115 = vpop.permute.xlu0 %2114
      %2116 = vrot.lane.b32.xlu0 %v2071, 24
      %v2117 = vpop.permute.xlu0 %2116
      %vm2118 = vcmask 195584
      %v2119 = vsel %vm2118, %v2113, %v2115
      %v2120 = vsel %vm2118, %v2115, %v2117
      %2121 = vrot.lane.b32.xlu0 %v2069, 64
      %v2122 = vpop.permute.xlu0 %2121
      %2123 = vrot.lane.b32.xlu0 %v2070, 64
      %v2124 = vpop.permute.xlu0 %2123
      %2125 = vrot.lane.b32.xlu0 %v2071, 64
      %v2126 = vpop.permute.xlu0 %2125
      %vm2127 = vcmask 523264
      %v2128 = vsel %vm2127, %v2122, %v2124
      %v2129 = vsel %vm2127, %v2124, %v2126
      %2130 = vrot.lane.b32.xlu0 %v2069, 60
      %v2131 = vpop.permute.xlu0 %2130
      %2132 = vrot.lane.b32.xlu0 %v2070, 60
      %v2133 = vpop.permute.xlu0 %2132
      %2134 = vrot.lane.b32.xlu0 %v2071, 60
      %v2135 = vpop.permute.xlu0 %2134
      %vm2136 = vcmask 490496
      %v2137 = vsel %vm2136, %v2131, %v2133
      %v2138 = vsel %vm2136, %v2133, %v2135
      %2139 = vrot.lane.b32.xlu0 %v2069, 56
      %v2140 = vpop.permute.xlu0 %2139
      %2141 = vrot.lane.b32.xlu0 %v2070, 56
      %v2142 = vpop.permute.xlu0 %2141
      %2143 = vrot.lane.b32.xlu0 %v2071, 56
      %v2144 = vpop.permute.xlu0 %2143
      %v2145 = vsel %vm1553, %v2140, %v2142
      %v2146 = vsel %vm1553, %v2142, %v2144
      %v2149 = vunpack.c.l.b16 %v2076
      %v2150 = vunpack.c.h.b16 %v2076
      %v2151 = vunpack.c.l.b16 %v2077
      %v2152 = vunpack.c.h.b16 %v2077
      %v2153 = vpack.c.b16 %v2151, %v2149
      %v2154 = vpack.c.b16 %v2152, %v2150
      %2156 = vrot.lane.b32.xlu0 %v2068, 100
      %v2157 = vpop.permute.xlu0 %2156
      %2158 = vrot.lane.b32.xlu0 %v2069, 100
      %v2159 = vpop.permute.xlu0 %2158
      %2160 = vrot.lane.b32.xlu0 %v2070, 100
      %v2161 = vpop.permute.xlu0 %2160
      %2162 = vrot.lane.b32.xlu0 %v2087, 100
      %v2163 = vpop.permute.xlu0 %2162
      %2164 = vrot.lane.b32.xlu0 %v2088, 100
      %v2165 = vpop.permute.xlu0 %2164
      %2166 = vrot.lane.b32.xlu0 %v2086, 100
      %v2167 = vpop.permute.xlu0 %2166
      %2168 = vrot.lane.b32.xlu0 %v2096, 100
      %v2169 = vpop.permute.xlu0 %2168
      %2170 = vrot.lane.b32.xlu0 %v2097, 100
      %v2171 = vpop.permute.xlu0 %2170
      %2172 = vrot.lane.b32.xlu0 %v2094, 100
      %v2173 = vpop.permute.xlu0 %2172
      %2174 = vrot.lane.b32.xlu0 %v2104, 100
      %v2175 = vpop.permute.xlu0 %2174
      %2176 = vrot.lane.b32.xlu0 %v2105, 100
      %v2177 = vpop.permute.xlu0 %2176
      %2178 = vrot.lane.b32.xlu0 %v2103, 100
      %v2179 = vpop.permute.xlu0 %2178
      %2180 = vrot.lane.b32.xlu0 %v2107, 100
      %v2181 = vpop.permute.xlu0 %2180
      %2182 = vrot.lane.b32.xlu0 %v2110, 100
      %v2183 = vpop.permute.xlu0 %2182
      %2184 = vrot.lane.b32.xlu0 %v2109, 100
      %v2185 = vpop.permute.xlu0 %2184
      %2186 = vrot.lane.b32.xlu0 %v2113, 100
      %v2187 = vpop.permute.xlu0 %2186
      %2188 = vrot.lane.b32.xlu0 %v2119, 100
      %v2189 = vpop.permute.xlu0 %2188
      %2190 = vrot.lane.b32.xlu0 %v2120, 100
      %v2191 = vpop.permute.xlu0 %2190
      %2192 = vrot.lane.b32.xlu0 %v2128, 100
      %v2193 = vpop.permute.xlu0 %2192
      %2194 = vrot.lane.b32.xlu0 %v2129, 100
      %v2195 = vpop.permute.xlu0 %2194
      %2196 = vrot.lane.b32.xlu0 %v2126, 100
      %v2197 = vpop.permute.xlu0 %2196
      %2198 = vrot.lane.b32.xlu0 %v2137, 100
      %v2199 = vpop.permute.xlu0 %2198
      %2200 = vrot.lane.b32.xlu0 %v2138, 100
      %v2201 = vpop.permute.xlu0 %2200
      %2202 = vrot.lane.b32.xlu0 %v2135, 100
      %v2203 = vpop.permute.xlu0 %2202
      %2204 = vrot.lane.b32.xlu0 %v2145, 100
      %v2205 = vpop.permute.xlu0 %2204
      %2206 = vrot.lane.b32.xlu0 %v2146, 100
      %v2207 = vpop.permute.xlu0 %2206
      %2208 = vrot.lane.b32.xlu0 %v2144, 100
      %v2209 = vpop.permute.xlu0 %2208
      %vm2210 = vcmask 818176
      %v2211 = vsel %vm2210, %v2157, %v2159
      %v2212 = vsel %vm2210, %v2159, %v2161
      %v2213 = vsel %vm2210, %v2163, %v2165
      %v2214 = vsel %vm2210, %v2165, %v2167
      %v2215 = vsel %vm2210, %v2169, %v2171
      %v2216 = vsel %vm2210, %v2171, %v2173
      %v2217 = vsel %vm2210, %v2175, %v2177
      %v2218 = vsel %vm2210, %v2177, %v2179
      %v2219 = vsel %vm2210, %v2181, %v2183
      %v2220 = vsel %vm2210, %v2183, %v2185
      %v2221 = vsel %vm2210, %v2187, %v2189
      %v2222 = vsel %vm2210, %v2189, %v2191
      %v2223 = vsel %vm2210, %v2193, %v2195
      %v2224 = vsel %vm2210, %v2195, %v2197
      %v2225 = vsel %vm2210, %v2199, %v2201
      %v2226 = vsel %vm2210, %v2201, %v2203
      %v2227 = vsel %vm2210, %v2205, %v2207
      %v2228 = vsel %vm2210, %v2207, %v2209
      %v2248 = vsel %vm548, %v2154, 0
      %2250 = vmatprep.subr.bf16.mxu0 %v2226
      %2251 = vmatpush1.bf16.msra.mxu0 %v2225
      %2252 = vmatprep.subr.bf16.mxu0 %v2224
      %2253 = vmatpush1.bf16.msra.mxu0 %v2223
      %2254 = vmatprep.subr.bf16.mxu0 %v2222
      %2255 = vmatpush1.bf16.msra.mxu0 %v2221
      %2256 = vmatprep.subr.bf16.mxu0 %v2220
      %2257 = vmatpush1.bf16.msra.mxu0 %v2219
      %2258 = vmatprep.subr.bf16.mxu0 %v2218
      %2259 = vmatpush1.bf16.msra.mxu0 %v2217
      %2260 = vmatprep.subr.bf16.mxu0 %v2216
      %2261 = vmatpush1.bf16.msra.mxu0 %v2215
      %2262 = vmatprep.subr.bf16.mxu0 %v2214
      %2263 = vmatpush1.bf16.msra.mxu0 %v2213
      %2264 = vmatprep.subr.bf16.mxu0 %v2212
      %2265 = vmatpush1.bf16.msra.mxu0 %v2211
      %2266 = vmatprep.subr.bf16.mxu0 0
      %2267 = vmatpush2.bf16.msra.mxu0 0
      %2268 = vmatprep.subr.bf16.mxu0 0
      %2269 = vmatpush2.bf16.msra.mxu0 0
      %2270 = vmatprep.subr.bf16.mxu0 0
      %2271 = vmatpush2.bf16.msra.mxu0 0
      %2272 = vmatprep.subr.bf16.mxu0 0
      %2273 = vmatpush2.bf16.msra.mxu0 0
      %2274 = vmatprep.subr.bf16.mxu0 0
      %2275 = vmatpush2.bf16.msra.mxu0 0
      %2276 = vmatprep.subr.bf16.mxu0 0
      %2277 = vmatpush2.bf16.msra.mxu0 0
      %2278 = vmatprep.subr.bf16.mxu0 0
      %2279 = vmatpush2.bf16.msra.mxu0 0
      %2280 = vmatprep.subr.bf16.mxu0 %v2228
      %2281 = vmatpush2.bf16.msra.mxu0 %v2227
      %2282 = vmatprep.mubr.bf16.mxu0 %v2248
      %2283 = vmatmul.mubr.bf16.gmra.mxu0 %v2153
      %v2284 = vpop.f32.mrf.mxu0
      %v2285 = vadd.f32 0.0, %v2284
      %v2286 = vpop.f32.mrf.mxu0
      %v2287 = vadd.f32 0.0, %v2286
      %v2288 = vpop.f32.mrf.mxu0
      %v2289 = vadd.f32 0.0, %v2288
      %v2290 = vpop.f32.mrf.mxu0
      %v2291 = vadd.f32 0.0, %v2290
      %2292 = vdwg.mxu0
      %2294 = vrot.lane.b32.xlu0 %v2071, 124
      %v2295 = vpop.permute.xlu0 %2294
      %2296 = vrot.lane.b32.xlu0 %v2072, 124
      %v2297 = vpop.permute.xlu0 %2296
      %v2298 = vsel %vm981, %v2086, %v2295
      %v2299 = vsel %vm981, %v2295, %v2297
      %2300 = vrot.lane.b32.xlu0 %v2071, 120
      %v2301 = vpop.permute.xlu0 %2300
      %2302 = vrot.lane.b32.xlu0 %v2072, 120
      %v2303 = vpop.permute.xlu0 %2302
      %v2304 = vsel %vm2095, %v2094, %v2301
      %v2305 = vsel %vm2095, %v2301, %v2303
      %2306 = vrot.lane.b32.xlu0 %v2071, 32
      %v2307 = vpop.permute.xlu0 %2306
      %2308 = vrot.lane.b32.xlu0 %v2072, 32
      %v2309 = vpop.permute.xlu0 %2308
      %v2310 = vsel %vm1013, %v2103, %v2307
      %v2311 = vsel %vm1013, %v2307, %v2309
      %2312 = vrot.lane.b32.xlu0 %v2071, 28
      %v2313 = vpop.permute.xlu0 %2312
      %2314 = vrot.lane.b32.xlu0 %v2072, 28
      %v2315 = vpop.permute.xlu0 %2314
      %v2316 = vsel %vm1031, %v2313, %v2315
      %2318 = vrot.lane.b32.xlu0 %v2072, 24
      %v2319 = vpop.permute.xlu0 %2318
      %2320 = vrot.lane.b32.xlu0 %v2073, 24
      %v2321 = vpop.permute.xlu0 %2320
      %v2322 = vsel %vm2118, %v2117, %v2319
      %v2323 = vsel %vm2118, %v2319, %v2321
      %2324 = vrot.lane.b32.xlu0 %v2072, 64
      %v2325 = vpop.permute.xlu0 %2324
      %2326 = vrot.lane.b32.xlu0 %v2073, 64
      %v2327 = vpop.permute.xlu0 %2326
      %v2328 = vsel %vm2127, %v2126, %v2325
      %v2329 = vsel %vm2127, %v2325, %v2327
      %2330 = vrot.lane.b32.xlu0 %v2072, 60
      %v2331 = vpop.permute.xlu0 %2330
      %2332 = vrot.lane.b32.xlu0 %v2073, 60
      %v2333 = vpop.permute.xlu0 %2332
      %v2334 = vsel %vm2136, %v2135, %v2331
      %v2335 = vsel %vm2136, %v2331, %v2333
      %2336 = vrot.lane.b32.xlu0 %v2072, 56
      %v2337 = vpop.permute.xlu0 %2336
      %2338 = vrot.lane.b32.xlu0 %v2073, 56
      %v2339 = vpop.permute.xlu0 %2338
      %v2340 = vsel %vm1553, %v2144, %v2337
      %v2341 = vsel %vm1553, %v2337, %v2339
      %2342 = vrot.lane.b32.xlu0 %v2071, 100
      %v2343 = vpop.permute.xlu0 %2342
      %2344 = vrot.lane.b32.xlu0 %v2072, 100
      %v2345 = vpop.permute.xlu0 %2344
      %2346 = vrot.lane.b32.xlu0 %v2298, 100
      %v2347 = vpop.permute.xlu0 %2346
      %2348 = vrot.lane.b32.xlu0 %v2299, 100
      %v2349 = vpop.permute.xlu0 %2348
      %2350 = vrot.lane.b32.xlu0 %v2297, 100
      %v2351 = vpop.permute.xlu0 %2350
      %2352 = vrot.lane.b32.xlu0 %v2304, 100
      %v2353 = vpop.permute.xlu0 %2352
      %2354 = vrot.lane.b32.xlu0 %v2305, 100
      %v2355 = vpop.permute.xlu0 %2354
      %2356 = vrot.lane.b32.xlu0 %v2303, 100
      %v2357 = vpop.permute.xlu0 %2356
      %2358 = vrot.lane.b32.xlu0 %v2310, 100
      %v2359 = vpop.permute.xlu0 %2358
      %2360 = vrot.lane.b32.xlu0 %v2311, 100
      %v2361 = vpop.permute.xlu0 %2360
      %2362 = vrot.lane.b32.xlu0 %v2309, 100
      %v2363 = vpop.permute.xlu0 %2362
      %2364 = vrot.lane.b32.xlu0 %v2313, 100
      %v2365 = vpop.permute.xlu0 %2364
      %2366 = vrot.lane.b32.xlu0 %v2316, 100
      %v2367 = vpop.permute.xlu0 %2366
      %2368 = vrot.lane.b32.xlu0 %v2315, 100
      %v2369 = vpop.permute.xlu0 %2368
      %2370 = vrot.lane.b32.xlu0 %v2117, 100
      %v2371 = vpop.permute.xlu0 %2370
      %2372 = vrot.lane.b32.xlu0 %v2322, 100
      %v2373 = vpop.permute.xlu0 %2372
      %2374 = vrot.lane.b32.xlu0 %v2323, 100
      %v2375 = vpop.permute.xlu0 %2374
      %2376 = vrot.lane.b32.xlu0 %v2328, 100
      %v2377 = vpop.permute.xlu0 %2376
      %2378 = vrot.lane.b32.xlu0 %v2329, 100
      %v2379 = vpop.permute.xlu0 %2378
      %2380 = vrot.lane.b32.xlu0 %v2327, 100
      %v2381 = vpop.permute.xlu0 %2380
      %2382 = vrot.lane.b32.xlu0 %v2334, 100
      %v2383 = vpop.permute.xlu0 %2382
      %2384 = vrot.lane.b32.xlu0 %v2335, 100
      %v2385 = vpop.permute.xlu0 %2384
      %2386 = vrot.lane.b32.xlu0 %v2333, 100
      %v2387 = vpop.permute.xlu0 %2386
      %2388 = vrot.lane.b32.xlu0 %v2340, 100
      %v2389 = vpop.permute.xlu0 %2388
      %2390 = vrot.lane.b32.xlu0 %v2341, 100
      %v2391 = vpop.permute.xlu0 %2390
      %2392 = vrot.lane.b32.xlu0 %v2339, 100
      %v2393 = vpop.permute.xlu0 %2392
      %v2394 = vsel %vm2210, %v2161, %v2343
      %v2395 = vsel %vm2210, %v2343, %v2345
      %v2396 = vsel %vm2210, %v2347, %v2349
      %v2397 = vsel %vm2210, %v2349, %v2351
      %v2398 = vsel %vm2210, %v2353, %v2355
      %v2399 = vsel %vm2210, %v2355, %v2357
      %v2400 = vsel %vm2210, %v2359, %v2361
      %v2401 = vsel %vm2210, %v2361, %v2363
      %v2402 = vsel %vm2210, %v2365, %v2367
      %v2403 = vsel %vm2210, %v2367, %v2369
      %v2404 = vsel %vm2210, %v2371, %v2373
      %v2405 = vsel %vm2210, %v2373, %v2375
      %v2406 = vsel %vm2210, %v2377, %v2379
      %v2407 = vsel %vm2210, %v2379, %v2381
      %v2408 = vsel %vm2210, %v2383, %v2385
      %v2409 = vsel %vm2210, %v2385, %v2387
      %v2410 = vsel %vm2210, %v2389, %v2391
      %v2411 = vsel %vm2210, %v2391, %v2393
      %2430 = vmatprep.subr.bf16.mxu0 %v2409
      %2431 = vmatpush1.bf16.msra.mxu0 %v2408
      %2432 = vmatprep.subr.bf16.mxu0 %v2407
      %2433 = vmatpush1.bf16.msra.mxu0 %v2406
      %2434 = vmatprep.subr.bf16.mxu0 %v2405
      %2435 = vmatpush1.bf16.msra.mxu0 %v2404
      %2436 = vmatprep.subr.bf16.mxu0 %v2403
      %2437 = vmatpush1.bf16.msra.mxu0 %v2402
      %2438 = vmatprep.subr.bf16.mxu0 %v2401
      %2439 = vmatpush1.bf16.msra.mxu0 %v2400
      %2440 = vmatprep.subr.bf16.mxu0 %v2399
      %2441 = vmatpush1.bf16.msra.mxu0 %v2398
      %2442 = vmatprep.subr.bf16.mxu0 %v2397
      %2443 = vmatpush1.bf16.msra.mxu0 %v2396
      %2444 = vmatprep.subr.bf16.mxu0 %v2395
      %2445 = vmatpush1.bf16.msra.mxu0 %v2394
      %2446 = vmatprep.subr.bf16.mxu0 0
      %2447 = vmatpush2.bf16.msra.mxu0 0
      %2448 = vmatprep.subr.bf16.mxu0 0
      %2449 = vmatpush2.bf16.msra.mxu0 0
      %2450 = vmatprep.subr.bf16.mxu0 0
      %2451 = vmatpush2.bf16.msra.mxu0 0
      %2452 = vmatprep.subr.bf16.mxu0 0
      %2453 = vmatpush2.bf16.msra.mxu0 0
      %2454 = vmatprep.subr.bf16.mxu0 0
      %2455 = vmatpush2.bf16.msra.mxu0 0
      %2456 = vmatprep.subr.bf16.mxu0 0
      %2457 = vmatpush2.bf16.msra.mxu0 0
      %2458 = vmatprep.subr.bf16.mxu0 0
      %2459 = vmatpush2.bf16.msra.mxu0 0
      %2460 = vmatprep.subr.bf16.mxu0 %v2411
      %2461 = vmatpush2.bf16.msra.mxu0 %v2410
      %2462 = vmatprep.mubr.bf16.mxu0 %v2248
      %2463 = vmatmul.mubr.bf16.gmra.mxu0 %v2153
      %v2464 = vpop.f32.mrf.mxu0
      %v2465 = vadd.f32 0.0, %v2464
      %v2466 = vpop.f32.mrf.mxu0
      %v2467 = vadd.f32 0.0, %v2466
      %v2468 = vpop.f32.mrf.mxu0
      %v2469 = vadd.f32 0.0, %v2468
      %v2470 = vpop.f32.mrf.mxu0
      %v2471 = vadd.f32 0.0, %v2470
      %2472 = vdwg.mxu0
      %2473 = vrot.lane.b32.xlu0 %v2073, 32
      %v2474 = vpop.permute.xlu0 %2473
      %v2475 = vsel %vm1013, %v2309, %v2474
      %2476 = vrot.lane.b32.xlu0 %v2073, 28
      %v2477 = vpop.permute.xlu0 %2476
      %2479 = vrot.lane.b32.xlu0 %v2074, 64
      %v2480 = vpop.permute.xlu0 %2479
      %v2481 = vsel %vm2127, %v2327, %v2480
      %2482 = vrot.lane.b32.xlu0 %v2074, 60
      %v2483 = vpop.permute.xlu0 %2482
      %v2484 = vsel %vm2136, %v2333, %v2483
      %2485 = vrot.lane.b32.xlu0 %v2074, 56
      %v2486 = vpop.permute.xlu0 %2485
      %v2487 = vsel %vm1553, %v2339, %v2486
      %2488 = vrot.lane.b32.xlu0 %v2475, 100
      %v2489 = vpop.permute.xlu0 %2488
      %2490 = vrot.lane.b32.xlu0 %v2477, 100
      %v2491 = vpop.permute.xlu0 %2490
      %2492 = vrot.lane.b32.xlu0 %v2321, 100
      %v2493 = vpop.permute.xlu0 %2492
      %2494 = vrot.lane.b32.xlu0 %v2481, 100
      %v2495 = vpop.permute.xlu0 %2494
      %2496 = vrot.lane.b32.xlu0 %v2484, 100
      %v2497 = vpop.permute.xlu0 %2496
      %2498 = vrot.lane.b32.xlu0 %v2487, 100
      %v2499 = vpop.permute.xlu0 %2498
      %2509 = vmatprep.subr.bf16.mxu0 0
      %2510 = vmatpush1.bf16.msra.mxu0 %v2497
      %2511 = vmatprep.subr.bf16.mxu0 0
      %2512 = vmatpush1.bf16.msra.mxu0 %v2495
      %2513 = vmatprep.subr.bf16.mxu0 0
      %2514 = vmatpush1.bf16.msra.mxu0 %v2493
      %2515 = vmatprep.subr.bf16.mxu0 0
      %2516 = vmatpush1.bf16.msra.mxu0 %v2491
      %2517 = vmatprep.subr.bf16.mxu0 0
      %2518 = vmatpush1.bf16.msra.mxu0 %v2489
      %2519 = vmatprep.subr.bf16.mxu0 0
      %2520 = vmatpush1.bf16.msra.mxu0 %v2357
      %2521 = vmatprep.subr.bf16.mxu0 0
      %2522 = vmatpush1.bf16.msra.mxu0 %v2351
      %2523 = vmatprep.subr.bf16.mxu0 0
      %2524 = vmatpush1.bf16.msra.mxu0 %v2345
      %2525 = vmatprep.subr.bf16.mxu0 0
      %2526 = vmatpush2.bf16.msra.mxu0 0
      %2527 = vmatprep.subr.bf16.mxu0 0
      %2528 = vmatpush2.bf16.msra.mxu0 0
      %2529 = vmatprep.subr.bf16.mxu0 0
      %2530 = vmatpush2.bf16.msra.mxu0 0
      %2531 = vmatprep.subr.bf16.mxu0 0
      %2532 = vmatpush2.bf16.msra.mxu0 0
      %2533 = vmatprep.subr.bf16.mxu0 0
      %2534 = vmatpush2.bf16.msra.mxu0 0
      %2535 = vmatprep.subr.bf16.mxu0 0
      %2536 = vmatpush2.bf16.msra.mxu0 0
      %2537 = vmatprep.subr.bf16.mxu0 0
      %2538 = vmatpush2.bf16.msra.mxu0 0
      %2539 = vmatprep.subr.bf16.mxu0 0
      %2540 = vmatpush2.bf16.msra.mxu0 %v2499
      %2541 = vmatprep.mubr.bf16.mxu0 %v2248
      %2542 = vmatmul.mubr.bf16.gmra.mxu0 %v2153
      %v2543 = vpop.f32.mrf.mxu0
      %v2544 = vadd.f32 0.0, %v2543
      %v2545 = vpop.f32.mrf.mxu0
      %v2546 = vpop.f32.mrf.mxu0
      %v2547 = vadd.f32 0.0, %v2546
      %v2548 = vpop.f32.mrf.mxu0
      %2549 = vdwg.mxu0
      %s2550 = scalar_lea.vmem %s2, 48
      %v2551 = vld [vmem:[%s2550] sm:$0xff]
      %v2552 = vld [vmem:[%s2550 + $0x8] sm:$0xff]
      %2554 = vset.pattern.permute.xlu0 0
      %2555 = vperm.xlu0 %2554, %v2551
      %v2556 = vpop.permute.xlu0 %2555
      %2559 = vset.pattern.permute.xlu0 0
      %2560 = vperm.xlu0 %2559, %v2552
      %v2561 = vpop.permute.xlu0 %2560
      %v2563 = vadd.f32 %v2285, %v2556
      %v2564 = vadd.f32 %v2287, %v2556
      %v2565 = vadd.f32 %v2465, %v2556
      %v2566 = vadd.f32 %v2467, %v2556
      %v2567 = vadd.f32 %v2544, %v2556
      %v2568 = vadd.f32 %v2289, %v2561
      %v2569 = vadd.f32 %v2291, %v2561
      %v2570 = vadd.f32 %v2469, %v2561
      %v2571 = vadd.f32 %v2471, %v2561
      %v2572 = vadd.f32 %v2547, %v2561
      %v2573 = vmul.f32 %v2563, %v900
      %v2574 = vmul.f32 %v2564, %v904
      %v2575 = vmul.f32 %v2565, %v908
      %v2576 = vmul.f32 %v2566, %v912
      %v2577 = vmul.f32 %v2567, %v916
      %v2578 = vmul.f32 %v2568, %v900
      %v2579 = vmul.f32 %v2569, %v904
      %v2580 = vmul.f32 %v2570, %v908
      %v2581 = vmul.f32 %v2571, %v912
      %v2582 = vmul.f32 %v2572, %v916
      %v2583 = vld [vmem:[#allocation3 + $0x8] sm:$0xff]
      %v2584 = vld [vmem:[#allocation3 + $0x10] sm:$0xff]
      %v2585 = vld [vmem:[#allocation3 + $0x18] sm:$0xff]
      %v2586 = vld [vmem:[#allocation3 + $0x20] sm:$0xff]
      %v2587 = vld [vmem:[#allocation3 + $0x28] sm:$0xff]
      %v2588 = vld [vmem:[#allocation3 + $0x40] sm:$0xff]
      %v2589 = vld [vmem:[#allocation3 + $0x48] sm:$0xff]
      %v2590 = vld [vmem:[#allocation3 + $0x50] sm:$0xff]
      %v2591 = vld [vmem:[#allocation3 + $0x58] sm:$0xff]
      %v2592 = vld [vmem:[#allocation3 + $0x60] sm:$0xff]
      %v2593 = vadd.f32 %v2573, %v2583
      %v2594 = vadd.f32 %v2574, %v2584
      %v2595 = vadd.f32 %v2575, %v2585
      %v2596 = vadd.f32 %v2576, %v2586
      %v2597 = vadd.f32 %v2577, %v2587
      %v2598 = vadd.f32 %v2578, %v2588
      %v2599 = vadd.f32 %v2579, %v2589
      %v2600 = vadd.f32 %v2580, %v2590
      %v2601 = vadd.f32 %v2581, %v2591
      %v2602 = vadd.f32 %v2582, %v2592
      %2603 = vst [vmem:[#allocation5 + $0x8] sm:$0xff] %v2593
      %2604 = vst [vmem:[#allocation5 + $0x10] sm:$0xff] %v2594
      %2605 = vst [vmem:[#allocation5 + $0x18] sm:$0xff] %v2595
      %2606 = vst [vmem:[#allocation5 + $0x20] sm:$0xff] %v2596
      %2607 = vst.msk [vmem:[#allocation5 + $0x28] sm:$0xff] %vm936, %v2597
      %2608 = vst [vmem:[#allocation5 + $0x40] sm:$0xff] %v2598
      %2609 = vst [vmem:[#allocation5 + $0x48] sm:$0xff] %v2599
      %2610 = vst [vmem:[#allocation5 + $0x50] sm:$0xff] %v2600
      %2611 = vst [vmem:[#allocation5 + $0x58] sm:$0xff] %v2601
      %2612 = vst.msk [vmem:[#allocation5 + $0x60] sm:$0xff] %vm936, %v2602
      %v2613 = vld [vmem:[#allocation5] sm:$0xff]
      %v2614 = vld [vmem:[#allocation5 + $0x8] sm:$0xff]
      %v2615 = vld [vmem:[#allocation5 + $0x10] sm:$0xff]
      %v2616 = vld [vmem:[#allocation5 + $0x18] sm:$0xff]
      %v2617 = vld [vmem:[#allocation5 + $0x20] sm:$0xff]
      %v2618 = vld [vmem:[#allocation5 + $0x28] sm:$0xff]
      %v2619 = vld [vmem:[#allocation5 + $0x30] sm:$0xff]
      %v2620 = vld [vmem:[#allocation5 + $0x38] sm:$0xff]
      %v2621 = vld [vmem:[#allocation5 + $0x40] sm:$0xff]
      %v2622 = vld [vmem:[#allocation5 + $0x48] sm:$0xff]
      %v2623 = vld [vmem:[#allocation5 + $0x50] sm:$0xff]
      %v2624 = vld [vmem:[#allocation5 + $0x58] sm:$0xff]
      %v2625 = vld [vmem:[#allocation5 + $0x60] sm:$0xff]
      %v2626 = vld [vmem:[#allocation5 + $0x68] sm:$0xff]
      %v2627 = vpack.c.bf16 %v2620, %v2613
      %v2628 = vpack.c.bf16 %v2621, %v2614
      %v2629 = vpack.c.bf16 %v2622, %v2615
      %v2630 = vpack.c.bf16 %v2623, %v2616
      %v2631 = vpack.c.bf16 %v2624, %v2617
      %v2632 = vpack.c.bf16 %v2625, %v2618
      %v2633 = vpack.c.bf16 %v2626, %v2619
      %s2634 = scalar_lea.vmem %s1, 64
      %v2635 = vld [vmem:[%s2634] sm:$0xff]
      %v2636 = vld [vmem:[%s2634 + $0x8] sm:$0xff]
      %2640 = vrot.lane.b32.xlu0 %v2627, 125
      %v2641 = vpop.permute.xlu0 %2640
      %2642 = vrot.lane.b32.xlu0 %v2628, 125
      %v2643 = vpop.permute.xlu0 %2642
      %2644 = vrot.lane.b32.xlu0 %v2629, 125
      %v2645 = vpop.permute.xlu0 %2644
      %v2646 = vsel %vm1535, %v2641, %v2643
      %v2647 = vsel %vm1535, %v2643, %v2645
      %2648 = vrot.lane.b32.xlu0 %v2627, 122
      %v2649 = vpop.permute.xlu0 %2648
      %2650 = vrot.lane.b32.xlu0 %v2628, 122
      %v2651 = vpop.permute.xlu0 %2650
      %2652 = vrot.lane.b32.xlu0 %v2629, 122
      %v2653 = vpop.permute.xlu0 %2652
      %v2654 = vsel %vm1544, %v2649, %v2651
      %v2655 = vsel %vm1544, %v2651, %v2653
      %2656 = vrot.lane.b32.xlu0 %v2627, 56
      %v2657 = vpop.permute.xlu0 %2656
      %2658 = vrot.lane.b32.xlu0 %v2628, 56
      %v2659 = vpop.permute.xlu0 %2658
      %2660 = vrot.lane.b32.xlu0 %v2629, 56
      %v2661 = vpop.permute.xlu0 %2660
      %v2662 = vsel %vm1553, %v2657, %v2659
      %v2663 = vsel %vm1553, %v2659, %v2661
      %2664 = vrot.lane.b32.xlu0 %v2628, 53
      %v2665 = vpop.permute.xlu0 %2664
      %2666 = vrot.lane.b32.xlu0 %v2629, 53
      %v2667 = vpop.permute.xlu0 %2666
      %v2668 = vsel %vm1560, %v2665, %v2667
      %2670 = vrot.lane.b32.xlu0 %v2628, 50
      %v2671 = vpop.permute.xlu0 %2670
      %2672 = vrot.lane.b32.xlu0 %v2629, 50
      %v2673 = vpop.permute.xlu0 %2672
      %2674 = vrot.lane.b32.xlu0 %v2630, 50
      %v2675 = vpop.permute.xlu0 %2674
      %v2676 = vsel %vm1097, %v2671, %v2673
      %v2677 = vsel %vm1097, %v2673, %v2675
      %2678 = vrot.lane.b32.xlu0 %v2628, 112
      %v2679 = vpop.permute.xlu0 %2678
      %2680 = vrot.lane.b32.xlu0 %v2629, 112
      %v2681 = vpop.permute.xlu0 %2680
      %2682 = vrot.lane.b32.xlu0 %v2630, 112
      %v2683 = vpop.permute.xlu0 %2682
      %v2684 = vsel %vm1577, %v2679, %v2681
      %v2685 = vsel %vm1577, %v2681, %v2683
      %2686 = vrot.lane.b32.xlu0 %v2628, 109
      %v2687 = vpop.permute.xlu0 %2686
      %2688 = vrot.lane.b32.xlu0 %v2629, 109
      %v2689 = vpop.permute.xlu0 %2688
      %2690 = vrot.lane.b32.xlu0 %v2630, 109
      %v2691 = vpop.permute.xlu0 %2690
      %v2692 = vsel %vm1586, %v2687, %v2689
      %v2693 = vsel %vm1586, %v2689, %v2691
      %2694 = vrot.lane.b32.xlu0 %v2628, 106
      %v2695 = vpop.permute.xlu0 %2694
      %2696 = vrot.lane.b32.xlu0 %v2629, 106
      %v2697 = vpop.permute.xlu0 %2696
      %2698 = vrot.lane.b32.xlu0 %v2630, 106
      %v2699 = vpop.permute.xlu0 %2698
      %v2700 = vsel %vm1595, %v2695, %v2697
      %v2701 = vsel %vm1595, %v2697, %v2699
      %v2704 = vunpack.c.l.b16 %v2635
      %v2705 = vunpack.c.h.b16 %v2635
      %v2706 = vunpack.c.l.b16 %v2636
      %v2707 = vunpack.c.h.b16 %v2636
      %v2708 = vpack.c.b16 %v2706, %v2704
      %v2709 = vpack.c.b16 %v2707, %v2705
      %2711 = vrot.lane.b32.xlu0 %v2627, 75
      %v2712 = vpop.permute.xlu0 %2711
      %2713 = vrot.lane.b32.xlu0 %v2628, 75
      %v2714 = vpop.permute.xlu0 %2713
      %2715 = vrot.lane.b32.xlu0 %v2629, 75
      %v2716 = vpop.permute.xlu0 %2715
      %2717 = vrot.lane.b32.xlu0 %v2646, 75
      %v2718 = vpop.permute.xlu0 %2717
      %2719 = vrot.lane.b32.xlu0 %v2647, 75
      %v2720 = vpop.permute.xlu0 %2719
      %2721 = vrot.lane.b32.xlu0 %v2645, 75
      %v2722 = vpop.permute.xlu0 %2721
      %2723 = vrot.lane.b32.xlu0 %v2654, 75
      %v2724 = vpop.permute.xlu0 %2723
      %2725 = vrot.lane.b32.xlu0 %v2655, 75
      %v2726 = vpop.permute.xlu0 %2725
      %2727 = vrot.lane.b32.xlu0 %v2653, 75
      %v2728 = vpop.permute.xlu0 %2727
      %2729 = vrot.lane.b32.xlu0 %v2662, 75
      %v2730 = vpop.permute.xlu0 %2729
      %2731 = vrot.lane.b32.xlu0 %v2663, 75
      %v2732 = vpop.permute.xlu0 %2731
      %2733 = vrot.lane.b32.xlu0 %v2661, 75
      %v2734 = vpop.permute.xlu0 %2733
      %2735 = vrot.lane.b32.xlu0 %v2665, 75
      %v2736 = vpop.permute.xlu0 %2735
      %2737 = vrot.lane.b32.xlu0 %v2668, 75
      %v2738 = vpop.permute.xlu0 %2737
      %2739 = vrot.lane.b32.xlu0 %v2667, 75
      %v2740 = vpop.permute.xlu0 %2739
      %2741 = vrot.lane.b32.xlu0 %v2671, 75
      %v2742 = vpop.permute.xlu0 %2741
      %2743 = vrot.lane.b32.xlu0 %v2676, 75
      %v2744 = vpop.permute.xlu0 %2743
      %2745 = vrot.lane.b32.xlu0 %v2677, 75
      %v2746 = vpop.permute.xlu0 %2745
      %2747 = vrot.lane.b32.xlu0 %v2684, 75
      %v2748 = vpop.permute.xlu0 %2747
      %2749 = vrot.lane.b32.xlu0 %v2685, 75
      %v2750 = vpop.permute.xlu0 %2749
      %2751 = vrot.lane.b32.xlu0 %v2683, 75
      %v2752 = vpop.permute.xlu0 %2751
      %2753 = vrot.lane.b32.xlu0 %v2692, 75
      %v2754 = vpop.permute.xlu0 %2753
      %2755 = vrot.lane.b32.xlu0 %v2693, 75
      %v2756 = vpop.permute.xlu0 %2755
      %2757 = vrot.lane.b32.xlu0 %v2691, 75
      %v2758 = vpop.permute.xlu0 %2757
      %2759 = vrot.lane.b32.xlu0 %v2700, 75
      %v2760 = vpop.permute.xlu0 %2759
      %2761 = vrot.lane.b32.xlu0 %v2701, 75
      %v2762 = vpop.permute.xlu0 %2761
      %2763 = vrot.lane.b32.xlu0 %v2699, 75
      %v2764 = vpop.permute.xlu0 %2763
      %v2765 = vsel %vm1661, %v2712, %v2714
      %v2766 = vsel %vm1661, %v2714, %v2716
      %v2767 = vsel %vm1661, %v2718, %v2720
      %v2768 = vsel %vm1661, %v2720, %v2722
      %v2769 = vsel %vm1661, %v2724, %v2726
      %v2770 = vsel %vm1661, %v2726, %v2728
      %v2771 = vsel %vm1661, %v2730, %v2732
      %v2772 = vsel %vm1661, %v2732, %v2734
      %v2773 = vsel %vm1661, %v2736, %v2738
      %v2774 = vsel %vm1661, %v2738, %v2740
      %v2775 = vsel %vm1661, %v2742, %v2744
      %v2776 = vsel %vm1661, %v2744, %v2746
      %v2777 = vsel %vm1661, %v2748, %v2750
      %v2778 = vsel %vm1661, %v2750, %v2752
      %v2779 = vsel %vm1661, %v2754, %v2756
      %v2780 = vsel %vm1661, %v2756, %v2758
      %v2781 = vsel %vm1661, %v2760, %v2762
      %v2782 = vsel %vm1661, %v2762, %v2764
      %v2802 = vsel %vm548, %v2709, 0
      %2804 = vmatprep.subr.bf16.mxu0 %v2780
      %2805 = vmatpush1.bf16.msra.mxu0 %v2779
      %2806 = vmatprep.subr.bf16.mxu0 %v2778
      %2807 = vmatpush1.bf16.msra.mxu0 %v2777
      %2808 = vmatprep.subr.bf16.mxu0 %v2776
      %2809 = vmatpush1.bf16.msra.mxu0 %v2775
      %2810 = vmatprep.subr.bf16.mxu0 %v2774
      %2811 = vmatpush1.bf16.msra.mxu0 %v2773
      %2812 = vmatprep.subr.bf16.mxu0 %v2772
      %2813 = vmatpush1.bf16.msra.mxu0 %v2771
      %2814 = vmatprep.subr.bf16.mxu0 %v2770
      %2815 = vmatpush1.bf16.msra.mxu0 %v2769
      %2816 = vmatprep.subr.bf16.mxu0 %v2768
      %2817 = vmatpush1.bf16.msra.mxu0 %v2767
      %2818 = vmatprep.subr.bf16.mxu0 %v2766
      %2819 = vmatpush1.bf16.msra.mxu0 %v2765
      %2820 = vmatprep.subr.bf16.mxu0 0
      %2821 = vmatpush2.bf16.msra.mxu0 0
      %2822 = vmatprep.subr.bf16.mxu0 0
      %2823 = vmatpush2.bf16.msra.mxu0 0
      %2824 = vmatprep.subr.bf16.mxu0 0
      %2825 = vmatpush2.bf16.msra.mxu0 0
      %2826 = vmatprep.subr.bf16.mxu0 0
      %2827 = vmatpush2.bf16.msra.mxu0 0
      %2828 = vmatprep.subr.bf16.mxu0 0
      %2829 = vmatpush2.bf16.msra.mxu0 0
      %2830 = vmatprep.subr.bf16.mxu0 0
      %2831 = vmatpush2.bf16.msra.mxu0 0
      %2832 = vmatprep.subr.bf16.mxu0 0
      %2833 = vmatpush2.bf16.msra.mxu0 0
      %2834 = vmatprep.subr.bf16.mxu0 %v2782
      %2835 = vmatpush2.bf16.msra.mxu0 %v2781
      %2836 = vmatprep.mubr.bf16.mxu0 %v2802
      %2837 = vmatmul.mubr.bf16.gmra.mxu0 %v2708
      %v2838 = vpop.f32.mrf.mxu0
      %v2839 = vadd.f32 0.0, %v2838
      %v2840 = vpop.f32.mrf.mxu0
      %v2841 = vadd.f32 0.0, %v2840
      %v2842 = vpop.f32.mrf.mxu0
      %v2843 = vadd.f32 0.0, %v2842
      %v2844 = vpop.f32.mrf.mxu0
      %v2845 = vadd.f32 0.0, %v2844
      %2846 = vdwg.mxu0
      %2848 = vrot.lane.b32.xlu0 %v2630, 125
      %v2849 = vpop.permute.xlu0 %2848
      %2850 = vrot.lane.b32.xlu0 %v2631, 125
      %v2851 = vpop.permute.xlu0 %2850
      %v2852 = vsel %vm1535, %v2645, %v2849
      %v2853 = vsel %vm1535, %v2849, %v2851
      %2854 = vrot.lane.b32.xlu0 %v2630, 122
      %v2855 = vpop.permute.xlu0 %2854
      %2856 = vrot.lane.b32.xlu0 %v2631, 122
      %v2857 = vpop.permute.xlu0 %2856
      %v2858 = vsel %vm1544, %v2653, %v2855
      %v2859 = vsel %vm1544, %v2855, %v2857
      %2860 = vrot.lane.b32.xlu0 %v2630, 56
      %v2861 = vpop.permute.xlu0 %2860
      %2862 = vrot.lane.b32.xlu0 %v2631, 56
      %v2863 = vpop.permute.xlu0 %2862
      %v2864 = vsel %vm1553, %v2661, %v2861
      %v2865 = vsel %vm1553, %v2861, %v2863
      %2866 = vrot.lane.b32.xlu0 %v2630, 53
      %v2867 = vpop.permute.xlu0 %2866
      %2868 = vrot.lane.b32.xlu0 %v2631, 53
      %v2869 = vpop.permute.xlu0 %2868
      %v2870 = vsel %vm1560, %v2867, %v2869
      %2872 = vrot.lane.b32.xlu0 %v2631, 50
      %v2873 = vpop.permute.xlu0 %2872
      %2874 = vrot.lane.b32.xlu0 %v2632, 50
      %v2875 = vpop.permute.xlu0 %2874
      %v2876 = vsel %vm1097, %v2675, %v2873
      %v2877 = vsel %vm1097, %v2873, %v2875
      %2878 = vrot.lane.b32.xlu0 %v2631, 112
      %v2879 = vpop.permute.xlu0 %2878
      %2880 = vrot.lane.b32.xlu0 %v2632, 112
      %v2881 = vpop.permute.xlu0 %2880
      %v2882 = vsel %vm1577, %v2683, %v2879
      %v2883 = vsel %vm1577, %v2879, %v2881
      %2884 = vrot.lane.b32.xlu0 %v2631, 109
      %v2885 = vpop.permute.xlu0 %2884
      %2886 = vrot.lane.b32.xlu0 %v2632, 109
      %v2887 = vpop.permute.xlu0 %2886
      %v2888 = vsel %vm1586, %v2691, %v2885
      %v2889 = vsel %vm1586, %v2885, %v2887
      %2890 = vrot.lane.b32.xlu0 %v2631, 106
      %v2891 = vpop.permute.xlu0 %2890
      %2892 = vrot.lane.b32.xlu0 %v2632, 106
      %v2893 = vpop.permute.xlu0 %2892
      %v2894 = vsel %vm1595, %v2699, %v2891
      %v2895 = vsel %vm1595, %v2891, %v2893
      %2896 = vrot.lane.b32.xlu0 %v2630, 75
      %v2897 = vpop.permute.xlu0 %2896
      %2898 = vrot.lane.b32.xlu0 %v2631, 75
      %v2899 = vpop.permute.xlu0 %2898
      %2900 = vrot.lane.b32.xlu0 %v2852, 75
      %v2901 = vpop.permute.xlu0 %2900
      %2902 = vrot.lane.b32.xlu0 %v2853, 75
      %v2903 = vpop.permute.xlu0 %2902
      %2904 = vrot.lane.b32.xlu0 %v2851, 75
      %v2905 = vpop.permute.xlu0 %2904
      %2906 = vrot.lane.b32.xlu0 %v2858, 75
      %v2907 = vpop.permute.xlu0 %2906
      %2908 = vrot.lane.b32.xlu0 %v2859, 75
      %v2909 = vpop.permute.xlu0 %2908
      %2910 = vrot.lane.b32.xlu0 %v2857, 75
      %v2911 = vpop.permute.xlu0 %2910
      %2912 = vrot.lane.b32.xlu0 %v2864, 75
      %v2913 = vpop.permute.xlu0 %2912
      %2914 = vrot.lane.b32.xlu0 %v2865, 75
      %v2915 = vpop.permute.xlu0 %2914
      %2916 = vrot.lane.b32.xlu0 %v2863, 75
      %v2917 = vpop.permute.xlu0 %2916
      %2918 = vrot.lane.b32.xlu0 %v2867, 75
      %v2919 = vpop.permute.xlu0 %2918
      %2920 = vrot.lane.b32.xlu0 %v2870, 75
      %v2921 = vpop.permute.xlu0 %2920
      %2922 = vrot.lane.b32.xlu0 %v2869, 75
      %v2923 = vpop.permute.xlu0 %2922
      %2924 = vrot.lane.b32.xlu0 %v2675, 75
      %v2925 = vpop.permute.xlu0 %2924
      %2926 = vrot.lane.b32.xlu0 %v2876, 75
      %v2927 = vpop.permute.xlu0 %2926
      %2928 = vrot.lane.b32.xlu0 %v2877, 75
      %v2929 = vpop.permute.xlu0 %2928
      %2930 = vrot.lane.b32.xlu0 %v2882, 75
      %v2931 = vpop.permute.xlu0 %2930
      %2932 = vrot.lane.b32.xlu0 %v2883, 75
      %v2933 = vpop.permute.xlu0 %2932
      %2934 = vrot.lane.b32.xlu0 %v2881, 75
      %v2935 = vpop.permute.xlu0 %2934
      %2936 = vrot.lane.b32.xlu0 %v2888, 75
      %v2937 = vpop.permute.xlu0 %2936
      %2938 = vrot.lane.b32.xlu0 %v2889, 75
      %v2939 = vpop.permute.xlu0 %2938
      %2940 = vrot.lane.b32.xlu0 %v2887, 75
      %v2941 = vpop.permute.xlu0 %2940
      %2942 = vrot.lane.b32.xlu0 %v2894, 75
      %v2943 = vpop.permute.xlu0 %2942
      %2944 = vrot.lane.b32.xlu0 %v2895, 75
      %v2945 = vpop.permute.xlu0 %2944
      %2946 = vrot.lane.b32.xlu0 %v2893, 75
      %v2947 = vpop.permute.xlu0 %2946
      %v2948 = vsel %vm1661, %v2716, %v2897
      %v2949 = vsel %vm1661, %v2897, %v2899
      %v2950 = vsel %vm1661, %v2901, %v2903
      %v2951 = vsel %vm1661, %v2903, %v2905
      %v2952 = vsel %vm1661, %v2907, %v2909
      %v2953 = vsel %vm1661, %v2909, %v2911
      %v2954 = vsel %vm1661, %v2913, %v2915
      %v2955 = vsel %vm1661, %v2915, %v2917
      %v2956 = vsel %vm1661, %v2919, %v2921
      %v2957 = vsel %vm1661, %v2921, %v2923
      %v2958 = vsel %vm1661, %v2925, %v2927
      %v2959 = vsel %vm1661, %v2927, %v2929
      %v2960 = vsel %vm1661, %v2931, %v2933
      %v2961 = vsel %vm1661, %v2933, %v2935
      %v2962 = vsel %vm1661, %v2937, %v2939
      %v2963 = vsel %vm1661, %v2939, %v2941
      %v2964 = vsel %vm1661, %v2943, %v2945
      %v2965 = vsel %vm1661, %v2945, %v2947
      %2984 = vmatprep.subr.bf16.mxu0 %v2963
      %2985 = vmatpush1.bf16.msra.mxu0 %v2962
      %2986 = vmatprep.subr.bf16.mxu0 %v2961
      %2987 = vmatpush1.bf16.msra.mxu0 %v2960
      %2988 = vmatprep.subr.bf16.mxu0 %v2959
      %2989 = vmatpush1.bf16.msra.mxu0 %v2958
      %2990 = vmatprep.subr.bf16.mxu0 %v2957
      %2991 = vmatpush1.bf16.msra.mxu0 %v2956
      %2992 = vmatprep.subr.bf16.mxu0 %v2955
      %2993 = vmatpush1.bf16.msra.mxu0 %v2954
      %2994 = vmatprep.subr.bf16.mxu0 %v2953
      %2995 = vmatpush1.bf16.msra.mxu0 %v2952
      %2996 = vmatprep.subr.bf16.mxu0 %v2951
      %2997 = vmatpush1.bf16.msra.mxu0 %v2950
      %2998 = vmatprep.subr.bf16.mxu0 %v2949
      %2999 = vmatpush1.bf16.msra.mxu0 %v2948
      %3000 = vmatprep.subr.bf16.mxu0 0
      %3001 = vmatpush2.bf16.msra.mxu0 0
      %3002 = vmatprep.subr.bf16.mxu0 0
      %3003 = vmatpush2.bf16.msra.mxu0 0
      %3004 = vmatprep.subr.bf16.mxu0 0
      %3005 = vmatpush2.bf16.msra.mxu0 0
      %3006 = vmatprep.subr.bf16.mxu0 0
      %3007 = vmatpush2.bf16.msra.mxu0 0
      %3008 = vmatprep.subr.bf16.mxu0 0
      %3009 = vmatpush2.bf16.msra.mxu0 0
      %3010 = vmatprep.subr.bf16.mxu0 0
      %3011 = vmatpush2.bf16.msra.mxu0 0
      %3012 = vmatprep.subr.bf16.mxu0 0
      %3013 = vmatpush2.bf16.msra.mxu0 0
      %3014 = vmatprep.subr.bf16.mxu0 %v2965
      %3015 = vmatpush2.bf16.msra.mxu0 %v2964
      %3016 = vmatprep.mubr.bf16.mxu0 %v2802
      %3017 = vmatmul.mubr.bf16.gmra.mxu0 %v2708
      %v3018 = vpop.f32.mrf.mxu0
      %v3019 = vadd.f32 0.0, %v3018
      %v3020 = vpop.f32.mrf.mxu0
      %v3021 = vadd.f32 0.0, %v3020
      %v3022 = vpop.f32.mrf.mxu0
      %v3023 = vadd.f32 0.0, %v3022
      %v3024 = vpop.f32.mrf.mxu0
      %v3025 = vadd.f32 0.0, %v3024
      %3026 = vdwg.mxu0
      %3027 = vrot.lane.b32.xlu0 %v2632, 56
      %v3028 = vpop.permute.xlu0 %3027
      %v3029 = vsel %vm1553, %v2863, %v3028
      %3030 = vrot.lane.b32.xlu0 %v2632, 53
      %v3031 = vpop.permute.xlu0 %3030
      %3033 = vrot.lane.b32.xlu0 %v2633, 112
      %v3034 = vpop.permute.xlu0 %3033
      %v3035 = vsel %vm1577, %v2881, %v3034
      %3036 = vrot.lane.b32.xlu0 %v2633, 109
      %v3037 = vpop.permute.xlu0 %3036
      %v3038 = vsel %vm1586, %v2887, %v3037
      %3039 = vrot.lane.b32.xlu0 %v2633, 106
      %v3040 = vpop.permute.xlu0 %3039
      %v3041 = vsel %vm1595, %v2893, %v3040
      %3042 = vrot.lane.b32.xlu0 %v3029, 75
      %v3043 = vpop.permute.xlu0 %3042
      %3044 = vrot.lane.b32.xlu0 %v3031, 75
      %v3045 = vpop.permute.xlu0 %3044
      %3046 = vrot.lane.b32.xlu0 %v2875, 75
      %v3047 = vpop.permute.xlu0 %3046
      %3048 = vrot.lane.b32.xlu0 %v3035, 75
      %v3049 = vpop.permute.xlu0 %3048
      %3050 = vrot.lane.b32.xlu0 %v3038, 75
      %v3051 = vpop.permute.xlu0 %3050
      %3052 = vrot.lane.b32.xlu0 %v3041, 75
      %v3053 = vpop.permute.xlu0 %3052
      %3063 = vmatprep.subr.bf16.mxu0 0
      %3064 = vmatpush1.bf16.msra.mxu0 %v3051
      %3065 = vmatprep.subr.bf16.mxu0 0
      %3066 = vmatpush1.bf16.msra.mxu0 %v3049
      %3067 = vmatprep.subr.bf16.mxu0 0
      %3068 = vmatpush1.bf16.msra.mxu0 %v3047
      %3069 = vmatprep.subr.bf16.mxu0 0
      %3070 = vmatpush1.bf16.msra.mxu0 %v3045
      %3071 = vmatprep.subr.bf16.mxu0 0
      %3072 = vmatpush1.bf16.msra.mxu0 %v3043
      %3073 = vmatprep.subr.bf16.mxu0 0
      %3074 = vmatpush1.bf16.msra.mxu0 %v2911
      %3075 = vmatprep.subr.bf16.mxu0 0
      %3076 = vmatpush1.bf16.msra.mxu0 %v2905
      %3077 = vmatprep.subr.bf16.mxu0 0
      %3078 = vmatpush1.bf16.msra.mxu0 %v2899
      %3079 = vmatprep.subr.bf16.mxu0 0
      %3080 = vmatpush2.bf16.msra.mxu0 0
      %3081 = vmatprep.subr.bf16.mxu0 0
      %3082 = vmatpush2.bf16.msra.mxu0 0
      %3083 = vmatprep.subr.bf16.mxu0 0
      %3084 = vmatpush2.bf16.msra.mxu0 0
      %3085 = vmatprep.subr.bf16.mxu0 0
      %3086 = vmatpush2.bf16.msra.mxu0 0
      %3087 = vmatprep.subr.bf16.mxu0 0
      %3088 = vmatpush2.bf16.msra.mxu0 0
      %3089 = vmatprep.subr.bf16.mxu0 0
      %3090 = vmatpush2.bf16.msra.mxu0 0
      %3091 = vmatprep.subr.bf16.mxu0 0
      %3092 = vmatpush2.bf16.msra.mxu0 0
      %3093 = vmatprep.subr.bf16.mxu0 0
      %3094 = vmatpush2.bf16.msra.mxu0 %v3053
      %3095 = vmatprep.mubr.bf16.mxu0 %v2802
      %3096 = vmatmul.mubr.bf16.gmra.mxu0 %v2708
      %v3097 = vpop.f32.mrf.mxu0
      %v3098 = vadd.f32 0.0, %v3097
      %v3099 = vpop.f32.mrf.mxu0
      %v3100 = vpop.f32.mrf.mxu0
      %v3101 = vadd.f32 0.0, %v3100
      %v3102 = vpop.f32.mrf.mxu0
      %3103 = vdwg.mxu0
      %s3104 = scalar_lea.vmem %s2, 64
      %v3105 = vld [vmem:[%s3104] sm:$0xff]
      %v3106 = vld [vmem:[%s3104 + $0x8] sm:$0xff]
      %3108 = vset.pattern.permute.xlu0 0
      %3109 = vperm.xlu0 %3108, %v3105
      %v3110 = vpop.permute.xlu0 %3109
      %3113 = vset.pattern.permute.xlu0 0
      %3114 = vperm.xlu0 %3113, %v3106
      %v3115 = vpop.permute.xlu0 %3114
      %v3117 = vadd.f32 %v2839, %v3110
      %v3118 = vadd.f32 %v2841, %v3110
      %v3119 = vadd.f32 %v3019, %v3110
      %v3120 = vadd.f32 %v3021, %v3110
      %v3121 = vadd.f32 %v3098, %v3110
      %v3122 = vadd.f32 %v2843, %v3115
      %v3123 = vadd.f32 %v2845, %v3115
      %v3124 = vadd.f32 %v3023, %v3115
      %v3125 = vadd.f32 %v3025, %v3115
      %v3126 = vadd.f32 %v3101, %v3115
      %v3127 = vmax.f32 %v3117, 0.0
      %v3128 = vmax.f32 %v3118, 0.0
      %v3129 = vmax.f32 %v3119, 0.0
      %v3130 = vmax.f32 %v3120, 0.0
      %v3131 = vmax.f32 %v3121, 0.0
      %v3132 = vmax.f32 %v3122, 0.0
      %v3133 = vmax.f32 %v3123, 0.0
      %v3134 = vmax.f32 %v3124, 0.0
      %v3135 = vmax.f32 %v3125, 0.0
      %v3136 = vmax.f32 %v3126, 0.0
      %v3137 = vmul.f32 %v3127, %v900
      %v3138 = vmul.f32 %v3128, %v904
      %v3139 = vmul.f32 %v3129, %v908
      %v3140 = vmul.f32 %v3130, %v912
      %v3141 = vmul.f32 %v3131, %v916
      %v3142 = vmul.f32 %v3132, %v900
      %v3143 = vmul.f32 %v3133, %v904
      %v3144 = vmul.f32 %v3134, %v908
      %v3145 = vmul.f32 %v3135, %v912
      %v3146 = vmul.f32 %v3136, %v916
      %v3147 = vld [vmem:[#allocation4 + $0x8] sm:$0xff]
      %v3148 = vld [vmem:[#allocation4 + $0x10] sm:$0xff]
      %v3149 = vld [vmem:[#allocation4 + $0x18] sm:$0xff]
      %v3150 = vld [vmem:[#allocation4 + $0x20] sm:$0xff]
      %v3151 = vld [vmem:[#allocation4 + $0x28] sm:$0xff]
      %v3152 = vld [vmem:[#allocation4 + $0x40] sm:$0xff]
      %v3153 = vld [vmem:[#allocation4 + $0x48] sm:$0xff]
      %v3154 = vld [vmem:[#allocation4 + $0x50] sm:$0xff]
      %v3155 = vld [vmem:[#allocation4 + $0x58] sm:$0xff]
      %v3156 = vld [vmem:[#allocation4 + $0x60] sm:$0xff]
      %v3157 = vadd.f32 %v3137, %v3147
      %v3158 = vadd.f32 %v3138, %v3148
      %v3159 = vadd.f32 %v3139, %v3149
      %v3160 = vadd.f32 %v3140, %v3150
      %v3161 = vadd.f32 %v3141, %v3151
      %v3162 = vadd.f32 %v3142, %v3152
      %v3163 = vadd.f32 %v3143, %v3153
      %v3164 = vadd.f32 %v3144, %v3154
      %v3165 = vadd.f32 %v3145, %v3155
      %v3166 = vadd.f32 %v3146, %v3156
      %3167 = vst [vmem:[#allocation7 + $0x8] sm:$0xff] %v3157
      %3168 = vst [vmem:[#allocation7 + $0x10] sm:$0xff] %v3158
      %3169 = vst [vmem:[#allocation7 + $0x18] sm:$0xff] %v3159
      %3170 = vst [vmem:[#allocation7 + $0x20] sm:$0xff] %v3160
      %3171 = vst.msk [vmem:[#allocation7 + $0x28] sm:$0xff] %vm936, %v3161
      %3172 = vst [vmem:[#allocation7 + $0x40] sm:$0xff] %v3162
      %3173 = vst [vmem:[#allocation7 + $0x48] sm:$0xff] %v3163
      %3174 = vst [vmem:[#allocation7 + $0x50] sm:$0xff] %v3164
      %3175 = vst [vmem:[#allocation7 + $0x58] sm:$0xff] %v3165
      %3176 = vst.msk [vmem:[#allocation7 + $0x60] sm:$0xff] %vm936, %v3166
      %v3177 = vld [vmem:[#allocation7] sm:$0xff]
      %v3178 = vld [vmem:[#allocation7 + $0x8] sm:$0xff]
      %v3179 = vld [vmem:[#allocation7 + $0x10] sm:$0xff]
      %v3180 = vld [vmem:[#allocation7 + $0x18] sm:$0xff]
      %v3181 = vld [vmem:[#allocation7 + $0x20] sm:$0xff]
      %v3182 = vld [vmem:[#allocation7 + $0x28] sm:$0xff]
      %v3183 = vld [vmem:[#allocation7 + $0x38] sm:$0xff]
      %v3184 = vld [vmem:[#allocation7 + $0x40] sm:$0xff]
      %v3185 = vld [vmem:[#allocation7 + $0x48] sm:$0xff]
      %v3186 = vld [vmem:[#allocation7 + $0x50] sm:$0xff]
      %v3187 = vld [vmem:[#allocation7 + $0x58] sm:$0xff]
      %v3188 = vld [vmem:[#allocation7 + $0x60] sm:$0xff]
      %v3189 = vpack.c.bf16 %v3183, %v3177
      %v3190 = vpack.c.bf16 %v3184, %v3178
      %v3191 = vpack.c.bf16 %v3185, %v3179
      %v3192 = vpack.c.bf16 %v3186, %v3180
      %v3193 = vpack.c.bf16 %v3187, %v3181
      %v3194 = vpack.c.bf16 %v3188, %v3182
      %s3195 = scalar_lea.vmem %s1, 80
      %v3196 = vld [vmem:[%s3195] sm:$0xff]
      %v3197 = vld [vmem:[%s3195 + $0x8] sm:$0xff]
      %3201 = vrot.lane.b32.xlu0 %v3189, 126
      %v3202 = vpop.permute.xlu0 %3201
      %3203 = vrot.lane.b32.xlu0 %v3190, 126
      %v3204 = vpop.permute.xlu0 %3203
      %3205 = vrot.lane.b32.xlu0 %v3191, 126
      %v3206 = vpop.permute.xlu0 %3205
      %v3207 = vsel %vm393, %v3202, %v3204
      %v3208 = vsel %vm393, %v3204, %v3206
      %3209 = vrot.lane.b32.xlu0 %v3189, 124
      %v3210 = vpop.permute.xlu0 %3209
      %3211 = vrot.lane.b32.xlu0 %v3190, 124
      %v3212 = vpop.permute.xlu0 %3211
      %3213 = vrot.lane.b32.xlu0 %v3191, 124
      %v3214 = vpop.permute.xlu0 %3213
      %v3215 = vsel %vm981, %v3210, %v3212
      %v3216 = vsel %vm981, %v3212, %v3214
      %3217 = vrot.lane.b32.xlu0 %v3189, 80
      %v3218 = vpop.permute.xlu0 %3217
      %3219 = vrot.lane.b32.xlu0 %v3190, 80
      %v3220 = vpop.permute.xlu0 %3219
      %3221 = vrot.lane.b32.xlu0 %v3191, 80
      %v3222 = vpop.permute.xlu0 %3221
      %v3223 = vsel %vm427, %v3218, %v3220
      %v3224 = vsel %vm427, %v3220, %v3222
      %3225 = vrot.lane.b32.xlu0 %v3190, 78
      %v3226 = vpop.permute.xlu0 %3225
      %3227 = vrot.lane.b32.xlu0 %v3191, 78
      %v3228 = vpop.permute.xlu0 %3227
      %v3229 = vsel %vm445, %v3226, %v3228
      %3231 = vrot.lane.b32.xlu0 %v3190, 76
      %v3232 = vpop.permute.xlu0 %3231
      %3233 = vrot.lane.b32.xlu0 %v3191, 76
      %v3234 = vpop.permute.xlu0 %3233
      %3235 = vrot.lane.b32.xlu0 %v3192, 76
      %v3236 = vpop.permute.xlu0 %3235
      %v3237 = vsel %vm1004, %v3232, %v3234
      %v3238 = vsel %vm1004, %v3234, %v3236
      %3239 = vrot.lane.b32.xlu0 %v3190, 32
      %v3240 = vpop.permute.xlu0 %3239
      %3241 = vrot.lane.b32.xlu0 %v3191, 32
      %v3242 = vpop.permute.xlu0 %3241
      %3243 = vrot.lane.b32.xlu0 %v3192, 32
      %v3244 = vpop.permute.xlu0 %3243
      %v3245 = vsel %vm1013, %v3240, %v3242
      %v3246 = vsel %vm1013, %v3242, %v3244
      %3247 = vrot.lane.b32.xlu0 %v3190, 30
      %v3248 = vpop.permute.xlu0 %3247
      %3249 = vrot.lane.b32.xlu0 %v3191, 30
      %v3250 = vpop.permute.xlu0 %3249
      %3251 = vrot.lane.b32.xlu0 %v3192, 30
      %v3252 = vpop.permute.xlu0 %3251
      %v3253 = vsel %vm1022, %v3248, %v3250
      %v3254 = vsel %vm1022, %v3250, %v3252
      %3255 = vrot.lane.b32.xlu0 %v3190, 28
      %v3256 = vpop.permute.xlu0 %3255
      %3257 = vrot.lane.b32.xlu0 %v3191, 28
      %v3258 = vpop.permute.xlu0 %3257
      %3259 = vrot.lane.b32.xlu0 %v3192, 28
      %v3260 = vpop.permute.xlu0 %3259
      %v3261 = vsel %vm1031, %v3256, %v3258
      %v3262 = vsel %vm1031, %v3258, %v3260
      %v3265 = vunpack.c.l.b16 %v3196
      %v3266 = vunpack.c.h.b16 %v3196
      %v3267 = vunpack.c.l.b16 %v3197
      %v3268 = vunpack.c.h.b16 %v3197
      %v3269 = vpack.c.b16 %v3267, %v3265
      %v3270 = vpack.c.b16 %v3268, %v3266
      %3272 = vrot.lane.b32.xlu0 %v3189, 50
      %v3273 = vpop.permute.xlu0 %3272
      %3274 = vrot.lane.b32.xlu0 %v3190, 50
      %v3275 = vpop.permute.xlu0 %3274
      %3276 = vrot.lane.b32.xlu0 %v3191, 50
      %v3277 = vpop.permute.xlu0 %3276
      %3278 = vrot.lane.b32.xlu0 %v3207, 50
      %v3279 = vpop.permute.xlu0 %3278
      %3280 = vrot.lane.b32.xlu0 %v3208, 50
      %v3281 = vpop.permute.xlu0 %3280
      %3282 = vrot.lane.b32.xlu0 %v3206, 50
      %v3283 = vpop.permute.xlu0 %3282
      %3284 = vrot.lane.b32.xlu0 %v3215, 50
      %v3285 = vpop.permute.xlu0 %3284
      %3286 = vrot.lane.b32.xlu0 %v3216, 50
      %v3287 = vpop.permute.xlu0 %3286
      %3288 = vrot.lane.b32.xlu0 %v3214, 50
      %v3289 = vpop.permute.xlu0 %3288
      %3290 = vrot.lane.b32.xlu0 %v3223, 50
      %v3291 = vpop.permute.xlu0 %3290
      %3292 = vrot.lane.b32.xlu0 %v3224, 50
      %v3293 = vpop.permute.xlu0 %3292
      %3294 = vrot.lane.b32.xlu0 %v3222, 50
      %v3295 = vpop.permute.xlu0 %3294
      %3296 = vrot.lane.b32.xlu0 %v3226, 50
      %v3297 = vpop.permute.xlu0 %3296
      %3298 = vrot.lane.b32.xlu0 %v3229, 50
      %v3299 = vpop.permute.xlu0 %3298
      %3300 = vrot.lane.b32.xlu0 %v3228, 50
      %v3301 = vpop.permute.xlu0 %3300
      %3302 = vrot.lane.b32.xlu0 %v3232, 50
      %v3303 = vpop.permute.xlu0 %3302
      %3304 = vrot.lane.b32.xlu0 %v3237, 50
      %v3305 = vpop.permute.xlu0 %3304
      %3306 = vrot.lane.b32.xlu0 %v3238, 50
      %v3307 = vpop.permute.xlu0 %3306
      %3308 = vrot.lane.b32.xlu0 %v3240, 50
      %v3309 = vpop.permute.xlu0 %3308
      %3310 = vrot.lane.b32.xlu0 %v3245, 50
      %v3311 = vpop.permute.xlu0 %3310
      %3312 = vrot.lane.b32.xlu0 %v3246, 50
      %v3313 = vpop.permute.xlu0 %3312
      %3314 = vrot.lane.b32.xlu0 %v3248, 50
      %v3315 = vpop.permute.xlu0 %3314
      %3316 = vrot.lane.b32.xlu0 %v3253, 50
      %v3317 = vpop.permute.xlu0 %3316
      %3318 = vrot.lane.b32.xlu0 %v3254, 50
      %v3319 = vpop.permute.xlu0 %3318
      %3320 = vrot.lane.b32.xlu0 %v3256, 50
      %v3321 = vpop.permute.xlu0 %3320
      %3322 = vrot.lane.b32.xlu0 %v3261, 50
      %v3323 = vpop.permute.xlu0 %3322
      %3324 = vrot.lane.b32.xlu0 %v3262, 50
      %v3325 = vpop.permute.xlu0 %3324
      %v3326 = vsel %vm1097, %v3273, %v3275
      %v3327 = vsel %vm1097, %v3275, %v3277
      %v3328 = vsel %vm1097, %v3279, %v3281
      %v3329 = vsel %vm1097, %v3281, %v3283
      %v3330 = vsel %vm1097, %v3285, %v3287
      %v3331 = vsel %vm1097, %v3287, %v3289
      %v3332 = vsel %vm1097, %v3291, %v3293
      %v3333 = vsel %vm1097, %v3293, %v3295
      %v3334 = vsel %vm1097, %v3297, %v3299
      %v3335 = vsel %vm1097, %v3299, %v3301
      %v3336 = vsel %vm1097, %v3303, %v3305
      %v3337 = vsel %vm1097, %v3305, %v3307
      %v3338 = vsel %vm1097, %v3309, %v3311
      %v3339 = vsel %vm1097, %v3311, %v3313
      %v3340 = vsel %vm1097, %v3315, %v3317
      %v3341 = vsel %vm1097, %v3317, %v3319
      %v3342 = vsel %vm1097, %v3321, %v3323
      %v3343 = vsel %vm1097, %v3323, %v3325
      %v3363 = vsel %vm548, %v3270, 0
      %3365 = vmatprep.subr.bf16.mxu0 %v3341
      %3366 = vmatpush1.bf16.msra.mxu0 %v3340
      %3367 = vmatprep.subr.bf16.mxu0 %v3339
      %3368 = vmatpush1.bf16.msra.mxu0 %v3338
      %3369 = vmatprep.subr.bf16.mxu0 %v3337
      %3370 = vmatpush1.bf16.msra.mxu0 %v3336
      %3371 = vmatprep.subr.bf16.mxu0 %v3335
      %3372 = vmatpush1.bf16.msra.mxu0 %v3334
      %3373 = vmatprep.subr.bf16.mxu0 %v3333
      %3374 = vmatpush1.bf16.msra.mxu0 %v3332
      %3375 = vmatprep.subr.bf16.mxu0 %v3331
      %3376 = vmatpush1.bf16.msra.mxu0 %v3330
      %3377 = vmatprep.subr.bf16.mxu0 %v3329
      %3378 = vmatpush1.bf16.msra.mxu0 %v3328
      %3379 = vmatprep.subr.bf16.mxu0 %v3327
      %3380 = vmatpush1.bf16.msra.mxu0 %v3326
      %3381 = vmatprep.subr.bf16.mxu0 0
      %3382 = vmatpush2.bf16.msra.mxu0 0
      %3383 = vmatprep.subr.bf16.mxu0 0
      %3384 = vmatpush2.bf16.msra.mxu0 0
      %3385 = vmatprep.subr.bf16.mxu0 0
      %3386 = vmatpush2.bf16.msra.mxu0 0
      %3387 = vmatprep.subr.bf16.mxu0 0
      %3388 = vmatpush2.bf16.msra.mxu0 0
      %3389 = vmatprep.subr.bf16.mxu0 0
      %3390 = vmatpush2.bf16.msra.mxu0 0
      %3391 = vmatprep.subr.bf16.mxu0 0
      %3392 = vmatpush2.bf16.msra.mxu0 0
      %3393 = vmatprep.subr.bf16.mxu0 0
      %3394 = vmatpush2.bf16.msra.mxu0 0
      %3395 = vmatprep.subr.bf16.mxu0 %v3343
      %3396 = vmatpush2.bf16.msra.mxu0 %v3342
      %3397 = vmatprep.mubr.bf16.mxu0 %v3363
      %3398 = vmatmul.mubr.bf16.gmra.mxu0 %v3269
      %v3399 = vpop.f32.mrf.mxu0
      %v3400 = vadd.f32 0.0, %v3399
      %v3401 = vpop.f32.mrf.mxu0
      %v3402 = vadd.f32 0.0, %v3401
      %v3403 = vpop.f32.mrf.mxu0
      %v3404 = vadd.f32 0.0, %v3403
      %v3405 = vpop.f32.mrf.mxu0
      %v3406 = vadd.f32 0.0, %v3405
      %3407 = vdwg.mxu0
      %3409 = vrot.lane.b32.xlu0 %v3192, 126
      %v3410 = vpop.permute.xlu0 %3409
      %3411 = vrot.lane.b32.xlu0 %v3193, 126
      %v3412 = vpop.permute.xlu0 %3411
      %v3413 = vsel %vm393, %v3206, %v3410
      %v3414 = vsel %vm393, %v3410, %v3412
      %3415 = vrot.lane.b32.xlu0 %v3192, 124
      %v3416 = vpop.permute.xlu0 %3415
      %3417 = vrot.lane.b32.xlu0 %v3193, 124
      %v3418 = vpop.permute.xlu0 %3417
      %v3419 = vsel %vm981, %v3214, %v3416
      %v3420 = vsel %vm981, %v3416, %v3418
      %3421 = vrot.lane.b32.xlu0 %v3192, 80
      %v3422 = vpop.permute.xlu0 %3421
      %3423 = vrot.lane.b32.xlu0 %v3193, 80
      %v3424 = vpop.permute.xlu0 %3423
      %v3425 = vsel %vm427, %v3222, %v3422
      %v3426 = vsel %vm427, %v3422, %v3424
      %3427 = vrot.lane.b32.xlu0 %v3192, 78
      %v3428 = vpop.permute.xlu0 %3427
      %3429 = vrot.lane.b32.xlu0 %v3193, 78
      %v3430 = vpop.permute.xlu0 %3429
      %v3431 = vsel %vm445, %v3428, %v3430
      %3433 = vrot.lane.b32.xlu0 %v3193, 76
      %v3434 = vpop.permute.xlu0 %3433
      %3435 = vrot.lane.b32.xlu0 %v3194, 76
      %v3436 = vpop.permute.xlu0 %3435
      %v3437 = vsel %vm1004, %v3236, %v3434
      %v3438 = vsel %vm1004, %v3434, %v3436
      %3439 = vrot.lane.b32.xlu0 %v3193, 32
      %v3440 = vpop.permute.xlu0 %3439
      %3441 = vrot.lane.b32.xlu0 %v3194, 32
      %v3442 = vpop.permute.xlu0 %3441
      %v3443 = vsel %vm1013, %v3244, %v3440
      %v3444 = vsel %vm1013, %v3440, %v3442
      %3445 = vrot.lane.b32.xlu0 %v3193, 30
      %v3446 = vpop.permute.xlu0 %3445
      %3447 = vrot.lane.b32.xlu0 %v3194, 30
      %v3448 = vpop.permute.xlu0 %3447
      %v3449 = vsel %vm1022, %v3252, %v3446
      %v3450 = vsel %vm1022, %v3446, %v3448
      %3451 = vrot.lane.b32.xlu0 %v3193, 28
      %v3452 = vpop.permute.xlu0 %3451
      %3453 = vrot.lane.b32.xlu0 %v3194, 28
      %v3454 = vpop.permute.xlu0 %3453
      %v3455 = vsel %vm1031, %v3260, %v3452
      %v3456 = vsel %vm1031, %v3452, %v3454
      %3457 = vrot.lane.b32.xlu0 %v3192, 50
      %v3458 = vpop.permute.xlu0 %3457
      %3459 = vrot.lane.b32.xlu0 %v3193, 50
      %v3460 = vpop.permute.xlu0 %3459
      %3461 = vrot.lane.b32.xlu0 %v3413, 50
      %v3462 = vpop.permute.xlu0 %3461
      %3463 = vrot.lane.b32.xlu0 %v3414, 50
      %v3464 = vpop.permute.xlu0 %3463
      %3465 = vrot.lane.b32.xlu0 %v3412, 50
      %v3466 = vpop.permute.xlu0 %3465
      %3467 = vrot.lane.b32.xlu0 %v3419, 50
      %v3468 = vpop.permute.xlu0 %3467
      %3469 = vrot.lane.b32.xlu0 %v3420, 50
      %v3470 = vpop.permute.xlu0 %3469
      %3471 = vrot.lane.b32.xlu0 %v3418, 50
      %v3472 = vpop.permute.xlu0 %3471
      %3473 = vrot.lane.b32.xlu0 %v3425, 50
      %v3474 = vpop.permute.xlu0 %3473
      %3475 = vrot.lane.b32.xlu0 %v3426, 50
      %v3476 = vpop.permute.xlu0 %3475
      %3477 = vrot.lane.b32.xlu0 %v3424, 50
      %v3478 = vpop.permute.xlu0 %3477
      %3479 = vrot.lane.b32.xlu0 %v3428, 50
      %v3480 = vpop.permute.xlu0 %3479
      %3481 = vrot.lane.b32.xlu0 %v3431, 50
      %v3482 = vpop.permute.xlu0 %3481
      %3483 = vrot.lane.b32.xlu0 %v3430, 50
      %v3484 = vpop.permute.xlu0 %3483
      %3485 = vrot.lane.b32.xlu0 %v3236, 50
      %v3486 = vpop.permute.xlu0 %3485
      %3487 = vrot.lane.b32.xlu0 %v3437, 50
      %v3488 = vpop.permute.xlu0 %3487
      %3489 = vrot.lane.b32.xlu0 %v3438, 50
      %v3490 = vpop.permute.xlu0 %3489
      %3491 = vrot.lane.b32.xlu0 %v3244, 50
      %v3492 = vpop.permute.xlu0 %3491
      %3493 = vrot.lane.b32.xlu0 %v3443, 50
      %v3494 = vpop.permute.xlu0 %3493
      %3495 = vrot.lane.b32.xlu0 %v3444, 50
      %v3496 = vpop.permute.xlu0 %3495
      %3497 = vrot.lane.b32.xlu0 %v3252, 50
      %v3498 = vpop.permute.xlu0 %3497
      %3499 = vrot.lane.b32.xlu0 %v3449, 50
      %v3500 = vpop.permute.xlu0 %3499
      %3501 = vrot.lane.b32.xlu0 %v3450, 50
      %v3502 = vpop.permute.xlu0 %3501
      %3503 = vrot.lane.b32.xlu0 %v3260, 50
      %v3504 = vpop.permute.xlu0 %3503
      %3505 = vrot.lane.b32.xlu0 %v3455, 50
      %v3506 = vpop.permute.xlu0 %3505
      %3507 = vrot.lane.b32.xlu0 %v3456, 50
      %v3508 = vpop.permute.xlu0 %3507
      %v3509 = vsel %vm1097, %v3277, %v3458
      %v3510 = vsel %vm1097, %v3458, %v3460
      %v3511 = vsel %vm1097, %v3462, %v3464
      %v3512 = vsel %vm1097, %v3464, %v3466
      %v3513 = vsel %vm1097, %v3468, %v3470
      %v3514 = vsel %vm1097, %v3470, %v3472
      %v3515 = vsel %vm1097, %v3474, %v3476
      %v3516 = vsel %vm1097, %v3476, %v3478
      %v3517 = vsel %vm1097, %v3480, %v3482
      %v3518 = vsel %vm1097, %v3482, %v3484
      %v3519 = vsel %vm1097, %v3486, %v3488
      %v3520 = vsel %vm1097, %v3488, %v3490
      %v3521 = vsel %vm1097, %v3492, %v3494
      %v3522 = vsel %vm1097, %v3494, %v3496
      %v3523 = vsel %vm1097, %v3498, %v3500
      %v3524 = vsel %vm1097, %v3500, %v3502
      %v3525 = vsel %vm1097, %v3504, %v3506
      %v3526 = vsel %vm1097, %v3506, %v3508
      %3545 = vmatprep.subr.bf16.mxu0 %v3524
      %3546 = vmatpush1.bf16.msra.mxu0 %v3523
      %3547 = vmatprep.subr.bf16.mxu0 %v3522
      %3548 = vmatpush1.bf16.msra.mxu0 %v3521
      %3549 = vmatprep.subr.bf16.mxu0 %v3520
      %3550 = vmatpush1.bf16.msra.mxu0 %v3519
      %3551 = vmatprep.subr.bf16.mxu0 %v3518
      %3552 = vmatpush1.bf16.msra.mxu0 %v3517
      %3553 = vmatprep.subr.bf16.mxu0 %v3516
      %3554 = vmatpush1.bf16.msra.mxu0 %v3515
      %3555 = vmatprep.subr.bf16.mxu0 %v3514
      %3556 = vmatpush1.bf16.msra.mxu0 %v3513
      %3557 = vmatprep.subr.bf16.mxu0 %v3512
      %3558 = vmatpush1.bf16.msra.mxu0 %v3511
      %3559 = vmatprep.subr.bf16.mxu0 %v3510
      %3560 = vmatpush1.bf16.msra.mxu0 %v3509
      %3561 = vmatprep.subr.bf16.mxu0 0
      %3562 = vmatpush2.bf16.msra.mxu0 0
      %3563 = vmatprep.subr.bf16.mxu0 0
      %3564 = vmatpush2.bf16.msra.mxu0 0
      %3565 = vmatprep.subr.bf16.mxu0 0
      %3566 = vmatpush2.bf16.msra.mxu0 0
      %3567 = vmatprep.subr.bf16.mxu0 0
      %3568 = vmatpush2.bf16.msra.mxu0 0
      %3569 = vmatprep.subr.bf16.mxu0 0
      %3570 = vmatpush2.bf16.msra.mxu0 0
      %3571 = vmatprep.subr.bf16.mxu0 0
      %3572 = vmatpush2.bf16.msra.mxu0 0
      %3573 = vmatprep.subr.bf16.mxu0 0
      %3574 = vmatpush2.bf16.msra.mxu0 0
      %3575 = vmatprep.subr.bf16.mxu0 %v3526
      %3576 = vmatpush2.bf16.msra.mxu0 %v3525
      %3577 = vmatprep.mubr.bf16.mxu0 %v3363
      %3578 = vmatmul.mubr.bf16.gmra.mxu0 %v3269
      %v3579 = vpop.f32.mrf.mxu0
      %v3580 = vadd.f32 0.0, %v3579
      %v3581 = vpop.f32.mrf.mxu0
      %v3582 = vadd.f32 0.0, %v3581
      %v3583 = vpop.f32.mrf.mxu0
      %v3584 = vadd.f32 0.0, %v3583
      %v3585 = vpop.f32.mrf.mxu0
      %v3586 = vadd.f32 0.0, %v3585
      %3587 = vdwg.mxu0
      %3588 = vrot.lane.b32.xlu0 %v3194, 126
      %v3589 = vpop.permute.xlu0 %3588
      %v3590 = vsel %vm393, %v3412, %v3589
      %3591 = vrot.lane.b32.xlu0 %v3194, 124
      %v3592 = vpop.permute.xlu0 %3591
      %v3593 = vsel %vm981, %v3418, %v3592
      %3594 = vrot.lane.b32.xlu0 %v3194, 80
      %v3595 = vpop.permute.xlu0 %3594
      %v3596 = vsel %vm427, %v3424, %v3595
      %3597 = vrot.lane.b32.xlu0 %v3194, 78
      %v3598 = vpop.permute.xlu0 %3597
      %3599 = vrot.lane.b32.xlu0 %v3194, 50
      %v3600 = vpop.permute.xlu0 %3599
      %3601 = vrot.lane.b32.xlu0 %v3590, 50
      %v3602 = vpop.permute.xlu0 %3601
      %3603 = vrot.lane.b32.xlu0 %v3589, 50
      %v3604 = vpop.permute.xlu0 %3603
      %3605 = vrot.lane.b32.xlu0 %v3593, 50
      %v3606 = vpop.permute.xlu0 %3605
      %3607 = vrot.lane.b32.xlu0 %v3592, 50
      %v3608 = vpop.permute.xlu0 %3607
      %3609 = vrot.lane.b32.xlu0 %v3596, 50
      %v3610 = vpop.permute.xlu0 %3609
      %3611 = vrot.lane.b32.xlu0 %v3595, 50
      %v3612 = vpop.permute.xlu0 %3611
      %3613 = vrot.lane.b32.xlu0 %v3598, 50
      %v3614 = vpop.permute.xlu0 %3613
      %3615 = vrot.lane.b32.xlu0 %v3436, 50
      %v3616 = vpop.permute.xlu0 %3615
      %3617 = vrot.lane.b32.xlu0 %v3442, 50
      %v3618 = vpop.permute.xlu0 %3617
      %3619 = vrot.lane.b32.xlu0 %v3448, 50
      %v3620 = vpop.permute.xlu0 %3619
      %3621 = vrot.lane.b32.xlu0 %v3454, 50
      %v3622 = vpop.permute.xlu0 %3621
      %v3623 = vsel %vm1097, %v3460, %v3600
      %v3624 = vsel %vm1097, %v3602, %v3604
      %v3625 = vsel %vm1097, %v3606, %v3608
      %v3626 = vsel %vm1097, %v3610, %v3612
      %3636 = vmatprep.subr.bf16.mxu0 0
      %3637 = vmatpush1.bf16.msra.mxu0 %v3620
      %3638 = vmatprep.subr.bf16.mxu0 0
      %3639 = vmatpush1.bf16.msra.mxu0 %v3618
      %3640 = vmatprep.subr.bf16.mxu0 0
      %3641 = vmatpush1.bf16.msra.mxu0 %v3616
      %3642 = vmatprep.subr.bf16.mxu0 0
      %3643 = vmatpush1.bf16.msra.mxu0 %v3614
      %3644 = vmatprep.subr.bf16.mxu0 0
      %3645 = vmatpush1.bf16.msra.mxu0 %v3626
      %3646 = vmatprep.subr.bf16.mxu0 0
      %3647 = vmatpush1.bf16.msra.mxu0 %v3625
      %3648 = vmatprep.subr.bf16.mxu0 0
      %3649 = vmatpush1.bf16.msra.mxu0 %v3624
      %3650 = vmatprep.subr.bf16.mxu0 0
      %3651 = vmatpush1.bf16.msra.mxu0 %v3623
      %3652 = vmatprep.subr.bf16.mxu0 0
      %3653 = vmatpush2.bf16.msra.mxu0 0
      %3654 = vmatprep.subr.bf16.mxu0 0
      %3655 = vmatpush2.bf16.msra.mxu0 0
      %3656 = vmatprep.subr.bf16.mxu0 0
      %3657 = vmatpush2.bf16.msra.mxu0 0
      %3658 = vmatprep.subr.bf16.mxu0 0
      %3659 = vmatpush2.bf16.msra.mxu0 0
      %3660 = vmatprep.subr.bf16.mxu0 0
      %3661 = vmatpush2.bf16.msra.mxu0 0
      %3662 = vmatprep.subr.bf16.mxu0 0
      %3663 = vmatpush2.bf16.msra.mxu0 0
      %3664 = vmatprep.subr.bf16.mxu0 0
      %3665 = vmatpush2.bf16.msra.mxu0 0
      %3666 = vmatprep.subr.bf16.mxu0 0
      %3667 = vmatpush2.bf16.msra.mxu0 %v3622
      %3668 = vmatprep.mubr.bf16.mxu0 %v3363
      %3669 = vmatmul.mubr.bf16.gmra.mxu0 %v3269
      %v3670 = vpop.f32.mrf.mxu0
      %v3671 = vadd.f32 0.0, %v3670
      %v3672 = vpop.f32.mrf.mxu0
      %v3673 = vpop.f32.mrf.mxu0
      %v3674 = vadd.f32 0.0, %v3673
      %v3675 = vpop.f32.mrf.mxu0
      %3676 = vdwg.mxu0
      %s3677 = scalar_lea.vmem %s2, 80
      %v3678 = vld [vmem:[%s3677] sm:$0xff]
      %v3679 = vld [vmem:[%s3677 + $0x8] sm:$0xff]
      %3681 = vset.pattern.permute.xlu0 0
      %3682 = vperm.xlu0 %3681, %v3678
      %v3683 = vpop.permute.xlu0 %3682
      %3686 = vset.pattern.permute.xlu0 0
      %3687 = vperm.xlu0 %3686, %v3679
      %v3688 = vpop.permute.xlu0 %3687
      %v3690 = vadd.f32 %v3400, %v3683
      %v3691 = vadd.f32 %v3402, %v3683
      %v3692 = vadd.f32 %v3580, %v3683
      %v3693 = vadd.f32 %v3582, %v3683
      %v3694 = vadd.f32 %v3671, %v3683
      %v3695 = vadd.f32 %v3404, %v3688
      %v3696 = vadd.f32 %v3406, %v3688
      %v3697 = vadd.f32 %v3584, %v3688
      %v3698 = vadd.f32 %v3586, %v3688
      %v3699 = vadd.f32 %v3674, %v3688
      %v3700 = vmul.f32 %v3690, %v900
      %v3701 = vmul.f32 %v3691, %v904
      %v3702 = vmul.f32 %v3692, %v908
      %v3703 = vmul.f32 %v3693, %v912
      %v3704 = vmul.f32 %v3694, %v916
      %v3705 = vmul.f32 %v3695, %v900
      %v3706 = vmul.f32 %v3696, %v904
      %v3707 = vmul.f32 %v3697, %v908
      %v3708 = vmul.f32 %v3698, %v912
      %v3709 = vmul.f32 %v3699, %v916
      %v3710 = vld [vmem:[#allocation5 + $0x8] sm:$0xff]
      %v3711 = vld [vmem:[#allocation5 + $0x10] sm:$0xff]
      %v3712 = vld [vmem:[#allocation5 + $0x18] sm:$0xff]
      %v3713 = vld [vmem:[#allocation5 + $0x20] sm:$0xff]
      %v3714 = vld [vmem:[#allocation5 + $0x28] sm:$0xff]
      %v3715 = vld [vmem:[#allocation5 + $0x40] sm:$0xff]
      %v3716 = vld [vmem:[#allocation5 + $0x48] sm:$0xff]
      %v3717 = vld [vmem:[#allocation5 + $0x50] sm:$0xff]
      %v3718 = vld [vmem:[#allocation5 + $0x58] sm:$0xff]
      %v3719 = vld [vmem:[#allocation5 + $0x60] sm:$0xff]
      %v3720 = vadd.f32 %v3700, %v3710
      %v3721 = vadd.f32 %v3701, %v3711
      %v3722 = vadd.f32 %v3702, %v3712
      %v3723 = vadd.f32 %v3703, %v3713
      %v3724 = vadd.f32 %v3704, %v3714
      %v3725 = vadd.f32 %v3705, %v3715
      %v3726 = vadd.f32 %v3706, %v3716
      %v3727 = vadd.f32 %v3707, %v3717
      %v3728 = vadd.f32 %v3708, %v3718
      %v3729 = vadd.f32 %v3709, %v3719
      %3730 = vst [vmem:[#allocation6 + $0x8] sm:$0xff] %v3720
      %3731 = vst [vmem:[#allocation6 + $0x10] sm:$0xff] %v3721
      %3732 = vst [vmem:[#allocation6 + $0x18] sm:$0xff] %v3722
      %3733 = vst [vmem:[#allocation6 + $0x20] sm:$0xff] %v3723
      %3734 = vst.msk [vmem:[#allocation6 + $0x28] sm:$0xff] %vm936, %v3724
      %3735 = vst [vmem:[#allocation6 + $0x40] sm:$0xff] %v3725
      %3736 = vst [vmem:[#allocation6 + $0x48] sm:$0xff] %v3726
      %3737 = vst [vmem:[#allocation6 + $0x50] sm:$0xff] %v3727
      %3738 = vst [vmem:[#allocation6 + $0x58] sm:$0xff] %v3728
      %3739 = vst.msk [vmem:[#allocation6 + $0x60] sm:$0xff] %vm936, %v3729
      %v3740 = vld [vmem:[#allocation6] sm:$0xff]
      %v3741 = vld [vmem:[#allocation6 + $0x8] sm:$0xff]
      %v3742 = vld [vmem:[#allocation6 + $0x10] sm:$0xff]
      %v3743 = vld [vmem:[#allocation6 + $0x18] sm:$0xff]
      %v3744 = vld [vmem:[#allocation6 + $0x20] sm:$0xff]
      %v3745 = vld [vmem:[#allocation6 + $0x28] sm:$0xff]
      %v3746 = vld [vmem:[#allocation6 + $0x30] sm:$0xff]
      %v3747 = vld [vmem:[#allocation6 + $0x38] sm:$0xff]
      %v3748 = vld [vmem:[#allocation6 + $0x40] sm:$0xff]
      %v3749 = vld [vmem:[#allocation6 + $0x48] sm:$0xff]
      %v3750 = vld [vmem:[#allocation6 + $0x50] sm:$0xff]
      %v3751 = vld [vmem:[#allocation6 + $0x58] sm:$0xff]
      %v3752 = vld [vmem:[#allocation6 + $0x60] sm:$0xff]
      %v3753 = vld [vmem:[#allocation6 + $0x68] sm:$0xff]
      %v3754 = vld [vmem:[#allocation3] sm:$0xff]
      %v3755 = vld [vmem:[#allocation3 + $0x8] sm:$0xff]
      %v3756 = vld [vmem:[#allocation3 + $0x10] sm:$0xff]
      %v3757 = vld [vmem:[#allocation3 + $0x18] sm:$0xff]
      %v3758 = vld [vmem:[#allocation3 + $0x20] sm:$0xff]
      %v3759 = vld [vmem:[#allocation3 + $0x28] sm:$0xff]
      %v3760 = vld [vmem:[#allocation3 + $0x30] sm:$0xff]
      %v3761 = vld [vmem:[#allocation3 + $0x38] sm:$0xff]
      %v3762 = vld [vmem:[#allocation3 + $0x40] sm:$0xff]
      %v3763 = vld [vmem:[#allocation3 + $0x48] sm:$0xff]
      %v3764 = vld [vmem:[#allocation3 + $0x50] sm:$0xff]
      %v3765 = vld [vmem:[#allocation3 + $0x58] sm:$0xff]
      %v3766 = vld [vmem:[#allocation3 + $0x60] sm:$0xff]
      %v3767 = vld [vmem:[#allocation3 + $0x68] sm:$0xff]
      %v3768 = vadd.f32 %v3740, %v3754
      %v3769 = vadd.f32 %v3741, %v3755
      %v3770 = vadd.f32 %v3742, %v3756
      %v3771 = vadd.f32 %v3743, %v3757
      %v3772 = vadd.f32 %v3744, %v3758
      %v3773 = vadd.f32 %v3745, %v3759
      %v3774 = vadd.f32 %v3746, %v3760
      %v3775 = vadd.f32 %v3747, %v3761
      %v3776 = vadd.f32 %v3748, %v3762
      %v3777 = vadd.f32 %v3749, %v3763
      %v3778 = vadd.f32 %v3750, %v3764
      %v3779 = vadd.f32 %v3751, %v3765
      %v3780 = vadd.f32 %v3752, %v3766
      %v3781 = vadd.f32 %v3753, %v3767
      %3782 = vst [vmem:[#allocation8] sm:$0xff] %v3768
      %3783 = vst [vmem:[#allocation8 + $0x8] sm:$0xff] %v3769
      %3784 = vst [vmem:[#allocation8 + $0x10] sm:$0xff] %v3770
      %3785 = vst [vmem:[#allocation8 + $0x18] sm:$0xff] %v3771
      %3786 = vst [vmem:[#allocation8 + $0x20] sm:$0xff] %v3772
      %3787 = vst [vmem:[#allocation8 + $0x28] sm:$0xff] %v3773
      %3788 = vst [vmem:[#allocation8 + $0x30] sm:$0xff] %v3774
      %3789 = vst [vmem:[#allocation8 + $0x38] sm:$0xff] %v3775
      %3790 = vst [vmem:[#allocation8 + $0x40] sm:$0xff] %v3776
      %3791 = vst [vmem:[#allocation8 + $0x48] sm:$0xff] %v3777
      %3792 = vst [vmem:[#allocation8 + $0x50] sm:$0xff] %v3778
      %3793 = vst [vmem:[#allocation8 + $0x58] sm:$0xff] %v3779
      %3794 = vst [vmem:[#allocation8 + $0x60] sm:$0xff] %v3780
      %3795 = vst [vmem:[#allocation8 + $0x68] sm:$0xff] %v3781
      %v3796 = vld [vmem:[#allocation8] sm:$0xff]
      %v3797 = vld [vmem:[#allocation8 + $0x8] sm:$0xff]
      %v3798 = vld [vmem:[#allocation8 + $0x10] sm:$0xff]
      %v3799 = vld [vmem:[#allocation8 + $0x18] sm:$0xff]
      %v3800 = vld [vmem:[#allocation8 + $0x20] sm:$0xff]
      %v3801 = vld [vmem:[#allocation8 + $0x28] sm:$0xff]
      %v3802 = vld [vmem:[#allocation8 + $0x38] sm:$0xff]
      %v3803 = vld [vmem:[#allocation8 + $0x40] sm:$0xff]
      %v3804 = vld [vmem:[#allocation8 + $0x48] sm:$0xff]
      %v3805 = vld [vmem:[#allocation8 + $0x50] sm:$0xff]
      %v3806 = vld [vmem:[#allocation8 + $0x58] sm:$0xff]
      %v3807 = vld [vmem:[#allocation8 + $0x60] sm:$0xff]
      %v3808 = vpack.c.bf16 %v3802, %v3796
      %v3809 = vpack.c.bf16 %v3803, %v3797
      %v3810 = vpack.c.bf16 %v3804, %v3798
      %v3811 = vpack.c.bf16 %v3805, %v3799
      %v3812 = vpack.c.bf16 %v3806, %v3800
      %v3813 = vpack.c.bf16 %v3807, %v3801
      %s3814 = scalar_lea.vmem %s1, 96
      %v3815 = vld [vmem:[%s3814] sm:$0xff]
      %v3816 = vld [vmem:[%s3814 + $0x8] sm:$0xff]
      %3820 = vrot.lane.b32.xlu0 %v3808, 127
      %v3821 = vpop.permute.xlu0 %3820
      %3822 = vrot.lane.b32.xlu0 %v3809, 127
      %v3823 = vpop.permute.xlu0 %3822
      %3824 = vrot.lane.b32.xlu0 %v3810, 127
      %v3825 = vpop.permute.xlu0 %3824
      %v3826 = vsel %vm384, %v3821, %v3823
      %v3827 = vsel %vm384, %v3823, %v3825
      %3828 = vrot.lane.b32.xlu0 %v3808, 126
      %v3829 = vpop.permute.xlu0 %3828
      %3830 = vrot.lane.b32.xlu0 %v3809, 126
      %v3831 = vpop.permute.xlu0 %3830
      %3832 = vrot.lane.b32.xlu0 %v3810, 126
      %v3833 = vpop.permute.xlu0 %3832
      %v3834 = vsel %vm393, %v3829, %v3831
      %v3835 = vsel %vm393, %v3831, %v3833
      %3836 = vrot.lane.b32.xlu0 %v3808, 104
      %v3837 = vpop.permute.xlu0 %3836
      %3838 = vrot.lane.b32.xlu0 %v3809, 104
      %v3839 = vpop.permute.xlu0 %3838
      %3840 = vrot.lane.b32.xlu0 %v3810, 104
      %v3841 = vpop.permute.xlu0 %3840
      %v3842 = vsel %vm402, %v3837, %v3839
      %v3843 = vsel %vm402, %v3839, %v3841
      %3844 = vrot.lane.b32.xlu0 %v3809, 103
      %v3845 = vpop.permute.xlu0 %3844
      %3846 = vrot.lane.b32.xlu0 %v3810, 103
      %v3847 = vpop.permute.xlu0 %3846
      %v3848 = vsel %vm409, %v3845, %v3847
      %3850 = vrot.lane.b32.xlu0 %v3809, 102
      %v3851 = vpop.permute.xlu0 %3850
      %3852 = vrot.lane.b32.xlu0 %v3810, 102
      %v3853 = vpop.permute.xlu0 %3852
      %3854 = vrot.lane.b32.xlu0 %v3811, 102
      %v3855 = vpop.permute.xlu0 %3854
      %v3856 = vsel %vm418, %v3851, %v3853
      %v3857 = vsel %vm418, %v3853, %v3855
      %3858 = vrot.lane.b32.xlu0 %v3809, 80
      %v3859 = vpop.permute.xlu0 %3858
      %3860 = vrot.lane.b32.xlu0 %v3810, 80
      %v3861 = vpop.permute.xlu0 %3860
      %3862 = vrot.lane.b32.xlu0 %v3811, 80
      %v3863 = vpop.permute.xlu0 %3862
      %v3864 = vsel %vm427, %v3859, %v3861
      %v3865 = vsel %vm427, %v3861, %v3863
      %3866 = vrot.lane.b32.xlu0 %v3809, 79
      %v3867 = vpop.permute.xlu0 %3866
      %3868 = vrot.lane.b32.xlu0 %v3810, 79
      %v3869 = vpop.permute.xlu0 %3868
      %3870 = vrot.lane.b32.xlu0 %v3811, 79
      %v3871 = vpop.permute.xlu0 %3870
      %v3872 = vsel %vm436, %v3867, %v3869
      %v3873 = vsel %vm436, %v3869, %v3871
      %3874 = vrot.lane.b32.xlu0 %v3809, 78
      %v3875 = vpop.permute.xlu0 %3874
      %3876 = vrot.lane.b32.xlu0 %v3810, 78
      %v3877 = vpop.permute.xlu0 %3876
      %3878 = vrot.lane.b32.xlu0 %v3811, 78
      %v3879 = vpop.permute.xlu0 %3878
      %v3880 = vsel %vm445, %v3875, %v3877
      %v3881 = vsel %vm445, %v3877, %v3879
      %v3884 = vunpack.c.l.b16 %v3815
      %v3885 = vunpack.c.h.b16 %v3815
      %v3886 = vunpack.c.l.b16 %v3816
      %v3887 = vunpack.c.h.b16 %v3816
      %v3888 = vpack.c.b16 %v3886, %v3884
      %v3889 = vpack.c.b16 %v3887, %v3885
      %3891 = vrot.lane.b32.xlu0 %v3808, 25
      %v3892 = vpop.permute.xlu0 %3891
      %3893 = vrot.lane.b32.xlu0 %v3809, 25
      %v3894 = vpop.permute.xlu0 %3893
      %3895 = vrot.lane.b32.xlu0 %v3810, 25
      %v3896 = vpop.permute.xlu0 %3895
      %3897 = vrot.lane.b32.xlu0 %v3826, 25
      %v3898 = vpop.permute.xlu0 %3897
      %3899 = vrot.lane.b32.xlu0 %v3827, 25
      %v3900 = vpop.permute.xlu0 %3899
      %3901 = vrot.lane.b32.xlu0 %v3825, 25
      %v3902 = vpop.permute.xlu0 %3901
      %3903 = vrot.lane.b32.xlu0 %v3834, 25
      %v3904 = vpop.permute.xlu0 %3903
      %3905 = vrot.lane.b32.xlu0 %v3835, 25
      %v3906 = vpop.permute.xlu0 %3905
      %3907 = vrot.lane.b32.xlu0 %v3833, 25
      %v3908 = vpop.permute.xlu0 %3907
      %3909 = vrot.lane.b32.xlu0 %v3842, 25
      %v3910 = vpop.permute.xlu0 %3909
      %3911 = vrot.lane.b32.xlu0 %v3843, 25
      %v3912 = vpop.permute.xlu0 %3911
      %3913 = vrot.lane.b32.xlu0 %v3841, 25
      %v3914 = vpop.permute.xlu0 %3913
      %3915 = vrot.lane.b32.xlu0 %v3845, 25
      %v3916 = vpop.permute.xlu0 %3915
      %3917 = vrot.lane.b32.xlu0 %v3848, 25
      %v3918 = vpop.permute.xlu0 %3917
      %3919 = vrot.lane.b32.xlu0 %v3847, 25
      %v3920 = vpop.permute.xlu0 %3919
      %3921 = vrot.lane.b32.xlu0 %v3851, 25
      %v3922 = vpop.permute.xlu0 %3921
      %3923 = vrot.lane.b32.xlu0 %v3856, 25
      %v3924 = vpop.permute.xlu0 %3923
      %3925 = vrot.lane.b32.xlu0 %v3857, 25
      %v3926 = vpop.permute.xlu0 %3925
      %3927 = vrot.lane.b32.xlu0 %v3859, 25
      %v3928 = vpop.permute.xlu0 %3927
      %3929 = vrot.lane.b32.xlu0 %v3864, 25
      %v3930 = vpop.permute.xlu0 %3929
      %3931 = vrot.lane.b32.xlu0 %v3865, 25
      %v3932 = vpop.permute.xlu0 %3931
      %3933 = vrot.lane.b32.xlu0 %v3867, 25
      %v3934 = vpop.permute.xlu0 %3933
      %3935 = vrot.lane.b32.xlu0 %v3872, 25
      %v3936 = vpop.permute.xlu0 %3935
      %3937 = vrot.lane.b32.xlu0 %v3873, 25
      %v3938 = vpop.permute.xlu0 %3937
      %3939 = vrot.lane.b32.xlu0 %v3875, 25
      %v3940 = vpop.permute.xlu0 %3939
      %3941 = vrot.lane.b32.xlu0 %v3880, 25
      %v3942 = vpop.permute.xlu0 %3941
      %3943 = vrot.lane.b32.xlu0 %v3881, 25
      %v3944 = vpop.permute.xlu0 %3943
      %v3945 = vsel %vm511, %v3892, %v3894
      %v3946 = vsel %vm511, %v3894, %v3896
      %v3947 = vsel %vm511, %v3898, %v3900
      %v3948 = vsel %vm511, %v3900, %v3902
      %v3949 = vsel %vm511, %v3904, %v3906
      %v3950 = vsel %vm511, %v3906, %v3908
      %v3951 = vsel %vm511, %v3910, %v3912
      %v3952 = vsel %vm511, %v3912, %v3914
      %v3953 = vsel %vm511, %v3916, %v3918
      %v3954 = vsel %vm511, %v3918, %v3920
      %v3955 = vsel %vm511, %v3922, %v3924
      %v3956 = vsel %vm511, %v3924, %v3926
      %v3957 = vsel %vm511, %v3928, %v3930
      %v3958 = vsel %vm511, %v3930, %v3932
      %v3959 = vsel %vm511, %v3934, %v3936
      %v3960 = vsel %vm511, %v3936, %v3938
      %v3961 = vsel %vm511, %v3940, %v3942
      %v3962 = vsel %vm511, %v3942, %v3944
      %v3982 = vsel %vm548, %v3889, 0
      %3984 = vmatprep.subr.bf16.mxu0 %v3960
      %3985 = vmatpush1.bf16.msra.mxu0 %v3959
      %3986 = vmatprep.subr.bf16.mxu0 %v3958
      %3987 = vmatpush1.bf16.msra.mxu0 %v3957
      %3988 = vmatprep.subr.bf16.mxu0 %v3956
      %3989 = vmatpush1.bf16.msra.mxu0 %v3955
      %3990 = vmatprep.subr.bf16.mxu0 %v3954
      %3991 = vmatpush1.bf16.msra.mxu0 %v3953
      %3992 = vmatprep.subr.bf16.mxu0 %v3952
      %3993 = vmatpush1.bf16.msra.mxu0 %v3951
      %3994 = vmatprep.subr.bf16.mxu0 %v3950
      %3995 = vmatpush1.bf16.msra.mxu0 %v3949
      %3996 = vmatprep.subr.bf16.mxu0 %v3948
      %3997 = vmatpush1.bf16.msra.mxu0 %v3947
      %3998 = vmatprep.subr.bf16.mxu0 %v3946
      %3999 = vmatpush1.bf16.msra.mxu0 %v3945
      %4000 = vmatprep.subr.bf16.mxu0 0
      %4001 = vmatpush2.bf16.msra.mxu0 0
      %4002 = vmatprep.subr.bf16.mxu0 0
      %4003 = vmatpush2.bf16.msra.mxu0 0
      %4004 = vmatprep.subr.bf16.mxu0 0
      %4005 = vmatpush2.bf16.msra.mxu0 0
      %4006 = vmatprep.subr.bf16.mxu0 0
      %4007 = vmatpush2.bf16.msra.mxu0 0
      %4008 = vmatprep.subr.bf16.mxu0 0
      %4009 = vmatpush2.bf16.msra.mxu0 0
      %4010 = vmatprep.subr.bf16.mxu0 0
      %4011 = vmatpush2.bf16.msra.mxu0 0
      %4012 = vmatprep.subr.bf16.mxu0 0
      %4013 = vmatpush2.bf16.msra.mxu0 0
      %4014 = vmatprep.subr.bf16.mxu0 %v3962
      %4015 = vmatpush2.bf16.msra.mxu0 %v3961
      %4016 = vmatprep.mubr.bf16.mxu0 %v3982
      %4017 = vmatmul.mubr.bf16.gmra.mxu0 %v3888
      %v4018 = vpop.f32.mrf.mxu0
      %v4019 = vadd.f32 0.0, %v4018
      %v4020 = vpop.f32.mrf.mxu0
      %v4021 = vadd.f32 0.0, %v4020
      %v4022 = vpop.f32.mrf.mxu0
      %v4023 = vadd.f32 0.0, %v4022
      %v4024 = vpop.f32.mrf.mxu0
      %v4025 = vadd.f32 0.0, %v4024
      %4026 = vdwg.mxu0
      %4028 = vrot.lane.b32.xlu0 %v3811, 127
      %v4029 = vpop.permute.xlu0 %4028
      %4030 = vrot.lane.b32.xlu0 %v3812, 127
      %v4031 = vpop.permute.xlu0 %4030
      %v4032 = vsel %vm384, %v3825, %v4029
      %v4033 = vsel %vm384, %v4029, %v4031
      %4034 = vrot.lane.b32.xlu0 %v3811, 126
      %v4035 = vpop.permute.xlu0 %4034
      %4036 = vrot.lane.b32.xlu0 %v3812, 126
      %v4037 = vpop.permute.xlu0 %4036
      %v4038 = vsel %vm393, %v3833, %v4035
      %v4039 = vsel %vm393, %v4035, %v4037
      %4040 = vrot.lane.b32.xlu0 %v3811, 104
      %v4041 = vpop.permute.xlu0 %4040
      %4042 = vrot.lane.b32.xlu0 %v3812, 104
      %v4043 = vpop.permute.xlu0 %4042
      %v4044 = vsel %vm402, %v3841, %v4041
      %v4045 = vsel %vm402, %v4041, %v4043
      %4046 = vrot.lane.b32.xlu0 %v3811, 103
      %v4047 = vpop.permute.xlu0 %4046
      %4048 = vrot.lane.b32.xlu0 %v3812, 103
      %v4049 = vpop.permute.xlu0 %4048
      %v4050 = vsel %vm409, %v4047, %v4049
      %4052 = vrot.lane.b32.xlu0 %v3812, 102
      %v4053 = vpop.permute.xlu0 %4052
      %4054 = vrot.lane.b32.xlu0 %v3813, 102
      %v4055 = vpop.permute.xlu0 %4054
      %v4056 = vsel %vm418, %v3855, %v4053
      %v4057 = vsel %vm418, %v4053, %v4055
      %4058 = vrot.lane.b32.xlu0 %v3812, 80
      %v4059 = vpop.permute.xlu0 %4058
      %4060 = vrot.lane.b32.xlu0 %v3813, 80
      %v4061 = vpop.permute.xlu0 %4060
      %v4062 = vsel %vm427, %v3863, %v4059
      %v4063 = vsel %vm427, %v4059, %v4061
      %4064 = vrot.lane.b32.xlu0 %v3812, 79
      %v4065 = vpop.permute.xlu0 %4064
      %4066 = vrot.lane.b32.xlu0 %v3813, 79
      %v4067 = vpop.permute.xlu0 %4066
      %v4068 = vsel %vm436, %v3871, %v4065
      %v4069 = vsel %vm436, %v4065, %v4067
      %4070 = vrot.lane.b32.xlu0 %v3812, 78
      %v4071 = vpop.permute.xlu0 %4070
      %4072 = vrot.lane.b32.xlu0 %v3813, 78
      %v4073 = vpop.permute.xlu0 %4072
      %v4074 = vsel %vm445, %v3879, %v4071
      %v4075 = vsel %vm445, %v4071, %v4073
      %4076 = vrot.lane.b32.xlu0 %v3811, 25
      %v4077 = vpop.permute.xlu0 %4076
      %4078 = vrot.lane.b32.xlu0 %v3812, 25
      %v4079 = vpop.permute.xlu0 %4078
      %4080 = vrot.lane.b32.xlu0 %v4032, 25
      %v4081 = vpop.permute.xlu0 %4080
      %4082 = vrot.lane.b32.xlu0 %v4033, 25
      %v4083 = vpop.permute.xlu0 %4082
      %4084 = vrot.lane.b32.xlu0 %v4031, 25
      %v4085 = vpop.permute.xlu0 %4084
      %4086 = vrot.lane.b32.xlu0 %v4038, 25
      %v4087 = vpop.permute.xlu0 %4086
      %4088 = vrot.lane.b32.xlu0 %v4039, 25
      %v4089 = vpop.permute.xlu0 %4088
      %4090 = vrot.lane.b32.xlu0 %v4037, 25
      %v4091 = vpop.permute.xlu0 %4090
      %4092 = vrot.lane.b32.xlu0 %v4044, 25
      %v4093 = vpop.permute.xlu0 %4092
      %4094 = vrot.lane.b32.xlu0 %v4045, 25
      %v4095 = vpop.permute.xlu0 %4094
      %4096 = vrot.lane.b32.xlu0 %v4043, 25
      %v4097 = vpop.permute.xlu0 %4096
      %4098 = vrot.lane.b32.xlu0 %v4047, 25
      %v4099 = vpop.permute.xlu0 %4098
      %4100 = vrot.lane.b32.xlu0 %v4050, 25
      %v4101 = vpop.permute.xlu0 %4100
      %4102 = vrot.lane.b32.xlu0 %v4049, 25
      %v4103 = vpop.permute.xlu0 %4102
      %4104 = vrot.lane.b32.xlu0 %v3855, 25
      %v4105 = vpop.permute.xlu0 %4104
      %4106 = vrot.lane.b32.xlu0 %v4056, 25
      %v4107 = vpop.permute.xlu0 %4106
      %4108 = vrot.lane.b32.xlu0 %v4057, 25
      %v4109 = vpop.permute.xlu0 %4108
      %4110 = vrot.lane.b32.xlu0 %v3863, 25
      %v4111 = vpop.permute.xlu0 %4110
      %4112 = vrot.lane.b32.xlu0 %v4062, 25
      %v4113 = vpop.permute.xlu0 %4112
      %4114 = vrot.lane.b32.xlu0 %v4063, 25
      %v4115 = vpop.permute.xlu0 %4114
      %4116 = vrot.lane.b32.xlu0 %v3871, 25
      %v4117 = vpop.permute.xlu0 %4116
      %4118 = vrot.lane.b32.xlu0 %v4068, 25
      %v4119 = vpop.permute.xlu0 %4118
      %4120 = vrot.lane.b32.xlu0 %v4069, 25
      %v4121 = vpop.permute.xlu0 %4120
      %4122 = vrot.lane.b32.xlu0 %v3879, 25
      %v4123 = vpop.permute.xlu0 %4122
      %4124 = vrot.lane.b32.xlu0 %v4074, 25
      %v4125 = vpop.permute.xlu0 %4124
      %4126 = vrot.lane.b32.xlu0 %v4075, 25
      %v4127 = vpop.permute.xlu0 %4126
      %v4128 = vsel %vm511, %v3896, %v4077
      %v4129 = vsel %vm511, %v4077, %v4079
      %v4130 = vsel %vm511, %v4081, %v4083
      %v4131 = vsel %vm511, %v4083, %v4085
      %v4132 = vsel %vm511, %v4087, %v4089
      %v4133 = vsel %vm511, %v4089, %v4091
      %v4134 = vsel %vm511, %v4093, %v4095
      %v4135 = vsel %vm511, %v4095, %v4097
      %v4136 = vsel %vm511, %v4099, %v4101
      %v4137 = vsel %vm511, %v4101, %v4103
      %v4138 = vsel %vm511, %v4105, %v4107
      %v4139 = vsel %vm511, %v4107, %v4109
      %v4140 = vsel %vm511, %v4111, %v4113
      %v4141 = vsel %vm511, %v4113, %v4115
      %v4142 = vsel %vm511, %v4117, %v4119
      %v4143 = vsel %vm511, %v4119, %v4121
      %v4144 = vsel %vm511, %v4123, %v4125
      %v4145 = vsel %vm511, %v4125, %v4127
      %4164 = vmatprep.subr.bf16.mxu0 %v4143
      %4165 = vmatpush1.bf16.msra.mxu0 %v4142
      %4166 = vmatprep.subr.bf16.mxu0 %v4141
      %4167 = vmatpush1.bf16.msra.mxu0 %v4140
      %4168 = vmatprep.subr.bf16.mxu0 %v4139
      %4169 = vmatpush1.bf16.msra.mxu0 %v4138
      %4170 = vmatprep.subr.bf16.mxu0 %v4137
      %4171 = vmatpush1.bf16.msra.mxu0 %v4136
      %4172 = vmatprep.subr.bf16.mxu0 %v4135
      %4173 = vmatpush1.bf16.msra.mxu0 %v4134
      %4174 = vmatprep.subr.bf16.mxu0 %v4133
      %4175 = vmatpush1.bf16.msra.mxu0 %v4132
      %4176 = vmatprep.subr.bf16.mxu0 %v4131
      %4177 = vmatpush1.bf16.msra.mxu0 %v4130
      %4178 = vmatprep.subr.bf16.mxu0 %v4129
      %4179 = vmatpush1.bf16.msra.mxu0 %v4128
      %4180 = vmatprep.subr.bf16.mxu0 0
      %4181 = vmatpush2.bf16.msra.mxu0 0
      %4182 = vmatprep.subr.bf16.mxu0 0
      %4183 = vmatpush2.bf16.msra.mxu0 0
      %4184 = vmatprep.subr.bf16.mxu0 0
      %4185 = vmatpush2.bf16.msra.mxu0 0
      %4186 = vmatprep.subr.bf16.mxu0 0
      %4187 = vmatpush2.bf16.msra.mxu0 0
      %4188 = vmatprep.subr.bf16.mxu0 0
      %4189 = vmatpush2.bf16.msra.mxu0 0
      %4190 = vmatprep.subr.bf16.mxu0 0
      %4191 = vmatpush2.bf16.msra.mxu0 0
      %4192 = vmatprep.subr.bf16.mxu0 0
      %4193 = vmatpush2.bf16.msra.mxu0 0
      %4194 = vmatprep.subr.bf16.mxu0 %v4145
      %4195 = vmatpush2.bf16.msra.mxu0 %v4144
      %4196 = vmatprep.mubr.bf16.mxu0 %v3982
      %4197 = vmatmul.mubr.bf16.gmra.mxu0 %v3888
      %v4198 = vpop.f32.mrf.mxu0
      %v4199 = vadd.f32 0.0, %v4198
      %v4200 = vpop.f32.mrf.mxu0
      %v4201 = vadd.f32 0.0, %v4200
      %v4202 = vpop.f32.mrf.mxu0
      %v4203 = vadd.f32 0.0, %v4202
      %v4204 = vpop.f32.mrf.mxu0
      %v4205 = vadd.f32 0.0, %v4204
      %4206 = vdwg.mxu0
      %4207 = vrot.lane.b32.xlu0 %v3813, 127
      %v4208 = vpop.permute.xlu0 %4207
      %v4209 = vsel %vm384, %v4031, %v4208
      %4210 = vrot.lane.b32.xlu0 %v3813, 126
      %v4211 = vpop.permute.xlu0 %4210
      %v4212 = vsel %vm393, %v4037, %v4211
      %4213 = vrot.lane.b32.xlu0 %v3813, 104
      %v4214 = vpop.permute.xlu0 %4213
      %v4215 = vsel %vm402, %v4043, %v4214
      %4216 = vrot.lane.b32.xlu0 %v3813, 103
      %v4217 = vpop.permute.xlu0 %4216
      %4218 = vrot.lane.b32.xlu0 %v3813, 25
      %v4219 = vpop.permute.xlu0 %4218
      %4220 = vrot.lane.b32.xlu0 %v4209, 25
      %v4221 = vpop.permute.xlu0 %4220
      %4222 = vrot.lane.b32.xlu0 %v4208, 25
      %v4223 = vpop.permute.xlu0 %4222
      %4224 = vrot.lane.b32.xlu0 %v4212, 25
      %v4225 = vpop.permute.xlu0 %4224
      %4226 = vrot.lane.b32.xlu0 %v4211, 25
      %v4227 = vpop.permute.xlu0 %4226
      %4228 = vrot.lane.b32.xlu0 %v4215, 25
      %v4229 = vpop.permute.xlu0 %4228
      %4230 = vrot.lane.b32.xlu0 %v4214, 25
      %v4231 = vpop.permute.xlu0 %4230
      %4232 = vrot.lane.b32.xlu0 %v4217, 25
      %v4233 = vpop.permute.xlu0 %4232
      %4234 = vrot.lane.b32.xlu0 %v4055, 25
      %v4235 = vpop.permute.xlu0 %4234
      %4236 = vrot.lane.b32.xlu0 %v4061, 25
      %v4237 = vpop.permute.xlu0 %4236
      %4238 = vrot.lane.b32.xlu0 %v4067, 25
      %v4239 = vpop.permute.xlu0 %4238
      %4240 = vrot.lane.b32.xlu0 %v4073, 25
      %v4241 = vpop.permute.xlu0 %4240
      %v4242 = vsel %vm511, %v4079, %v4219
      %v4243 = vsel %vm511, %v4221, %v4223
      %v4244 = vsel %vm511, %v4225, %v4227
      %v4245 = vsel %vm511, %v4229, %v4231
      %4255 = vmatprep.subr.bf16.mxu0 0
      %4256 = vmatpush1.bf16.msra.mxu0 %v4239
      %4257 = vmatprep.subr.bf16.mxu0 0
      %4258 = vmatpush1.bf16.msra.mxu0 %v4237
      %4259 = vmatprep.subr.bf16.mxu0 0
      %4260 = vmatpush1.bf16.msra.mxu0 %v4235
      %4261 = vmatprep.subr.bf16.mxu0 0
      %4262 = vmatpush1.bf16.msra.mxu0 %v4233
      %4263 = vmatprep.subr.bf16.mxu0 0
      %4264 = vmatpush1.bf16.msra.mxu0 %v4245
      %4265 = vmatprep.subr.bf16.mxu0 0
      %4266 = vmatpush1.bf16.msra.mxu0 %v4244
      %4267 = vmatprep.subr.bf16.mxu0 0
      %4268 = vmatpush1.bf16.msra.mxu0 %v4243
      %4269 = vmatprep.subr.bf16.mxu0 0
      %4270 = vmatpush1.bf16.msra.mxu0 %v4242
      %4271 = vmatprep.subr.bf16.mxu0 0
      %4272 = vmatpush2.bf16.msra.mxu0 0
      %4273 = vmatprep.subr.bf16.mxu0 0
      %4274 = vmatpush2.bf16.msra.mxu0 0
      %4275 = vmatprep.subr.bf16.mxu0 0
      %4276 = vmatpush2.bf16.msra.mxu0 0
      %4277 = vmatprep.subr.bf16.mxu0 0
      %4278 = vmatpush2.bf16.msra.mxu0 0
      %4279 = vmatprep.subr.bf16.mxu0 0
      %4280 = vmatpush2.bf16.msra.mxu0 0
      %4281 = vmatprep.subr.bf16.mxu0 0
      %4282 = vmatpush2.bf16.msra.mxu0 0
      %4283 = vmatprep.subr.bf16.mxu0 0
      %4284 = vmatpush2.bf16.msra.mxu0 0
      %4285 = vmatprep.subr.bf16.mxu0 0
      %4286 = vmatpush2.bf16.msra.mxu0 %v4241
      %4287 = vmatprep.mubr.bf16.mxu0 %v3982
      %4288 = vmatmul.mubr.bf16.gmra.mxu0 %v3888
      %v4289 = vpop.f32.mrf.mxu0
      %v4290 = vadd.f32 0.0, %v4289
      %v4291 = vpop.f32.mrf.mxu0
      %v4292 = vpop.f32.mrf.mxu0
      %v4293 = vadd.f32 0.0, %v4292
      %v4294 = vpop.f32.mrf.mxu0
      %4295 = vdwg.mxu0
      %s4296 = scalar_lea.vmem %s2, 96
      %v4297 = vld [vmem:[%s4296] sm:$0xff]
      %v4298 = vld [vmem:[%s4296 + $0x8] sm:$0xff]
      %4300 = vset.pattern.permute.xlu0 0
      %4301 = vperm.xlu0 %4300, %v4297
      %v4302 = vpop.permute.xlu0 %4301
      %4305 = vset.pattern.permute.xlu0 0
      %4306 = vperm.xlu0 %4305, %v4298
      %v4307 = vpop.permute.xlu0 %4306
      %v4309 = vadd.f32 %v4019, %v4302
      %v4310 = vadd.f32 %v4021, %v4302
      %v4311 = vadd.f32 %v4199, %v4302
      %v4312 = vadd.f32 %v4201, %v4302
      %v4313 = vadd.f32 %v4290, %v4302
      %v4314 = vadd.f32 %v4023, %v4307
      %v4315 = vadd.f32 %v4025, %v4307
      %v4316 = vadd.f32 %v4203, %v4307
      %v4317 = vadd.f32 %v4205, %v4307
      %v4318 = vadd.f32 %v4293, %v4307
      %v4319 = vmax.f32 %v4309, 0.0
      %v4320 = vmax.f32 %v4310, 0.0
      %v4321 = vmax.f32 %v4311, 0.0
      %v4322 = vmax.f32 %v4312, 0.0
      %v4323 = vmax.f32 %v4313, 0.0
      %v4324 = vmax.f32 %v4314, 0.0
      %v4325 = vmax.f32 %v4315, 0.0
      %v4326 = vmax.f32 %v4316, 0.0
      %v4327 = vmax.f32 %v4317, 0.0
      %v4328 = vmax.f32 %v4318, 0.0
      %v4329 = vmul.f32 %v4319, %v900
      %v4330 = vmul.f32 %v4320, %v904
      %v4331 = vmul.f32 %v4321, %v908
      %v4332 = vmul.f32 %v4322, %v912
      %v4333 = vmul.f32 %v4323, %v916
      %v4334 = vmul.f32 %v4324, %v900
      %v4335 = vmul.f32 %v4325, %v904
      %v4336 = vmul.f32 %v4326, %v908
      %v4337 = vmul.f32 %v4327, %v912
      %v4338 = vmul.f32 %v4328, %v916
      %v4339 = vld [vmem:[#allocation2 + $0x8] sm:$0xff]
      %v4340 = vld [vmem:[#allocation2 + $0x10] sm:$0xff]
      %v4341 = vld [vmem:[#allocation2 + $0x18] sm:$0xff]
      %v4342 = vld [vmem:[#allocation2 + $0x20] sm:$0xff]
      %v4343 = vld [vmem:[#allocation2 + $0x28] sm:$0xff]
      %v4344 = vld [vmem:[#allocation2 + $0x40] sm:$0xff]
      %v4345 = vld [vmem:[#allocation2 + $0x48] sm:$0xff]
      %v4346 = vld [vmem:[#allocation2 + $0x50] sm:$0xff]
      %v4347 = vld [vmem:[#allocation2 + $0x58] sm:$0xff]
      %v4348 = vld [vmem:[#allocation2 + $0x60] sm:$0xff]
      %v4349 = vadd.f32 %v4329, %v4339
      %v4350 = vadd.f32 %v4330, %v4340
      %v4351 = vadd.f32 %v4331, %v4341
      %v4352 = vadd.f32 %v4332, %v4342
      %v4353 = vadd.f32 %v4333, %v4343
      %v4354 = vadd.f32 %v4334, %v4344
      %v4355 = vadd.f32 %v4335, %v4345
      %v4356 = vadd.f32 %v4336, %v4346
      %v4357 = vadd.f32 %v4337, %v4347
      %v4358 = vadd.f32 %v4338, %v4348
      %4359 = vst [vmem:[#allocation7 + $0x8] sm:$0xff] %v4349
      %4360 = vst [vmem:[#allocation7 + $0x10] sm:$0xff] %v4350
      %4361 = vst [vmem:[#allocation7 + $0x18] sm:$0xff] %v4351
      %4362 = vst [vmem:[#allocation7 + $0x20] sm:$0xff] %v4352
      %4363 = vst.msk [vmem:[#allocation7 + $0x28] sm:$0xff] %vm936, %v4353
      %4364 = vst [vmem:[#allocation7 + $0x40] sm:$0xff] %v4354
      %4365 = vst [vmem:[#allocation7 + $0x48] sm:$0xff] %v4355
      %4366 = vst [vmem:[#allocation7 + $0x50] sm:$0xff] %v4356
      %4367 = vst [vmem:[#allocation7 + $0x58] sm:$0xff] %v4357
      %4368 = vst.msk [vmem:[#allocation7 + $0x60] sm:$0xff] %vm936, %v4358
      %v4369 = vld [vmem:[#allocation7] sm:$0xff]
      %v4370 = vld [vmem:[#allocation7 + $0x8] sm:$0xff]
      %v4371 = vld [vmem:[#allocation7 + $0x10] sm:$0xff]
      %v4372 = vld [vmem:[#allocation7 + $0x18] sm:$0xff]
      %v4373 = vld [vmem:[#allocation7 + $0x20] sm:$0xff]
      %v4374 = vld [vmem:[#allocation7 + $0x28] sm:$0xff]
      %v4375 = vld [vmem:[#allocation7 + $0x38] sm:$0xff]
      %v4376 = vld [vmem:[#allocation7 + $0x40] sm:$0xff]
      %v4377 = vld [vmem:[#allocation7 + $0x48] sm:$0xff]
      %v4378 = vld [vmem:[#allocation7 + $0x50] sm:$0xff]
      %v4379 = vld [vmem:[#allocation7 + $0x58] sm:$0xff]
      %v4380 = vld [vmem:[#allocation7 + $0x60] sm:$0xff]
      %v4381 = vpack.c.bf16 %v4375, %v4369
      %v4382 = vpack.c.bf16 %v4376, %v4370
      %v4383 = vpack.c.bf16 %v4377, %v4371
      %v4384 = vpack.c.bf16 %v4378, %v4372
      %v4385 = vpack.c.bf16 %v4379, %v4373
      %v4386 = vpack.c.bf16 %v4380, %v4374
      %s4387 = scalar_lea.vmem %s1, 112
      %v4388 = vld [vmem:[%s4387] sm:$0xff]
      %v4389 = vld [vmem:[%s4387 + $0x8] sm:$0xff]
      %4393 = vrot.lane.b32.xlu0 %v4381, 127
      %v4394 = vpop.permute.xlu0 %4393
      %4395 = vrot.lane.b32.xlu0 %v4382, 127
      %v4396 = vpop.permute.xlu0 %4395
      %4397 = vrot.lane.b32.xlu0 %v4383, 127
      %v4398 = vpop.permute.xlu0 %4397
      %v4399 = vsel %vm384, %v4394, %v4396
      %v4400 = vsel %vm384, %v4396, %v4398
      %4401 = vrot.lane.b32.xlu0 %v4381, 126
      %v4402 = vpop.permute.xlu0 %4401
      %4403 = vrot.lane.b32.xlu0 %v4382, 126
      %v4404 = vpop.permute.xlu0 %4403
      %4405 = vrot.lane.b32.xlu0 %v4383, 126
      %v4406 = vpop.permute.xlu0 %4405
      %v4407 = vsel %vm393, %v4402, %v4404
      %v4408 = vsel %vm393, %v4404, %v4406
      %4409 = vrot.lane.b32.xlu0 %v4381, 104
      %v4410 = vpop.permute.xlu0 %4409
      %4411 = vrot.lane.b32.xlu0 %v4382, 104
      %v4412 = vpop.permute.xlu0 %4411
      %4413 = vrot.lane.b32.xlu0 %v4383, 104
      %v4414 = vpop.permute.xlu0 %4413
      %v4415 = vsel %vm402, %v4410, %v4412
      %v4416 = vsel %vm402, %v4412, %v4414
      %4417 = vrot.lane.b32.xlu0 %v4382, 103
      %v4418 = vpop.permute.xlu0 %4417
      %4419 = vrot.lane.b32.xlu0 %v4383, 103
      %v4420 = vpop.permute.xlu0 %4419
      %v4421 = vsel %vm409, %v4418, %v4420
      %4423 = vrot.lane.b32.xlu0 %v4382, 102
      %v4424 = vpop.permute.xlu0 %4423
      %4425 = vrot.lane.b32.xlu0 %v4383, 102
      %v4426 = vpop.permute.xlu0 %4425
      %4427 = vrot.lane.b32.xlu0 %v4384, 102
      %v4428 = vpop.permute.xlu0 %4427
      %v4429 = vsel %vm418, %v4424, %v4426
      %v4430 = vsel %vm418, %v4426, %v4428
      %4431 = vrot.lane.b32.xlu0 %v4382, 80
      %v4432 = vpop.permute.xlu0 %4431
      %4433 = vrot.lane.b32.xlu0 %v4383, 80
      %v4434 = vpop.permute.xlu0 %4433
      %4435 = vrot.lane.b32.xlu0 %v4384, 80
      %v4436 = vpop.permute.xlu0 %4435
      %v4437 = vsel %vm427, %v4432, %v4434
      %v4438 = vsel %vm427, %v4434, %v4436
      %4439 = vrot.lane.b32.xlu0 %v4382, 79
      %v4440 = vpop.permute.xlu0 %4439
      %4441 = vrot.lane.b32.xlu0 %v4383, 79
      %v4442 = vpop.permute.xlu0 %4441
      %4443 = vrot.lane.b32.xlu0 %v4384, 79
      %v4444 = vpop.permute.xlu0 %4443
      %v4445 = vsel %vm436, %v4440, %v4442
      %v4446 = vsel %vm436, %v4442, %v4444
      %4447 = vrot.lane.b32.xlu0 %v4382, 78
      %v4448 = vpop.permute.xlu0 %4447
      %4449 = vrot.lane.b32.xlu0 %v4383, 78
      %v4450 = vpop.permute.xlu0 %4449
      %4451 = vrot.lane.b32.xlu0 %v4384, 78
      %v4452 = vpop.permute.xlu0 %4451
      %v4453 = vsel %vm445, %v4448, %v4450
      %v4454 = vsel %vm445, %v4450, %v4452
      %v4457 = vunpack.c.l.b16 %v4388
      %v4458 = vunpack.c.h.b16 %v4388
      %v4459 = vunpack.c.l.b16 %v4389
      %v4460 = vunpack.c.h.b16 %v4389
      %v4461 = vpack.c.b16 %v4459, %v4457
      %v4462 = vpack.c.b16 %v4460, %v4458
      %4464 = vrot.lane.b32.xlu0 %v4381, 25
      %v4465 = vpop.permute.xlu0 %4464
      %4466 = vrot.lane.b32.xlu0 %v4382, 25
      %v4467 = vpop.permute.xlu0 %4466
      %4468 = vrot.lane.b32.xlu0 %v4383, 25
      %v4469 = vpop.permute.xlu0 %4468
      %4470 = vrot.lane.b32.xlu0 %v4399, 25
      %v4471 = vpop.permute.xlu0 %4470
      %4472 = vrot.lane.b32.xlu0 %v4400, 25
      %v4473 = vpop.permute.xlu0 %4472
      %4474 = vrot.lane.b32.xlu0 %v4398, 25
      %v4475 = vpop.permute.xlu0 %4474
      %4476 = vrot.lane.b32.xlu0 %v4407, 25
      %v4477 = vpop.permute.xlu0 %4476
      %4478 = vrot.lane.b32.xlu0 %v4408, 25
      %v4479 = vpop.permute.xlu0 %4478
      %4480 = vrot.lane.b32.xlu0 %v4406, 25
      %v4481 = vpop.permute.xlu0 %4480
      %4482 = vrot.lane.b32.xlu0 %v4415, 25
      %v4483 = vpop.permute.xlu0 %4482
      %4484 = vrot.lane.b32.xlu0 %v4416, 25
      %v4485 = vpop.permute.xlu0 %4484
      %4486 = vrot.lane.b32.xlu0 %v4414, 25
      %v4487 = vpop.permute.xlu0 %4486
      %4488 = vrot.lane.b32.xlu0 %v4418, 25
      %v4489 = vpop.permute.xlu0 %4488
      %4490 = vrot.lane.b32.xlu0 %v4421, 25
      %v4491 = vpop.permute.xlu0 %4490
      %4492 = vrot.lane.b32.xlu0 %v4420, 25
      %v4493 = vpop.permute.xlu0 %4492
      %4494 = vrot.lane.b32.xlu0 %v4424, 25
      %v4495 = vpop.permute.xlu0 %4494
      %4496 = vrot.lane.b32.xlu0 %v4429, 25
      %v4497 = vpop.permute.xlu0 %4496
      %4498 = vrot.lane.b32.xlu0 %v4430, 25
      %v4499 = vpop.permute.xlu0 %4498
      %4500 = vrot.lane.b32.xlu0 %v4432, 25
      %v4501 = vpop.permute.xlu0 %4500
      %4502 = vrot.lane.b32.xlu0 %v4437, 25
      %v4503 = vpop.permute.xlu0 %4502
      %4504 = vrot.lane.b32.xlu0 %v4438, 25
      %v4505 = vpop.permute.xlu0 %4504
      %4506 = vrot.lane.b32.xlu0 %v4440, 25
      %v4507 = vpop.permute.xlu0 %4506
      %4508 = vrot.lane.b32.xlu0 %v4445, 25
      %v4509 = vpop.permute.xlu0 %4508
      %4510 = vrot.lane.b32.xlu0 %v4446, 25
      %v4511 = vpop.permute.xlu0 %4510
      %4512 = vrot.lane.b32.xlu0 %v4448, 25
      %v4513 = vpop.permute.xlu0 %4512
      %4514 = vrot.lane.b32.xlu0 %v4453, 25
      %v4515 = vpop.permute.xlu0 %4514
      %4516 = vrot.lane.b32.xlu0 %v4454, 25
      %v4517 = vpop.permute.xlu0 %4516
      %v4518 = vsel %vm511, %v4465, %v4467
      %v4519 = vsel %vm511, %v4467, %v4469
      %v4520 = vsel %vm511, %v4471, %v4473
      %v4521 = vsel %vm511, %v4473, %v4475
      %v4522 = vsel %vm511, %v4477, %v4479
      %v4523 = vsel %vm511, %v4479, %v4481
      %v4524 = vsel %vm511, %v4483, %v4485
      %v4525 = vsel %vm511, %v4485, %v4487
      %v4526 = vsel %vm511, %v4489, %v4491
      %v4527 = vsel %vm511, %v4491, %v4493
      %v4528 = vsel %vm511, %v4495, %v4497
      %v4529 = vsel %vm511, %v4497, %v4499
      %v4530 = vsel %vm511, %v4501, %v4503
      %v4531 = vsel %vm511, %v4503, %v4505
      %v4532 = vsel %vm511, %v4507, %v4509
      %v4533 = vsel %vm511, %v4509, %v4511
      %v4534 = vsel %vm511, %v4513, %v4515
      %v4535 = vsel %vm511, %v4515, %v4517
      %v4555 = vsel %vm548, %v4462, 0
      %4557 = vmatprep.subr.bf16.mxu0 %v4533
      %4558 = vmatpush1.bf16.msra.mxu0 %v4532
      %4559 = vmatprep.subr.bf16.mxu0 %v4531
      %4560 = vmatpush1.bf16.msra.mxu0 %v4530
      %4561 = vmatprep.subr.bf16.mxu0 %v4529
      %4562 = vmatpush1.bf16.msra.mxu0 %v4528
      %4563 = vmatprep.subr.bf16.mxu0 %v4527
      %4564 = vmatpush1.bf16.msra.mxu0 %v4526
      %4565 = vmatprep.subr.bf16.mxu0 %v4525
      %4566 = vmatpush1.bf16.msra.mxu0 %v4524
      %4567 = vmatprep.subr.bf16.mxu0 %v4523
      %4568 = vmatpush1.bf16.msra.mxu0 %v4522
      %4569 = vmatprep.subr.bf16.mxu0 %v4521
      %4570 = vmatpush1.bf16.msra.mxu0 %v4520
      %4571 = vmatprep.subr.bf16.mxu0 %v4519
      %4572 = vmatpush1.bf16.msra.mxu0 %v4518
      %4573 = vmatprep.subr.bf16.mxu0 0
      %4574 = vmatpush2.bf16.msra.mxu0 0
      %4575 = vmatprep.subr.bf16.mxu0 0
      %4576 = vmatpush2.bf16.msra.mxu0 0
      %4577 = vmatprep.subr.bf16.mxu0 0
      %4578 = vmatpush2.bf16.msra.mxu0 0
      %4579 = vmatprep.subr.bf16.mxu0 0
      %4580 = vmatpush2.bf16.msra.mxu0 0
      %4581 = vmatprep.subr.bf16.mxu0 0
      %4582 = vmatpush2.bf16.msra.mxu0 0
      %4583 = vmatprep.subr.bf16.mxu0 0
      %4584 = vmatpush2.bf16.msra.mxu0 0
      %4585 = vmatprep.subr.bf16.mxu0 0
      %4586 = vmatpush2.bf16.msra.mxu0 0
      %4587 = vmatprep.subr.bf16.mxu0 %v4535
      %4588 = vmatpush2.bf16.msra.mxu0 %v4534
      %4589 = vmatprep.mubr.bf16.mxu0 %v4555
      %4590 = vmatmul.mubr.bf16.gmra.mxu0 %v4461
      %v4591 = vpop.f32.mrf.mxu0
      %v4592 = vadd.f32 0.0, %v4591
      %v4593 = vpop.f32.mrf.mxu0
      %v4594 = vadd.f32 0.0, %v4593
      %v4595 = vpop.f32.mrf.mxu0
      %v4596 = vadd.f32 0.0, %v4595
      %v4597 = vpop.f32.mrf.mxu0
      %v4598 = vadd.f32 0.0, %v4597
      %4599 = vdwg.mxu0
      %4601 = vrot.lane.b32.xlu0 %v4384, 127
      %v4602 = vpop.permute.xlu0 %4601
      %4603 = vrot.lane.b32.xlu0 %v4385, 127
      %v4604 = vpop.permute.xlu0 %4603
      %v4605 = vsel %vm384, %v4398, %v4602
      %v4606 = vsel %vm384, %v4602, %v4604
      %4607 = vrot.lane.b32.xlu0 %v4384, 126
      %v4608 = vpop.permute.xlu0 %4607
      %4609 = vrot.lane.b32.xlu0 %v4385, 126
      %v4610 = vpop.permute.xlu0 %4609
      %v4611 = vsel %vm393, %v4406, %v4608
      %v4612 = vsel %vm393, %v4608, %v4610
      %4613 = vrot.lane.b32.xlu0 %v4384, 104
      %v4614 = vpop.permute.xlu0 %4613
      %4615 = vrot.lane.b32.xlu0 %v4385, 104
      %v4616 = vpop.permute.xlu0 %4615
      %v4617 = vsel %vm402, %v4414, %v4614
      %v4618 = vsel %vm402, %v4614, %v4616
      %4619 = vrot.lane.b32.xlu0 %v4384, 103
      %v4620 = vpop.permute.xlu0 %4619
      %4621 = vrot.lane.b32.xlu0 %v4385, 103
      %v4622 = vpop.permute.xlu0 %4621
      %v4623 = vsel %vm409, %v4620, %v4622
      %4625 = vrot.lane.b32.xlu0 %v4385, 102
      %v4626 = vpop.permute.xlu0 %4625
      %4627 = vrot.lane.b32.xlu0 %v4386, 102
      %v4628 = vpop.permute.xlu0 %4627
      %v4629 = vsel %vm418, %v4428, %v4626
      %v4630 = vsel %vm418, %v4626, %v4628
      %4631 = vrot.lane.b32.xlu0 %v4385, 80
      %v4632 = vpop.permute.xlu0 %4631
      %4633 = vrot.lane.b32.xlu0 %v4386, 80
      %v4634 = vpop.permute.xlu0 %4633
      %v4635 = vsel %vm427, %v4436, %v4632
      %v4636 = vsel %vm427, %v4632, %v4634
      %4637 = vrot.lane.b32.xlu0 %v4385, 79
      %v4638 = vpop.permute.xlu0 %4637
      %4639 = vrot.lane.b32.xlu0 %v4386, 79
      %v4640 = vpop.permute.xlu0 %4639
      %v4641 = vsel %vm436, %v4444, %v4638
      %v4642 = vsel %vm436, %v4638, %v4640
      %4643 = vrot.lane.b32.xlu0 %v4385, 78
      %v4644 = vpop.permute.xlu0 %4643
      %4645 = vrot.lane.b32.xlu0 %v4386, 78
      %v4646 = vpop.permute.xlu0 %4645
      %v4647 = vsel %vm445, %v4452, %v4644
      %v4648 = vsel %vm445, %v4644, %v4646
      %4649 = vrot.lane.b32.xlu0 %v4384, 25
      %v4650 = vpop.permute.xlu0 %4649
      %4651 = vrot.lane.b32.xlu0 %v4385, 25
      %v4652 = vpop.permute.xlu0 %4651
      %4653 = vrot.lane.b32.xlu0 %v4605, 25
      %v4654 = vpop.permute.xlu0 %4653
      %4655 = vrot.lane.b32.xlu0 %v4606, 25
      %v4656 = vpop.permute.xlu0 %4655
      %4657 = vrot.lane.b32.xlu0 %v4604, 25
      %v4658 = vpop.permute.xlu0 %4657
      %4659 = vrot.lane.b32.xlu0 %v4611, 25
      %v4660 = vpop.permute.xlu0 %4659
      %4661 = vrot.lane.b32.xlu0 %v4612, 25
      %v4662 = vpop.permute.xlu0 %4661
      %4663 = vrot.lane.b32.xlu0 %v4610, 25
      %v4664 = vpop.permute.xlu0 %4663
      %4665 = vrot.lane.b32.xlu0 %v4617, 25
      %v4666 = vpop.permute.xlu0 %4665
      %4667 = vrot.lane.b32.xlu0 %v4618, 25
      %v4668 = vpop.permute.xlu0 %4667
      %4669 = vrot.lane.b32.xlu0 %v4616, 25
      %v4670 = vpop.permute.xlu0 %4669
      %4671 = vrot.lane.b32.xlu0 %v4620, 25
      %v4672 = vpop.permute.xlu0 %4671
      %4673 = vrot.lane.b32.xlu0 %v4623, 25
      %v4674 = vpop.permute.xlu0 %4673
      %4675 = vrot.lane.b32.xlu0 %v4622, 25
      %v4676 = vpop.permute.xlu0 %4675
      %4677 = vrot.lane.b32.xlu0 %v4428, 25
      %v4678 = vpop.permute.xlu0 %4677
      %4679 = vrot.lane.b32.xlu0 %v4629, 25
      %v4680 = vpop.permute.xlu0 %4679
      %4681 = vrot.lane.b32.xlu0 %v4630, 25
      %v4682 = vpop.permute.xlu0 %4681
      %4683 = vrot.lane.b32.xlu0 %v4436, 25
      %v4684 = vpop.permute.xlu0 %4683
      %4685 = vrot.lane.b32.xlu0 %v4635, 25
      %v4686 = vpop.permute.xlu0 %4685
      %4687 = vrot.lane.b32.xlu0 %v4636, 25
      %v4688 = vpop.permute.xlu0 %4687
      %4689 = vrot.lane.b32.xlu0 %v4444, 25
      %v4690 = vpop.permute.xlu0 %4689
      %4691 = vrot.lane.b32.xlu0 %v4641, 25
      %v4692 = vpop.permute.xlu0 %4691
      %4693 = vrot.lane.b32.xlu0 %v4642, 25
      %v4694 = vpop.permute.xlu0 %4693
      %4695 = vrot.lane.b32.xlu0 %v4452, 25
      %v4696 = vpop.permute.xlu0 %4695
      %4697 = vrot.lane.b32.xlu0 %v4647, 25
      %v4698 = vpop.permute.xlu0 %4697
      %4699 = vrot.lane.b32.xlu0 %v4648, 25
      %v4700 = vpop.permute.xlu0 %4699
      %v4701 = vsel %vm511, %v4469, %v4650
      %v4702 = vsel %vm511, %v4650, %v4652
      %v4703 = vsel %vm511, %v4654, %v4656
      %v4704 = vsel %vm511, %v4656, %v4658
      %v4705 = vsel %vm511, %v4660, %v4662
      %v4706 = vsel %vm511, %v4662, %v4664
      %v4707 = vsel %vm511, %v4666, %v4668
      %v4708 = vsel %vm511, %v4668, %v4670
      %v4709 = vsel %vm511, %v4672, %v4674
      %v4710 = vsel %vm511, %v4674, %v4676
      %v4711 = vsel %vm511, %v4678, %v4680
      %v4712 = vsel %vm511, %v4680, %v4682
      %v4713 = vsel %vm511, %v4684, %v4686
      %v4714 = vsel %vm511, %v4686, %v4688
      %v4715 = vsel %vm511, %v4690, %v4692
      %v4716 = vsel %vm511, %v4692, %v4694
      %v4717 = vsel %vm511, %v4696, %v4698
      %v4718 = vsel %vm511, %v4698, %v4700
      %4737 = vmatprep.subr.bf16.mxu0 %v4716
      %4738 = vmatpush1.bf16.msra.mxu0 %v4715
      %4739 = vmatprep.subr.bf16.mxu0 %v4714
      %4740 = vmatpush1.bf16.msra.mxu0 %v4713
      %4741 = vmatprep.subr.bf16.mxu0 %v4712
      %4742 = vmatpush1.bf16.msra.mxu0 %v4711
      %4743 = vmatprep.subr.bf16.mxu0 %v4710
      %4744 = vmatpush1.bf16.msra.mxu0 %v4709
      %4745 = vmatprep.subr.bf16.mxu0 %v4708
      %4746 = vmatpush1.bf16.msra.mxu0 %v4707
      %4747 = vmatprep.subr.bf16.mxu0 %v4706
      %4748 = vmatpush1.bf16.msra.mxu0 %v4705
      %4749 = vmatprep.subr.bf16.mxu0 %v4704
      %4750 = vmatpush1.bf16.msra.mxu0 %v4703
      %4751 = vmatprep.subr.bf16.mxu0 %v4702
      %4752 = vmatpush1.bf16.msra.mxu0 %v4701
      %4753 = vmatprep.subr.bf16.mxu0 0
      %4754 = vmatpush2.bf16.msra.mxu0 0
      %4755 = vmatprep.subr.bf16.mxu0 0
      %4756 = vmatpush2.bf16.msra.mxu0 0
      %4757 = vmatprep.subr.bf16.mxu0 0
      %4758 = vmatpush2.bf16.msra.mxu0 0
      %4759 = vmatprep.subr.bf16.mxu0 0
      %4760 = vmatpush2.bf16.msra.mxu0 0
      %4761 = vmatprep.subr.bf16.mxu0 0
      %4762 = vmatpush2.bf16.msra.mxu0 0
      %4763 = vmatprep.subr.bf16.mxu0 0
      %4764 = vmatpush2.bf16.msra.mxu0 0
      %4765 = vmatprep.subr.bf16.mxu0 0
      %4766 = vmatpush2.bf16.msra.mxu0 0
      %4767 = vmatprep.subr.bf16.mxu0 %v4718
      %4768 = vmatpush2.bf16.msra.mxu0 %v4717
      %4769 = vmatprep.mubr.bf16.mxu0 %v4555
      %4770 = vmatmul.mubr.bf16.gmra.mxu0 %v4461
      %v4771 = vpop.f32.mrf.mxu0
      %v4772 = vadd.f32 0.0, %v4771
      %v4773 = vpop.f32.mrf.mxu0
      %v4774 = vadd.f32 0.0, %v4773
      %v4775 = vpop.f32.mrf.mxu0
      %v4776 = vadd.f32 0.0, %v4775
      %v4777 = vpop.f32.mrf.mxu0
      %v4778 = vadd.f32 0.0, %v4777
      %4779 = vdwg.mxu0
      %4780 = vrot.lane.b32.xlu0 %v4386, 127
      %v4781 = vpop.permute.xlu0 %4780
      %v4782 = vsel %vm384, %v4604, %v4781
      %4783 = vrot.lane.b32.xlu0 %v4386, 126
      %v4784 = vpop.permute.xlu0 %4783
      %v4785 = vsel %vm393, %v4610, %v4784
      %4786 = vrot.lane.b32.xlu0 %v4386, 104
      %v4787 = vpop.permute.xlu0 %4786
      %v4788 = vsel %vm402, %v4616, %v4787
      %4789 = vrot.lane.b32.xlu0 %v4386, 103
      %v4790 = vpop.permute.xlu0 %4789
      %4791 = vrot.lane.b32.xlu0 %v4386, 25
      %v4792 = vpop.permute.xlu0 %4791
      %4793 = vrot.lane.b32.xlu0 %v4782, 25
      %v4794 = vpop.permute.xlu0 %4793
      %4795 = vrot.lane.b32.xlu0 %v4781, 25
      %v4796 = vpop.permute.xlu0 %4795
      %4797 = vrot.lane.b32.xlu0 %v4785, 25
      %v4798 = vpop.permute.xlu0 %4797
      %4799 = vrot.lane.b32.xlu0 %v4784, 25
      %v4800 = vpop.permute.xlu0 %4799
      %4801 = vrot.lane.b32.xlu0 %v4788, 25
      %v4802 = vpop.permute.xlu0 %4801
      %4803 = vrot.lane.b32.xlu0 %v4787, 25
      %v4804 = vpop.permute.xlu0 %4803
      %4805 = vrot.lane.b32.xlu0 %v4790, 25
      %v4806 = vpop.permute.xlu0 %4805
      %4807 = vrot.lane.b32.xlu0 %v4628, 25
      %v4808 = vpop.permute.xlu0 %4807
      %4809 = vrot.lane.b32.xlu0 %v4634, 25
      %v4810 = vpop.permute.xlu0 %4809
      %4811 = vrot.lane.b32.xlu0 %v4640, 25
      %v4812 = vpop.permute.xlu0 %4811
      %4813 = vrot.lane.b32.xlu0 %v4646, 25
      %v4814 = vpop.permute.xlu0 %4813
      %v4815 = vsel %vm511, %v4652, %v4792
      %v4816 = vsel %vm511, %v4794, %v4796
      %v4817 = vsel %vm511, %v4798, %v4800
      %v4818 = vsel %vm511, %v4802, %v4804
      %4828 = vmatprep.subr.bf16.mxu0 0
      %4829 = vmatpush1.bf16.msra.mxu0 %v4812
      %4830 = vmatprep.subr.bf16.mxu0 0
      %4831 = vmatpush1.bf16.msra.mxu0 %v4810
      %4832 = vmatprep.subr.bf16.mxu0 0
      %4833 = vmatpush1.bf16.msra.mxu0 %v4808
      %4834 = vmatprep.subr.bf16.mxu0 0
      %4835 = vmatpush1.bf16.msra.mxu0 %v4806
      %4836 = vmatprep.subr.bf16.mxu0 0
      %4837 = vmatpush1.bf16.msra.mxu0 %v4818
      %4838 = vmatprep.subr.bf16.mxu0 0
      %4839 = vmatpush1.bf16.msra.mxu0 %v4817
      %4840 = vmatprep.subr.bf16.mxu0 0
      %4841 = vmatpush1.bf16.msra.mxu0 %v4816
      %4842 = vmatprep.subr.bf16.mxu0 0
      %4843 = vmatpush1.bf16.msra.mxu0 %v4815
      %4844 = vmatprep.subr.bf16.mxu0 0
      %4845 = vmatpush2.bf16.msra.mxu0 0
      %4846 = vmatprep.subr.bf16.mxu0 0
      %4847 = vmatpush2.bf16.msra.mxu0 0
      %4848 = vmatprep.subr.bf16.mxu0 0
      %4849 = vmatpush2.bf16.msra.mxu0 0
      %4850 = vmatprep.subr.bf16.mxu0 0
      %4851 = vmatpush2.bf16.msra.mxu0 0
      %4852 = vmatprep.subr.bf16.mxu0 0
      %4853 = vmatpush2.bf16.msra.mxu0 0
      %4854 = vmatprep.subr.bf16.mxu0 0
      %4855 = vmatpush2.bf16.msra.mxu0 0
      %4856 = vmatprep.subr.bf16.mxu0 0
      %4857 = vmatpush2.bf16.msra.mxu0 0
      %4858 = vmatprep.subr.bf16.mxu0 0
      %4859 = vmatpush2.bf16.msra.mxu0 %v4814
      %4860 = vmatprep.mubr.bf16.mxu0 %v4555
      %4861 = vmatmul.mubr.bf16.gmra.mxu0 %v4461
      %v4862 = vpop.f32.mrf.mxu0
      %v4863 = vadd.f32 0.0, %v4862
      %v4864 = vpop.f32.mrf.mxu0
      %v4865 = vpop.f32.mrf.mxu0
      %v4866 = vadd.f32 0.0, %v4865
      %v4867 = vpop.f32.mrf.mxu0
      %4868 = vdwg.mxu0
      %s4869 = scalar_lea.vmem %s2, 112
      %v4870 = vld [vmem:[%s4869] sm:$0xff]
      %v4871 = vld [vmem:[%s4869 + $0x8] sm:$0xff]
      %4873 = vset.pattern.permute.xlu0 0
      %4874 = vperm.xlu0 %4873, %v4870
      %v4875 = vpop.permute.xlu0 %4874
      %4878 = vset.pattern.permute.xlu0 0
      %4879 = vperm.xlu0 %4878, %v4871
      %v4880 = vpop.permute.xlu0 %4879
      %v4882 = vadd.f32 %v4592, %v4875
      %v4883 = vadd.f32 %v4594, %v4875
      %v4884 = vadd.f32 %v4772, %v4875
      %v4885 = vadd.f32 %v4774, %v4875
      %v4886 = vadd.f32 %v4863, %v4875
      %v4887 = vadd.f32 %v4596, %v4880
      %v4888 = vadd.f32 %v4598, %v4880
      %v4889 = vadd.f32 %v4776, %v4880
      %v4890 = vadd.f32 %v4778, %v4880
      %v4891 = vadd.f32 %v4866, %v4880
      %v4892 = vmul.f32 %v4882, %v900
      %v4893 = vmul.f32 %v4883, %v904
      %v4894 = vmul.f32 %v4884, %v908
      %v4895 = vmul.f32 %v4885, %v912
      %v4896 = vmul.f32 %v4886, %v916
      %v4897 = vmul.f32 %v4887, %v900
      %v4898 = vmul.f32 %v4888, %v904
      %v4899 = vmul.f32 %v4889, %v908
      %v4900 = vmul.f32 %v4890, %v912
      %v4901 = vmul.f32 %v4891, %v916
      %v4902 = vld [vmem:[#allocation6 + $0x8] sm:$0xff]
      %v4903 = vld [vmem:[#allocation6 + $0x10] sm:$0xff]
      %v4904 = vld [vmem:[#allocation6 + $0x18] sm:$0xff]
      %v4905 = vld [vmem:[#allocation6 + $0x20] sm:$0xff]
      %v4906 = vld [vmem:[#allocation6 + $0x28] sm:$0xff]
      %v4907 = vld [vmem:[#allocation6 + $0x40] sm:$0xff]
      %v4908 = vld [vmem:[#allocation6 + $0x48] sm:$0xff]
      %v4909 = vld [vmem:[#allocation6 + $0x50] sm:$0xff]
      %v4910 = vld [vmem:[#allocation6 + $0x58] sm:$0xff]
      %v4911 = vld [vmem:[#allocation6 + $0x60] sm:$0xff]
      %v4912 = vadd.f32 %v4892, %v4902
      %v4913 = vadd.f32 %v4893, %v4903
      %v4914 = vadd.f32 %v4894, %v4904
      %v4915 = vadd.f32 %v4895, %v4905
      %v4916 = vadd.f32 %v4896, %v4906
      %v4917 = vadd.f32 %v4897, %v4907
      %v4918 = vadd.f32 %v4898, %v4908
      %v4919 = vadd.f32 %v4899, %v4909
      %v4920 = vadd.f32 %v4900, %v4910
      %v4921 = vadd.f32 %v4901, %v4911
      %v4922 = vadd.f32 %v4912, %v4913
      %v4923 = vadd.f32 %v4922, %v4914
      %v4924 = vadd.f32 %v4923, %v4915
      %v4925 = vsel %vm936, %v4916, 0.0
      %v4926 = vadd.f32 %v4924, %v4925
      %4927 = vadd.xlane.f32.xlu0 %v4926
      %v4928 = vpop.xlane.xlu0 %4927
      %v4929 = vadd.f32 %v4917, %v4918
      %v4930 = vadd.f32 %v4929, %v4919
      %v4931 = vadd.f32 %v4930, %v4920
      %v4932 = vsel %vm936, %v4921, 0.0
      %v4933 = vadd.f32 %v4931, %v4932
      %4934 = vadd.xlane.f32.xlu0 %v4933
      %v4935 = vpop.xlane.xlu0 %4934
      %v4936 = vmul.f32 %v4928, 0.00390625
      %v4937 = vmul.f32 %v4935, 0.00390625
      %v4938 = vld [vmem:[%s4] sm:$0x3]
      %v4939 = vld [vmem:[%s5] sm:$0x3]
      %v4941 = vsel %vm548, %v4938, 0
      %4943 = vmatprep.subr.mxu0 0.0
      %4944 = vmatpush1.msra.mxu0 0.0
      %4945 = vmatprep.subr.mxu0 0.0
      %4946 = vmatpush1.msra.mxu0 0.0
      %4947 = vmatprep.subr.mxu0 0.0
      %4948 = vmatpush1.msra.mxu0 0.0
      %4949 = vmatprep.subr.mxu0 0.0
      %4950 = vmatpush1.msra.mxu0 0.0
      %4951 = vmatprep.subr.mxu0 0.0
      %4952 = vmatpush1.msra.mxu0 0.0
      %4953 = vmatprep.subr.mxu0 0.0
      %4954 = vmatpush1.msra.mxu0 0.0
      %4955 = vmatprep.subr.mxu0 0.0
      %4956 = vmatpush1.msra.mxu0 0.0
      %4957 = vmatprep.subr.mxu0 0.0
      %4958 = vmatpush1.msra.mxu0 0.0
      %4959 = vmatprep.subr.mxu0 0.0
      %4960 = vmatpush1.msra.mxu0 0.0
      %4961 = vmatprep.subr.mxu0 0.0
      %4962 = vmatpush1.msra.mxu0 0.0
      %4963 = vmatprep.subr.mxu0 0.0
      %4964 = vmatpush1.msra.mxu0 0.0
      %4965 = vmatprep.subr.mxu0 0.0
      %4966 = vmatpush1.msra.mxu0 0.0
      %4967 = vmatprep.subr.mxu0 0.0
      %4968 = vmatpush1.msra.mxu0 0.0
      %4969 = vmatprep.subr.mxu0 0.0
      %4970 = vmatpush1.msra.mxu0 0.0
      %4971 = vmatprep.subr.mxu0 0.0
      %4972 = vmatpush1.msra.mxu0 %v4937
      %4973 = vmatprep.subr.mxu0 0.0
      %4974 = vmatpush1.msra.mxu0 %v4936
      %4975 = vmatprep.subr.mxu0 0.0
      %4976 = vmatpush2.msra.mxu0 0.0
      %4977 = vmatprep.subr.mxu0 0.0
      %4978 = vmatpush2.msra.mxu0 0.0
      %4979 = vmatprep.subr.mxu0 0.0
      %4980 = vmatpush2.msra.mxu0 0.0
      %4981 = vmatprep.subr.mxu0 0.0
      %4982 = vmatpush2.msra.mxu0 0.0
      %4983 = vmatprep.subr.mxu0 0.0
      %4984 = vmatpush2.msra.mxu0 0.0
      %4985 = vmatprep.subr.mxu0 0.0
      %4986 = vmatpush2.msra.mxu0 0.0
      %4987 = vmatprep.subr.mxu0 0.0
      %4988 = vmatpush2.msra.mxu0 0.0
      %4989 = vmatprep.subr.mxu0 0.0
      %4990 = vmatpush2.msra.mxu0 0.0
      %4991 = vmatprep.subr.mxu0 0.0
      %4992 = vmatpush2.msra.mxu0 0.0
      %4993 = vmatprep.subr.mxu0 0.0
      %4994 = vmatpush2.msra.mxu0 0.0
      %4995 = vmatprep.subr.mxu0 0.0
      %4996 = vmatpush2.msra.mxu0 0.0
      %4997 = vmatprep.subr.mxu0 0.0
      %4998 = vmatpush2.msra.mxu0 0.0
      %4999 = vmatprep.subr.mxu0 0.0
      %5000 = vmatpush2.msra.mxu0 0.0
      %5001 = vmatprep.subr.mxu0 0.0
      %5002 = vmatpush2.msra.mxu0 0.0
      %5003 = vmatprep.subr.mxu0 0.0
      %5004 = vmatpush2.msra.mxu0 0.0
      %5005 = vmatprep.subr.mxu0 0.0
      %5006 = vmatpush2.msra.mxu0 0.0
      %5007 = vmatprep.mubr.f32.mxu0 0.0
      %5008 = vmatmul.mubr.f32.gmra.mxu0 %v4941
      %v5009 = vpop.f32.mrf.mxu0
      %v5010 = vadd.f32 %v4939, %v5009
      %v5011 = vpop.f32.mrf.mxu0
      %5012 = vdwg.mxu0
      %v5013 = vmax.f32 %v5010, 0.0
      %v5014 = vld [vmem:[%s6] sm:$0xff]
      %v5015 = vld [vmem:[%s6 + $0x8] sm:$0xff]
      %v5016 = vld [vmem:[%s7] sm:$0xff]
      %v5017 = vld [vmem:[%s7 + $0x8] sm:$0xff]
      %vm5018 = vcmask 15360
      %v5020 = vsel %vm5018, %v5014, 0
      %v5023 = vsel %vm5018, %v5015, 0
      %vm5025 = vcmask 1041408
      %v5027 = vsel %vm5025, %v5013, 0
      %5029 = vmatprep.subr.mxu0 0.0
      %5030 = vmatpush1.msra.mxu0 0.0
      %5031 = vmatprep.subr.mxu0 0.0
      %5032 = vmatpush1.msra.mxu0 0.0
      %5033 = vmatprep.subr.mxu0 0.0
      %5034 = vmatpush1.msra.mxu0 0.0
      %5035 = vmatprep.subr.mxu0 0.0
      %5036 = vmatpush1.msra.mxu0 0.0
      %5037 = vmatprep.subr.mxu0 0.0
      %5038 = vmatpush1.msra.mxu0 0.0
      %5039 = vmatprep.subr.mxu0 0.0
      %5040 = vmatpush1.msra.mxu0 0.0
      %5041 = vmatprep.subr.mxu0 0.0
      %5042 = vmatpush1.msra.mxu0 0.0
      %5043 = vmatprep.subr.mxu0 0.0
      %5044 = vmatpush1.msra.mxu0 0.0
      %5045 = vmatprep.subr.mxu0 0.0
      %5046 = vmatpush1.msra.mxu0 0.0
      %5047 = vmatprep.subr.mxu0 0.0
      %5048 = vmatpush1.msra.mxu0 0.0
      %5049 = vmatprep.subr.mxu0 0.0
      %5050 = vmatpush1.msra.mxu0 0.0
      %5051 = vmatprep.subr.mxu0 0.0
      %5052 = vmatpush1.msra.mxu0 0.0
      %5053 = vmatprep.subr.mxu0 0.0
      %5054 = vmatpush1.msra.mxu0 0.0
      %5055 = vmatprep.subr.mxu0 0.0
      %5056 = vmatpush1.msra.mxu0 0.0
      %5057 = vmatprep.subr.mxu0 0.0
      %5058 = vmatpush1.msra.mxu0 0.0
      %5059 = vmatprep.subr.mxu0 0.0
      %5060 = vmatpush1.msra.mxu0 %v5027
      %5061 = vmatprep.subr.mxu0 0.0
      %5062 = vmatpush2.msra.mxu0 0.0
      %5063 = vmatprep.subr.mxu0 0.0
      %5064 = vmatpush2.msra.mxu0 0.0
      %5065 = vmatprep.subr.mxu0 0.0
      %5066 = vmatpush2.msra.mxu0 0.0
      %5067 = vmatprep.subr.mxu0 0.0
      %5068 = vmatpush2.msra.mxu0 0.0
      %5069 = vmatprep.subr.mxu0 0.0
      %5070 = vmatpush2.msra.mxu0 0.0
      %5071 = vmatprep.subr.mxu0 0.0
      %5072 = vmatpush2.msra.mxu0 0.0
      %5073 = vmatprep.subr.mxu0 0.0
      %5074 = vmatpush2.msra.mxu0 0.0
      %5075 = vmatprep.subr.mxu0 0.0
      %5076 = vmatpush2.msra.mxu0 0.0
      %5077 = vmatprep.subr.mxu0 0.0
      %5078 = vmatpush2.msra.mxu0 0.0
      %5079 = vmatprep.subr.mxu0 0.0
      %5080 = vmatpush2.msra.mxu0 0.0
      %5081 = vmatprep.subr.mxu0 0.0
      %5082 = vmatpush2.msra.mxu0 0.0
      %5083 = vmatprep.subr.mxu0 0.0
      %5084 = vmatpush2.msra.mxu0 0.0
      %5085 = vmatprep.subr.mxu0 0.0
      %5086 = vmatpush2.msra.mxu0 0.0
      %5087 = vmatprep.subr.mxu0 0.0
      %5088 = vmatpush2.msra.mxu0 0.0
      %5089 = vmatprep.subr.mxu0 0.0
      %5090 = vmatpush2.msra.mxu0 0.0
      %5091 = vmatprep.subr.mxu0 0.0
      %5092 = vmatpush2.msra.mxu0 0.0
      %5093 = vmatprep.mubr.f32.mxu0 0.0
      %5094 = vmatmul.mubr.f32.gmra.mxu0 %v5020
      %v5095 = vpop.f32.mrf.mxu0
      %v5096 = vadd.f32 %v5016, %v5095
      %v5097 = vpop.f32.mrf.mxu0
      %5098 = vmatprep.mubr.f32.mxu0 0.0
      %5099 = vmatmul.mubr.f32.gmra.mxu0 %v5023
      %v5100 = vpop.f32.mrf.mxu0
      %v5101 = vadd.f32 %v5017, %v5100
      %v5102 = vpop.f32.mrf.mxu0
      %5103 = vdwg.mxu0
      %v5104 = vxor.u32 %v5096, 2147483648
      %v5105 = vxor.u32 %v5101, 2147483648
      %v5106 = vmul.f32 %v5104, 1.442695
      %v5107 = vpow.pop %v5106
      %v5108 = vmul.f32 %v5105, 1.442695
      %v5109 = vpow.pop %v5108
      %v5110 = vadd.f32 %v5107, 1.0
      %v5111 = vadd.f32 %v5109, 1.0
      %v5112 = vrcp.pop %v5110
      %v5113 = vmul.f32 1.0, %v5112
      %v5114 = vrcp.pop %v5111
      %v5115 = vmul.f32 1.0, %v5114
      %5117 = vset.pattern.permute.xlu0 0
      %5118 = vperm.xlu0 %5117, %v5113
      %v5119 = vpop.permute.xlu0 %5118
      %5122 = vset.pattern.permute.xlu0 0
      %5123 = vperm.xlu0 %5122, %v5115
      %v5124 = vpop.permute.xlu0 %5123
      %v5126 = vmul.f32 %v4912, %v5119
      %v5127 = vmul.f32 %v4913, %v5119
      %v5128 = vmul.f32 %v4914, %v5119
      %v5129 = vmul.f32 %v4915, %v5119
      %v5130 = vmul.f32 %v4916, %v5119
      %v5131 = vmul.f32 %v4917, %v5124
      %v5132 = vmul.f32 %v4918, %v5124
      %v5133 = vmul.f32 %v4919, %v5124
      %v5134 = vmul.f32 %v4920, %v5124
      %v5135 = vmul.f32 %v4921, %v5124
      %v5136 = vadd.f32 %v345, %v5126
      %v5137 = vadd.f32 %v346, %v5127
      %v5138 = vadd.f32 %v347, %v5128
      %v5139 = vadd.f32 %v348, %v5129
      %v5140 = vadd.f32 %v349, %v5130
      %v5141 = vadd.f32 %v350, %v5131
      %v5142 = vadd.f32 %v351, %v5132
      %v5143 = vadd.f32 %v352, %v5133
      %v5144 = vadd.f32 %v353, %v5134
      %v5145 = vadd.f32 %v354, %v5135
      %5146 = vst [vmem:[%s305] sm:$0xff] %v5136
      %5147 = vst [vmem:[%s305 + $0x8] sm:$0xff] %v5137
      %5148 = vst [vmem:[%s305 + $0x10] sm:$0xff] %v5138
      %5149 = vst [vmem:[%s305 + $0x18] sm:$0xff] %v5139
      %5150 = vst.msk [vmem:[%s305 + $0x20] sm:$0xff] %vm936, %v5140
      %5151 = vst [vmem:[%s305 + $0x28] sm:$0xff] %v5141
      %5152 = vst [vmem:[%s305 + $0x30] sm:$0xff] %v5142
      %5153 = vst [vmem:[%s305 + $0x38] sm:$0xff] %v5143
      %5154 = vst [vmem:[%s305 + $0x40] sm:$0xff] %v5144
      %5155 = vst.msk [vmem:[%s305 + $0x48] sm:$0xff] %vm936, %v5145
      %p5156 = scmp.lt.s32.totalorder %s19, 1
      %s5157 = scalar_select %p5156, %s19, 1
      %s5158 = smul.addr %s5157, 10
      %s5159 = smul.addr %s5158, 8
      %s5160 = scalar_lea.vmem %s8, %s5159
      // Predicated region
      $region53: #{hdrab_forward.1} parent=51 // pred_check
        %p5161 = pneg %p210
      $region54: #{hdrab_forward.1} parent=51 // pred_check_branch
        %5163 = sbr.rel (%p5161) target = $region56
      $region55: #{hdrab_forward.1} parent=51 // pred_region
        _
      $region56: #{hdrab_forward.1} parent=51 // pred_fallthru
        _
    $region52: #{hdrab_forward.1} parent=5 // pred_fallthru
      _
    %p5164 = scmp.le.s32.totalorder 2, %s14
    // Predicated region
    $region57: #{hdrab_forward.1} parent=5 // pred_check
      %p5165 = pneg %p5164
    $region58: #{hdrab_forward.1} parent=5 // pred_check_branch
      %5167 = sbr.rel (%p5165) target = $region60
    $region59: #{hdrab_forward.1} parent=5 // pred_region
      %s5168 = ssub.s32 %s14, 2
      // Predicated region
      $region61: #{hdrab_forward.1} parent=59 // pred_check
        %p5169 = pneg %p216
      $region62: #{hdrab_forward.1} parent=59 // pred_check_branch
        %5171 = sbr.rel (%p5169) target = $region64
      $region63: #{hdrab_forward.1} parent=59 // pred_region
        %p5172 = scmp.lt.s32.totalorder %s20, 1
        %s5173 = scalar_select %p5172, %s20, 1
        %s5174 = smul.addr %s5173, 10
        %s5175 = smul.addr %s5174, 8
        %s5176 = scalar_lea.vmem %s8, %s5175
      $region64: #{hdrab_forward.1} parent=59 // pred_fallthru
        _
    $region60: #{hdrab_forward.1} parent=5 // pred_fallthru
      _
  $region6: #{hdrab_forward.1} parent=0 // loop_footer
    %s18 = sadd.s32 1, %s14
  $region7: #{hdrab_forward.1} parent=0 // loop_footer_branch
    %13 = sbr.rel target = $region3
  $region8: #{hdrab_forward.1} parent=0 // loop_exit
    _

</llo_original>
